<compile_context>
chip_gen: v6e
topology: v6e:2x2x1
jax: 0.10.0
libtpu: 0.0.40
codegen_flags: <defaults>
</compile_context>

<pallas_src>
import jax
import jax.numpy as jnp
from jax.experimental import pallas as pl
from jax.experimental.pallas import tpu as pltpu

HIDDEN = 128      # small, TPU-lane-aligned stand-in for the module's 256
INPUT = 2
OUTPUT = 2
NUM_LAYERS = 7


def decoder_kernel(x_ref, h0_ref, c0_ref, wih1_ref, whh1_ref, wcat_hbm,
                   b_ref, wout_ref, bout_ref,
                   probs_ref, hN_ref, cN_ref,
                   wcat_buf, xh_buf, sem):
    H = HIDDEN
    N_SLABS = NUM_LAYERS - 1   # one fused (2H, 4H) weight slab per layer 2..7

    def slab_copy(j, slot):
        return pltpu.make_async_copy(wcat_hbm.at[j], wcat_buf.at[slot], sem.at[slot])

    # Kick off the first fused-weight slab DMA immediately so it overlaps layer-1 compute.
    slab_copy(0, 0).start()

    def lstm_activations(gates, c_prev):
        # Gate columns were permuted offline to [i, f, o, g]:
        # one sigmoid over a contiguous (1, 3H) slice, one tanh over the last (1, H).
        sig = jax.nn.sigmoid(gates[:, :3 * H])
        i_g = sig[:, 0 * H:1 * H]
        f_g = sig[:, 1 * H:2 * H]
        o_g = sig[:, 2 * H:3 * H]
        g_g = jnp.tanh(gates[:, 3 * H:4 * H])
        c_new = f_g * c_prev + i_g * g_g
        h_new = o_g * jnp.tanh(c_new)
        return h_new, c_new

    # ---- Layer 1: K=2 input path as two scalar-broadcast FMAs (x scalars from SMEM). ----
    x_contrib = (x_ref[0] * wih1_ref[0:1, :]
                 + x_ref[1] * wih1_ref[1:2, :])                              # (1, 4H) f32
    gates = (x_contrib
             + jnp.dot(h0_ref[0].astype(jnp.bfloat16), whh1_ref[...],
                       preferred_element_type=jnp.float32)
             + b_ref[0])
    h, c = lstm_activations(gates, c0_ref[0])
    hN_ref[0] = h
    cN_ref[0] = c
    outs = [h]

    # ---- Layers 2..7: residual inputs, one fused K=2H bf16 MXU contraction per layer,
    #      weights manually double-buffered from HBM (prefetch next while computing). ----
    #   layer2 in = o1 ; layer_l in = o_{l-1} + o_{l-2}  (l >= 3)
    for l in range(1, NUM_LAYERS):
        j = l - 1
        slot = j & 1
        # Prefetch the next layer's slab into the slot freed by the previous iteration.
        if j + 1 < N_SLABS:
            slab_copy(j + 1, 1 - slot).start()
        inp = outs[l - 1] if l == 1 else outs[l - 1] + outs[l - 2]
        # Build the fused [x ; h] bf16 MXU operand in a persistent VMEM scratch
        # (avoids a materialized concatenate/relayout on the serial chain).
        xh_buf[:, :H] = inp.astype(jnp.bfloat16)
        xh_buf[:, H:] = h0_ref[l].astype(jnp.bfloat16)
        slab_copy(j, slot).wait()
        gates = (jnp.dot(xh_buf[...], wcat_buf[slot],
                         preferred_element_type=jnp.float32)
                 + b_ref[l])
        h, c = lstm_activations(gates, c0_ref[l])
        hN_ref[l] = h
        cN_ref[l] = c
        outs.append(h)

    # ---- Output head on the VPU/XLU (avoids a masked N=2 MXU matmul) + softmax. ----
    # wout_ref is (OUTPUT, H); two lane reductions give the (OUTPUT, 1) logits column.
    logits = (jnp.sum(outs[-1] * wout_ref[...], axis=1, keepdims=True)
              + bout_ref[...])                                               # (OUTPUT, 1)
    m = jnp.max(logits, axis=0, keepdims=True)
    e = jnp.exp(logits - m)
    probs_ref[...] = e / jnp.sum(e, axis=0, keepdims=True)


def _reorder_gates(w):
    """Permute the 4H gate axis from PyTorch [i, f, g, o] to kernel order [i, f, o, g]."""
    i, f, g, o = jnp.split(w, 4, axis=-1)
    return jnp.concatenate([i, f, o, g], axis=-1)


def decoder_forward(x, h0, c0, wih1_t, wih_t, whh_t, b, wout_t, bout):
    """x: (1, INPUT); h0/c0: (L, 1, H); weights in PyTorch layout (transposed to (in, 4H)),
    gate order [i, f, g, o]. Returns (probs (1, OUTPUT), hN (L, 1, H), cN (L, 1, H))."""
    # --- one-time parameter preparation (host-side JAX, outside the kernel) ---
    wih1_r = _reorder_gates(wih1_t)                                          # (INPUT, 4H) f32
    whh1_r = _reorder_gates(whh_t[0]).astype(jnp.bfloat16)                   # (H, 4H)    bf16
    wcat_r = _reorder_gates(
        jnp.concatenate([wih_t, whh_t[1:]], axis=1)).astype(jnp.bfloat16)    # (L-1, 2H, 4H) bf16
    b_r = _reorder_gates(b)                                                  # (L, 1, 4H) f32
    wout_r = wout_t.T                                                        # (OUTPUT, H) f32
    bout_r = bout.T                                                          # (OUTPUT, 1) f32
    x_vec = x.reshape(INPUT)                                                 # scalars for SMEM

    out_shapes = (
        jax.ShapeDtypeStruct((OUTPUT, 1), jnp.float32),
        jax.ShapeDtypeStruct((NUM_LAYERS, 1, HIDDEN), jnp.float32),
        jax.ShapeDtypeStruct((NUM_LAYERS, 1, HIDDEN), jnp.float32),
    )
    vmem = pl.BlockSpec(memory_space=pltpu.MemorySpace.VMEM)
    smem = pl.BlockSpec(memory_space=pltpu.MemorySpace.SMEM)
    anyspace = pl.BlockSpec(memory_space=pl.ANY)

    probs_col, hN, cN = pl.pallas_call(
        decoder_kernel,
        out_shape=out_shapes,
        in_specs=[
            smem,       # x scalars
            vmem,       # h0
            vmem,       # c0
            vmem,       # layer-1 input weights (tiny)
            vmem,       # layer-1 recurrent weights (bf16, 128 KiB)
            anyspace,   # fused [W_ih ; W_hh] slabs, stay in HBM, manual double-buffer DMA
            vmem,       # biases
            vmem,       # output weights
            vmem,       # output bias
        ],
        out_specs=(vmem, vmem, vmem),
        scratch_shapes=[
            pltpu.VMEM((2, 2 * HIDDEN, 4 * HIDDEN), jnp.bfloat16),  # 2-slot weight slab buffer
            pltpu.VMEM((1, 2 * HIDDEN), jnp.bfloat16),              # fused [x ; h] MXU operand
            pltpu.SemaphoreType.DMA((2,)),
        ],
    )(x_vec, h0, c0, wih1_r, whh1_r, wcat_r, b_r, wout_r, bout_r)
    return probs_col.reshape(1, OUTPUT), hN, cN


def jax_reference(x, h0, c0, wih1_t, wih_t, whh_t, b, wout_t, bout):
    """Pure-JAX reference mirroring the PyTorch forward, with the same bf16 rounding that
    the kernel applies to the MXU operands (large weights and matmul activations)."""
    H = HIDDEN
    hp = jax.lax.Precision.HIGHEST

    def rnd(v):
        return v.astype(jnp.bfloat16).astype(jnp.float32)

    def cell(x_term, h, c, wh, bb):
        g = x_term + jnp.dot(rnd(h), rnd(wh), precision=hp) + bb
        i = jax.nn.sigmoid(g[:, 0 * H:1 * H])
        f = jax.nn.sigmoid(g[:, 1 * H:2 * H])
        gg = jnp.tanh(g[:, 2 * H:3 * H])
        o = jax.nn.sigmoid(g[:, 3 * H:4 * H])
        c2 = f * c + i * gg
        return o * jnp.tanh(c2), c2

    outs, hs, cs = [], [], []
    # Layer 1: the x path stays f32 (kernel computes it exactly on the VPU).
    x_term = jnp.dot(x, wih1_t, precision=hp)
    h, c = cell(x_term, h0[0], c0[0], whh_t[0], b[0])
    outs.append(h); hs.append(h); cs.append(c)
    for l in range(1, NUM_LAYERS):
        inp = outs[l - 1] if l == 1 else outs[l - 1] + outs[l - 2]
        x_term = jnp.dot(rnd(inp), rnd(wih_t[l - 1]), precision=hp)
        h, c = cell(x_term, h0[l], c0[l], whh_t[l], b[l])
        outs.append(h); hs.append(h); cs.append(c)
    logits = jnp.dot(outs[-1], wout_t, precision=hp) + bout
    probs = jax.nn.softmax(logits, axis=1)
    return probs, jnp.stack(hs), jnp.stack(cs)


if __name__ == "__main__":
    key = jax.random.PRNGKey(0)
    ks = jax.random.split(key, 10)
    scale = 1.0 / jnp.sqrt(HIDDEN)

    def u(k, shape):
        return jax.random.uniform(k, shape, jnp.float32, -scale, scale)

    # Parameters (deterministic init, PyTorch-like uniform(-1/sqrt(H), 1/sqrt(H))).
    wih1_t = u(ks[0], (INPUT, 4 * HIDDEN))                      # layer-1 input weights (transposed)
    wih_t  = u(ks[1], (NUM_LAYERS - 1, HIDDEN, 4 * HIDDEN))     # layers 2..7 input weights
    whh_t  = u(ks[2], (NUM_LAYERS, HIDDEN, 4 * HIDDEN))         # all recurrent weights
    b      = u(ks[3], (NUM_LAYERS, 1, 4 * HIDDEN)) + u(ks[4], (NUM_LAYERS, 1, 4 * HIDDEN))  # b_ih + b_hh
    wout_t = u(ks[5], (HIDDEN, OUTPUT))
    bout   = u(ks[6], (1, OUTPUT))

    # Inputs: single timestep, batch 1 (matching input.view(1, 1, -1));
    # states initialized like init_hidden()/init_cell() (uniform / 100).
    x  = jax.random.normal(ks[7], (1, INPUT), jnp.float32)
    h0 = jax.random.uniform(ks[8], (NUM_LAYERS, 1, HIDDEN), jnp.float32) / 100.0
    c0 = jax.random.uniform(ks[9], (NUM_LAYERS, 1, HIDDEN), jnp.float32) / 100.0

    probs, h_new, c_new = jax.block_until_ready(
        decoder_forward(x, h0, c0, wih1_t, wih_t, whh_t, b, wout_t, bout))

    probs_ref, h_ref, c_ref = jax_reference(x, h0, c0, wih1_t, wih_t, whh_t, b, wout_t, bout)
    assert jnp.allclose(probs, probs_ref, atol=1e-4, rtol=1e-4)
    assert jnp.allclose(h_new, h_ref, atol=1e-4, rtol=1e-4)
    assert jnp.allclose(c_new, c_ref, atol=1e-4, rtol=1e-4)

    print("KERNEL_OK")
</pallas_src>

<mosaic_0001>
module attributes {stable_mosaic.version = 11 : i64} {
  func.func @decoder_kernel(%arg0: memref<2xf32, #tpu.memory_space<smem>>, %arg1: memref<7x1x128xf32, #tpu.memory_space<vmem>>, %arg2: memref<7x1x128xf32, #tpu.memory_space<vmem>>, %arg3: memref<2x512xf32, #tpu.memory_space<vmem>>, %arg4: memref<128x512xbf16, #tpu.memory_space<vmem>>, %arg5: memref<6x256x512xbf16, #tpu.memory_space<any>>, %arg6: memref<7x1x512xf32, #tpu.memory_space<vmem>>, %arg7: memref<2x128xf32, #tpu.memory_space<vmem>>, %arg8: memref<2x1xf32, #tpu.memory_space<vmem>>, %arg9: memref<2x1xf32, #tpu.memory_space<vmem>>, %arg10: memref<7x1x128xf32, #tpu.memory_space<vmem>>, %arg11: memref<7x1x128xf32, #tpu.memory_space<vmem>>, %arg12: memref<2x256x512xbf16, #tpu.memory_space<vmem>>, %arg13: memref<1x256xbf16, #tpu.memory_space<vmem>>, %arg14: memref<2x!tpu.dma_semaphore, #tpu.memory_space<semaphore_mem>>) attributes {dimension_semantics = [], scalar_prefetch = 0 : i64, scratch_operands = 3 : i64, tpu.core_type = #tpu.core_type<tc>} {
    %c0_i32 = arith.constant 0 : i32
    %c0_i32_0 = arith.constant 0 : i32
    %c0_i32_1 = arith.constant 0 : i32
    %c0_i32_2 = arith.constant 0 : i32
    %c0_i32_3 = arith.constant 0 : i32
    %0 = tpu.memref_slice %arg5[%c0_i32, %c0_i32_2, %c0_i32_3] : memref<6x256x512xbf16, #tpu.memory_space<any>> -> memref<1x256x512xbf16, #tpu.memory_space<any>>
    %1 = tpu.memref_squeeze %0 : memref<1x256x512xbf16, #tpu.memory_space<any>> -> memref<256x512xbf16, #tpu.memory_space<any>>
    %c0_i32_4 = arith.constant 0 : i32
    %c0_i32_5 = arith.constant 0 : i32
    %2 = tpu.memref_slice %arg12[%c0_i32_0, %c0_i32_4, %c0_i32_5] : memref<2x256x512xbf16, #tpu.memory_space<vmem>> -> memref<1x256x512xbf16, #tpu.memory_space<vmem>>
    %3 = tpu.memref_squeeze %2 : memref<1x256x512xbf16, #tpu.memory_space<vmem>> -> memref<256x512xbf16, #tpu.memory_space<vmem>>
    %4 = tpu.memref_slice %arg14[%c0_i32_1] : memref<2x!tpu.dma_semaphore, #tpu.memory_space<semaphore_mem>> -> memref<1x!tpu.dma_semaphore, #tpu.memory_space<semaphore_mem>>
    %5 = tpu.memref_squeeze %4 : memref<1x!tpu.dma_semaphore, #tpu.memory_space<semaphore_mem>> -> memref<!tpu.dma_semaphore, #tpu.memory_space<semaphore_mem>>
    tpu.enqueue_dma source(%1 : memref<256x512xbf16, #tpu.memory_space<any>>) target(%3 : memref<256x512xbf16, #tpu.memory_space<vmem>>) target_semaphore(%5 : memref<!tpu.dma_semaphore, #tpu.memory_space<semaphore_mem>>)
    %c0 = arith.constant 0 : index
    %6 = memref.load %arg0[%c0] : memref<2xf32, #tpu.memory_space<smem>>
    %c0_6 = arith.constant 0 : index
    %c0_7 = arith.constant 0 : index
    %7 = vector.load %arg3[%c0_6, %c0_7] : memref<2x512xf32, #tpu.memory_space<vmem>>, vector<1x512xf32>
    %8 = vector.broadcast %6 : f32 to vector<1x512xf32>
    %9 = arith.mulf %8, %7 : vector<1x512xf32>
    %c1 = arith.constant 1 : index
    %10 = memref.load %arg0[%c1] : memref<2xf32, #tpu.memory_space<smem>>
    %c1_8 = arith.constant 1 : index
    %c0_9 = arith.constant 0 : index
    %11 = vector.load %arg3[%c1_8, %c0_9] : memref<2x512xf32, #tpu.memory_space<vmem>>, vector<1x512xf32>
    %12 = vector.broadcast %10 : f32 to vector<1x512xf32>
    %13 = arith.mulf %12, %11 : vector<1x512xf32>
    %14 = arith.addf %9, %13 : vector<1x512xf32>
    %c0_10 = arith.constant 0 : index
    %c0_11 = arith.constant 0 : index
    %c0_12 = arith.constant 0 : index
    %15 = vector.load %arg1[%c0_10, %c0_11, %c0_12] : memref<7x1x128xf32, #tpu.memory_space<vmem>>, vector<1x1x128xf32>
    %16 = vector.shape_cast %15 : vector<1x1x128xf32> to vector<1x128xf32>
    %17 = arith.truncf %16 : vector<1x128xf32> to vector<1x128xbf16>
    %c0_13 = arith.constant 0 : index
    %c0_14 = arith.constant 0 : index
    %18 = vector.load %arg4[%c0_13, %c0_14] : memref<128x512xbf16, #tpu.memory_space<vmem>>, vector<128x512xbf16>
    %cst = arith.constant dense<0.000000e+00> : vector<1x512xf32>
    %19 = tpu.matmul %17, %18, %cst {dimension_numbers = #tpu.dot_dimension_numbers<[1], [0], [0], [1], [0, 0, 1, 1], [], []>} : vector<1x128xbf16>, vector<128x512xbf16>, vector<1x512xf32> -> vector<1x512xf32>
    %20 = arith.addf %14, %19 : vector<1x512xf32>
    %c0_15 = arith.constant 0 : index
    %c0_16 = arith.constant 0 : index
    %c0_17 = arith.constant 0 : index
    %21 = vector.load %arg6[%c0_15, %c0_16, %c0_17] : memref<7x1x512xf32, #tpu.memory_space<vmem>>, vector<1x1x512xf32>
    %22 = vector.shape_cast %21 : vector<1x1x512xf32> to vector<1x512xf32>
    %23 = arith.addf %20, %22 : vector<1x512xf32>
    %c0_18 = arith.constant 0 : index
    %c0_19 = arith.constant 0 : index
    %c0_20 = arith.constant 0 : index
    %24 = vector.load %arg2[%c0_18, %c0_19, %c0_20] : memref<7x1x128xf32, #tpu.memory_space<vmem>>, vector<1x1x128xf32>
    %25 = vector.shape_cast %24 : vector<1x1x128xf32> to vector<1x128xf32>
    %26 = vector.extract_strided_slice %23 {offsets = [0, 0], sizes = [1, 384], strides = [1, 1]} : vector<1x512xf32> to vector<1x384xf32>
    %27 = arith.negf %26 : vector<1x384xf32>
    %28 = math.exp %27 : vector<1x384xf32>
    %cst_21 = arith.constant 1.000000e+00 : f32
    %29 = vector.broadcast %cst_21 : f32 to vector<1x384xf32>
    %30 = arith.addf %29, %28 : vector<1x384xf32>
    %31 = arith.divf %29, %30 : vector<1x384xf32>
    %32 = vector.extract_strided_slice %31 {offsets = [0, 0], sizes = [1, 128], strides = [1, 1]} : vector<1x384xf32> to vector<1x128xf32>
    %33 = vector.extract_strided_slice %31 {offsets = [0, 128], sizes = [1, 128], strides = [1, 1]} : vector<1x384xf32> to vector<1x128xf32>
    %34 = vector.extract_strided_slice %31 {offsets = [0, 256], sizes = [1, 128], strides = [1, 1]} : vector<1x384xf32> to vector<1x128xf32>
    %35 = vector.extract_strided_slice %23 {offsets = [0, 384], sizes = [1, 128], strides = [1, 1]} : vector<1x512xf32> to vector<1x128xf32>
    %36 = math.tanh %35 : vector<1x128xf32>
    %37 = arith.mulf %33, %25 : vector<1x128xf32>
    %38 = arith.mulf %32, %36 : vector<1x128xf32>
    %39 = arith.addf %37, %38 : vector<1x128xf32>
    %40 = math.tanh %39 : vector<1x128xf32>
    %41 = arith.mulf %34, %40 : vector<1x128xf32>
    %c0_22 = arith.constant 0 : index
    %c0_23 = arith.constant 0 : index
    %c0_24 = arith.constant 0 : index
    %42 = vector.load %arg10[%c0_22, %c0_23, %c0_24] : memref<7x1x128xf32, #tpu.memory_space<vmem>>, vector<1x1x128xf32>
    %43 = vector.shape_cast %42 : vector<1x1x128xf32> to vector<1x128xf32>
    %44 = vector.shape_cast %41 : vector<1x128xf32> to vector<1x1x128xf32>
    tpu.vector_store %arg10[%c0_22, %c0_23, %c0_24], %44 {strides = array<i32>} : memref<7x1x128xf32, #tpu.memory_space<vmem>>, vector<1x1x128xf32>,
    %c0_25 = arith.constant 0 : index
    %c0_26 = arith.constant 0 : index
    %c0_27 = arith.constant 0 : index
    %45 = vector.load %arg11[%c0_25, %c0_26, %c0_27] : memref<7x1x128xf32, #tpu.memory_space<vmem>>, vector<1x1x128xf32>
    %46 = vector.shape_cast %45 : vector<1x1x128xf32> to vector<1x128xf32>
    %47 = vector.shape_cast %39 : vector<1x128xf32> to vector<1x1x128xf32>
    tpu.vector_store %arg11[%c0_25, %c0_26, %c0_27], %47 {strides = array<i32>} : memref<7x1x128xf32, #tpu.memory_space<vmem>>, vector<1x1x128xf32>,
    %c1_i32 = arith.constant 1 : i32
    %c1_i32_28 = arith.constant 1 : i32
    %c1_i32_29 = arith.constant 1 : i32
    %c0_i32_30 = arith.constant 0 : i32
    %c0_i32_31 = arith.constant 0 : i32
    %48 = tpu.memref_slice %arg5[%c1_i32, %c0_i32_30, %c0_i32_31] : memref<6x256x512xbf16, #tpu.memory_space<any>> -> memref<1x256x512xbf16, #tpu.memory_space<any>>
    %49 = tpu.memref_squeeze %48 : memref<1x256x512xbf16, #tpu.memory_space<any>> -> memref<256x512xbf16, #tpu.memory_space<any>>
    %c0_i32_32 = arith.constant 0 : i32
    %c0_i32_33 = arith.constant 0 : i32
    %50 = tpu.memref_slice %arg12[%c1_i32_28, %c0_i32_32, %c0_i32_33] : memref<2x256x512xbf16, #tpu.memory_space<vmem>> -> memref<1x256x512xbf16, #tpu.memory_space<vmem>>
    %51 = tpu.memref_squeeze %50 : memref<1x256x512xbf16, #tpu.memory_space<vmem>> -> memref<256x512xbf16, #tpu.memory_space<vmem>>
    %52 = tpu.memref_slice %arg14[%c1_i32_29] : memref<2x!tpu.dma_semaphore, #tpu.memory_space<semaphore_mem>> -> memref<1x!tpu.dma_semaphore, #tpu.memory_space<semaphore_mem>>
    %53 = tpu.memref_squeeze %52 : memref<1x!tpu.dma_semaphore, #tpu.memory_space<semaphore_mem>> -> memref<!tpu.dma_semaphore, #tpu.memory_space<semaphore_mem>>
    tpu.enqueue_dma source(%49 : memref<256x512xbf16, #tpu.memory_space<any>>) target(%51 : memref<256x512xbf16, #tpu.memory_space<vmem>>) target_semaphore(%53 : memref<!tpu.dma_semaphore, #tpu.memory_space<semaphore_mem>>)
    %54 = arith.truncf %41 : vector<1x128xf32> to vector<1x128xbf16>
    %c0_34 = arith.constant 0 : index
    %c0_35 = arith.constant 0 : index
    %55 = vector.load %arg13[%c0_34, %c0_35] : memref<1x256xbf16, #tpu.memory_space<vmem>>, vector<1x128xbf16>
    tpu.vector_store %arg13[%c0_34, %c0_35], %54 {strides = array<i32>} : memref<1x256xbf16, #tpu.memory_space<vmem>>, vector<1x128xbf16>,
    %c1_36 = arith.constant 1 : index
    %c0_37 = arith.constant 0 : index
    %c0_38 = arith.constant 0 : index
    %56 = vector.load %arg1[%c1_36, %c0_37, %c0_38] : memref<7x1x128xf32, #tpu.memory_space<vmem>>, vector<1x1x128xf32>
    %57 = vector.shape_cast %56 : vector<1x1x128xf32> to vector<1x128xf32>
    %58 = arith.truncf %57 : vector<1x128xf32> to vector<1x128xbf16>
    %c0_39 = arith.constant 0 : index
    %c128 = arith.constant 128 : index
    %59 = vector.load %arg13[%c0_39, %c128] : memref<1x256xbf16, #tpu.memory_space<vmem>>, vector<1x128xbf16>
    tpu.vector_store %arg13[%c0_39, %c128], %58 {strides = array<i32>} : memref<1x256xbf16, #tpu.memory_space<vmem>>, vector<1x128xbf16>,
    %c0_i32_40 = arith.constant 0 : i32
    %c0_i32_41 = arith.constant 0 : i32
    %c0_i32_42 = arith.constant 0 : i32
    %c0_i32_43 = arith.constant 0 : i32
    %c0_i32_44 = arith.constant 0 : i32
    %60 = tpu.memref_slice %arg5[%c0_i32_40, %c0_i32_43, %c0_i32_44] : memref<6x256x512xbf16, #tpu.memory_space<any>> -> memref<1x256x512xbf16, #tpu.memory_space<any>>
    %61 = tpu.memref_squeeze %60 : memref<1x256x512xbf16, #tpu.memory_space<any>> -> memref<256x512xbf16, #tpu.memory_space<any>>
    %c0_i32_45 = arith.constant 0 : i32
    %c0_i32_46 = arith.constant 0 : i32
    %62 = tpu.memref_slice %arg12[%c0_i32_41, %c0_i32_45, %c0_i32_46] : memref<2x256x512xbf16, #tpu.memory_space<vmem>> -> memref<1x256x512xbf16, #tpu.memory_space<vmem>>
    %63 = tpu.memref_squeeze %62 : memref<1x256x512xbf16, #tpu.memory_space<vmem>> -> memref<256x512xbf16, #tpu.memory_space<vmem>>
    %64 = tpu.memref_slice %arg14[%c0_i32_42] : memref<2x!tpu.dma_semaphore, #tpu.memory_space<semaphore_mem>> -> memref<1x!tpu.dma_semaphore, #tpu.memory_space<semaphore_mem>>
    %65 = tpu.memref_squeeze %64 : memref<1x!tpu.dma_semaphore, #tpu.memory_space<semaphore_mem>> -> memref<!tpu.dma_semaphore, #tpu.memory_space<semaphore_mem>>
    tpu.wait_dma2 semaphore(%65 : memref<!tpu.dma_semaphore, #tpu.memory_space<semaphore_mem>>) src(%61 : memref<256x512xbf16, #tpu.memory_space<any>>) dst(%63 : memref<256x512xbf16, #tpu.memory_space<vmem>>)
    %c0_47 = arith.constant 0 : index
    %c0_48 = arith.constant 0 : index
    %66 = vector.load %arg13[%c0_47, %c0_48] : memref<1x256xbf16, #tpu.memory_space<vmem>>, vector<1x256xbf16>
    %c0_49 = arith.constant 0 : index
    %c0_50 = arith.constant 0 : index
    %c0_51 = arith.constant 0 : index
    %67 = vector.load %arg12[%c0_49, %c0_50, %c0_51] : memref<2x256x512xbf16, #tpu.memory_space<vmem>>, vector<1x256x512xbf16>
    %68 = vector.shape_cast %67 : vector<1x256x512xbf16> to vector<256x512xbf16>
    %cst_52 = arith.constant dense<0.000000e+00> : vector<1x512xf32>
    %69 = tpu.matmul %66, %68, %cst_52 {dimension_numbers = #tpu.dot_dimension_numbers<[1], [0], [0], [1], [0, 0, 1, 1], [], []>} : vector<1x256xbf16>, vector<256x512xbf16>, vector<1x512xf32> -> vector<1x512xf32>
    %c1_53 = arith.constant 1 : index
    %c0_54 = arith.constant 0 : index
    %c0_55 = arith.constant 0 : index
    %70 = vector.load %arg6[%c1_53, %c0_54, %c0_55] : memref<7x1x512xf32, #tpu.memory_space<vmem>>, vector<1x1x512xf32>
    %71 = vector.shape_cast %70 : vector<1x1x512xf32> to vector<1x512xf32>
    %72 = arith.addf %69, %71 : vector<1x512xf32>
    %c1_56 = arith.constant 1 : index
    %c0_57 = arith.constant 0 : index
    %c0_58 = arith.constant 0 : index
    %73 = vector.load %arg2[%c1_56, %c0_57, %c0_58] : memref<7x1x128xf32, #tpu.memory_space<vmem>>, vector<1x1x128xf32>
    %74 = vector.shape_cast %73 : vector<1x1x128xf32> to vector<1x128xf32>
    %75 = vector.extract_strided_slice %72 {offsets = [0, 0], sizes = [1, 384], strides = [1, 1]} : vector<1x512xf32> to vector<1x384xf32>
    %76 = arith.negf %75 : vector<1x384xf32>
    %77 = math.exp %76 : vector<1x384xf32>
    %cst_59 = arith.constant 1.000000e+00 : f32
    %78 = vector.broadcast %cst_59 : f32 to vector<1x384xf32>
    %79 = arith.addf %78, %77 : vector<1x384xf32>
    %80 = arith.divf %78, %79 : vector<1x384xf32>
    %81 = vector.extract_strided_slice %80 {offsets = [0, 0], sizes = [1, 128], strides = [1, 1]} : vector<1x384xf32> to vector<1x128xf32>
    %82 = vector.extract_strided_slice %80 {offsets = [0, 128], sizes = [1, 128], strides = [1, 1]} : vector<1x384xf32> to vector<1x128xf32>
    %83 = vector.extract_strided_slice %80 {offsets = [0, 256], sizes = [1, 128], strides = [1, 1]} : vector<1x384xf32> to vector<1x128xf32>
    %84 = vector.extract_strided_slice %72 {offsets = [0, 384], sizes = [1, 128], strides = [1, 1]} : vector<1x512xf32> to vector<1x128xf32>
    %85 = math.tanh %84 : vector<1x128xf32>
    %86 = arith.mulf %82, %74 : vector<1x128xf32>
    %87 = arith.mulf %81, %85 : vector<1x128xf32>
    %88 = arith.addf %86, %87 : vector<1x128xf32>
    %89 = math.tanh %88 : vector<1x128xf32>
    %90 = arith.mulf %83, %89 : vector<1x128xf32>
    %c1_60 = arith.constant 1 : index
    %c0_61 = arith.constant 0 : index
    %c0_62 = arith.constant 0 : index
    %91 = vector.load %arg10[%c1_60, %c0_61, %c0_62] : memref<7x1x128xf32, #tpu.memory_space<vmem>>, vector<1x1x128xf32>
    %92 = vector.shape_cast %91 : vector<1x1x128xf32> to vector<1x128xf32>
    %93 = vector.shape_cast %90 : vector<1x128xf32> to vector<1x1x128xf32>
    tpu.vector_store %arg10[%c1_60, %c0_61, %c0_62], %93 {strides = array<i32>} : memref<7x1x128xf32, #tpu.memory_space<vmem>>, vector<1x1x128xf32>,
    %c1_63 = arith.constant 1 : index
    %c0_64 = arith.constant 0 : index
    %c0_65 = arith.constant 0 : index
    %94 = vector.load %arg11[%c1_63, %c0_64, %c0_65] : memref<7x1x128xf32, #tpu.memory_space<vmem>>, vector<1x1x128xf32>
    %95 = vector.shape_cast %94 : vector<1x1x128xf32> to vector<1x128xf32>
    %96 = vector.shape_cast %88 : vector<1x128xf32> to vector<1x1x128xf32>
    tpu.vector_store %arg11[%c1_63, %c0_64, %c0_65], %96 {strides = array<i32>} : memref<7x1x128xf32, #tpu.memory_space<vmem>>, vector<1x1x128xf32>,
    %c2_i32 = arith.constant 2 : i32
    %c0_i32_66 = arith.constant 0 : i32
    %c0_i32_67 = arith.constant 0 : i32
    %c0_i32_68 = arith.constant 0 : i32
    %c0_i32_69 = arith.constant 0 : i32
    %97 = tpu.memref_slice %arg5[%c2_i32, %c0_i32_68, %c0_i32_69] : memref<6x256x512xbf16, #tpu.memory_space<any>> -> memref<1x256x512xbf16, #tpu.memory_space<any>>
    %98 = tpu.memref_squeeze %97 : memref<1x256x512xbf16, #tpu.memory_space<any>> -> memref<256x512xbf16, #tpu.memory_space<any>>
    %c0_i32_70 = arith.constant 0 : i32
    %c0_i32_71 = arith.constant 0 : i32
    %99 = tpu.memref_slice %arg12[%c0_i32_66, %c0_i32_70, %c0_i32_71] : memref<2x256x512xbf16, #tpu.memory_space<vmem>> -> memref<1x256x512xbf16, #tpu.memory_space<vmem>>
    %100 = tpu.memref_squeeze %99 : memref<1x256x512xbf16, #tpu.memory_space<vmem>> -> memref<256x512xbf16, #tpu.memory_space<vmem>>
    %101 = tpu.memref_slice %arg14[%c0_i32_67] : memref<2x!tpu.dma_semaphore, #tpu.memory_space<semaphore_mem>> -> memref<1x!tpu.dma_semaphore, #tpu.memory_space<semaphore_mem>>
    %102 = tpu.memref_squeeze %101 : memref<1x!tpu.dma_semaphore, #tpu.memory_space<semaphore_mem>> -> memref<!tpu.dma_semaphore, #tpu.memory_space<semaphore_mem>>
    tpu.enqueue_dma source(%98 : memref<256x512xbf16, #tpu.memory_space<any>>) target(%100 : memref<256x512xbf16, #tpu.memory_space<vmem>>) target_semaphore(%102 : memref<!tpu.dma_semaphore, #tpu.memory_space<semaphore_mem>>)
    %103 = arith.addf %90, %41 : vector<1x128xf32>
    %104 = arith.truncf %103 : vector<1x128xf32> to vector<1x128xbf16>
    %c0_72 = arith.constant 0 : index
    %c0_73 = arith.constant 0 : index
    %105 = vector.load %arg13[%c0_72, %c0_73] : memref<1x256xbf16, #tpu.memory_space<vmem>>, vector<1x128xbf16>
    tpu.vector_store %arg13[%c0_72, %c0_73], %104 {strides = array<i32>} : memref<1x256xbf16, #tpu.memory_space<vmem>>, vector<1x128xbf16>,
    %c2 = arith.constant 2 : index
    %c0_74 = arith.constant 0 : index
    %c0_75 = arith.constant 0 : index
    %106 = vector.load %arg1[%c2, %c0_74, %c0_75] : memref<7x1x128xf32, #tpu.memory_space<vmem>>, vector<1x1x128xf32>
    %107 = vector.shape_cast %106 : vector<1x1x128xf32> to vector<1x128xf32>
    %108 = arith.truncf %107 : vector<1x128xf32> to vector<1x128xbf16>
    %c0_76 = arith.constant 0 : index
    %c128_77 = arith.constant 128 : index
    %109 = vector.load %arg13[%c0_76, %c128_77] : memref<1x256xbf16, #tpu.memory_space<vmem>>, vector<1x128xbf16>
    tpu.vector_store %arg13[%c0_76, %c128_77], %108 {strides = array<i32>} : memref<1x256xbf16, #tpu.memory_space<vmem>>, vector<1x128xbf16>,
    %c1_i32_78 = arith.constant 1 : i32
    %c1_i32_79 = arith.constant 1 : i32
    %c1_i32_80 = arith.constant 1 : i32
    %c0_i32_81 = arith.constant 0 : i32
    %c0_i32_82 = arith.constant 0 : i32
    %110 = tpu.memref_slice %arg5[%c1_i32_78, %c0_i32_81, %c0_i32_82] : memref<6x256x512xbf16, #tpu.memory_space<any>> -> memref<1x256x512xbf16, #tpu.memory_space<any>>
    %111 = tpu.memref_squeeze %110 : memref<1x256x512xbf16, #tpu.memory_space<any>> -> memref<256x512xbf16, #tpu.memory_space<any>>
    %c0_i32_83 = arith.constant 0 : i32
    %c0_i32_84 = arith.constant 0 : i32
    %112 = tpu.memref_slice %arg12[%c1_i32_79, %c0_i32_83, %c0_i32_84] : memref<2x256x512xbf16, #tpu.memory_space<vmem>> -> memref<1x256x512xbf16, #tpu.memory_space<vmem>>
    %113 = tpu.memref_squeeze %112 : memref<1x256x512xbf16, #tpu.memory_space<vmem>> -> memref<256x512xbf16, #tpu.memory_space<vmem>>
    %114 = tpu.memref_slice %arg14[%c1_i32_80] : memref<2x!tpu.dma_semaphore, #tpu.memory_space<semaphore_mem>> -> memref<1x!tpu.dma_semaphore, #tpu.memory_space<semaphore_mem>>
    %115 = tpu.memref_squeeze %114 : memref<1x!tpu.dma_semaphore, #tpu.memory_space<semaphore_mem>> -> memref<!tpu.dma_semaphore, #tpu.memory_space<semaphore_mem>>
    tpu.wait_dma2 semaphore(%115 : memref<!tpu.dma_semaphore, #tpu.memory_space<semaphore_mem>>) src(%111 : memref<256x512xbf16, #tpu.memory_space<any>>) dst(%113 : memref<256x512xbf16, #tpu.memory_space<vmem>>)
    %c0_85 = arith.constant 0 : index
    %c0_86 = arith.constant 0 : index
    %116 = vector.load %arg13[%c0_85, %c0_86] : memref<1x256xbf16, #tpu.memory_space<vmem>>, vector<1x256xbf16>
    %c1_87 = arith.constant 1 : index
    %c0_88 = arith.constant 0 : index
    %c0_89 = arith.constant 0 : index
    %117 = vector.load %arg12[%c1_87, %c0_88, %c0_89] : memref<2x256x512xbf16, #tpu.memory_space<vmem>>, vector<1x256x512xbf16>
    %118 = vector.shape_cast %117 : vector<1x256x512xbf16> to vector<256x512xbf16>
    %cst_90 = arith.constant dense<0.000000e+00> : vector<1x512xf32>
    %119 = tpu.matmul %116, %118, %cst_90 {dimension_numbers = #tpu.dot_dimension_numbers<[1], [0], [0], [1], [0, 0, 1, 1], [], []>} : vector<1x256xbf16>, vector<256x512xbf16>, vector<1x512xf32> -> vector<1x512xf32>
    %c2_91 = arith.constant 2 : index
    %c0_92 = arith.constant 0 : index
    %c0_93 = arith.constant 0 : index
    %120 = vector.load %arg6[%c2_91, %c0_92, %c0_93] : memref<7x1x512xf32, #tpu.memory_space<vmem>>, vector<1x1x512xf32>
    %121 = vector.shape_cast %120 : vector<1x1x512xf32> to vector<1x512xf32>
    %122 = arith.addf %119, %121 : vector<1x512xf32>
    %c2_94 = arith.constant 2 : index
    %c0_95 = arith.constant 0 : index
    %c0_96 = arith.constant 0 : index
    %123 = vector.load %arg2[%c2_94, %c0_95, %c0_96] : memref<7x1x128xf32, #tpu.memory_space<vmem>>, vector<1x1x128xf32>
    %124 = vector.shape_cast %123 : vector<1x1x128xf32> to vector<1x128xf32>
    %125 = vector.extract_strided_slice %122 {offsets = [0, 0], sizes = [1, 384], strides = [1, 1]} : vector<1x512xf32> to vector<1x384xf32>
    %126 = arith.negf %125 : vector<1x384xf32>
    %127 = math.exp %126 : vector<1x384xf32>
    %cst_97 = arith.constant 1.000000e+00 : f32
    %128 = vector.broadcast %cst_97 : f32 to vector<1x384xf32>
    %129 = arith.addf %128, %127 : vector<1x384xf32>
    %130 = arith.divf %128, %129 : vector<1x384xf32>
    %131 = vector.extract_strided_slice %130 {offsets = [0, 0], sizes = [1, 128], strides = [1, 1]} : vector<1x384xf32> to vector<1x128xf32>
    %132 = vector.extract_strided_slice %130 {offsets = [0, 128], sizes = [1, 128], strides = [1, 1]} : vector<1x384xf32> to vector<1x128xf32>
    %133 = vector.extract_strided_slice %130 {offsets = [0, 256], sizes = [1, 128], strides = [1, 1]} : vector<1x384xf32> to vector<1x128xf32>
    %134 = vector.extract_strided_slice %122 {offsets = [0, 384], sizes = [1, 128], strides = [1, 1]} : vector<1x512xf32> to vector<1x128xf32>
    %135 = math.tanh %134 : vector<1x128xf32>
    %136 = arith.mulf %132, %124 : vector<1x128xf32>
    %137 = arith.mulf %131, %135 : vector<1x128xf32>
    %138 = arith.addf %136, %137 : vector<1x128xf32>
    %139 = math.tanh %138 : vector<1x128xf32>
    %140 = arith.mulf %133, %139 : vector<1x128xf32>
    %c2_98 = arith.constant 2 : index
    %c0_99 = arith.constant 0 : index
    %c0_100 = arith.constant 0 : index
    %141 = vector.load %arg10[%c2_98, %c0_99, %c0_100] : memref<7x1x128xf32, #tpu.memory_space<vmem>>, vector<1x1x128xf32>
    %142 = vector.shape_cast %141 : vector<1x1x128xf32> to vector<1x128xf32>
    %143 = vector.shape_cast %140 : vector<1x128xf32> to vector<1x1x128xf32>
    tpu.vector_store %arg10[%c2_98, %c0_99, %c0_100], %143 {strides = array<i32>} : memref<7x1x128xf32, #tpu.memory_space<vmem>>, vector<1x1x128xf32>,
    %c2_101 = arith.constant 2 : index
    %c0_102 = arith.constant 0 : index
    %c0_103 = arith.constant 0 : index
    %144 = vector.load %arg11[%c2_101, %c0_102, %c0_103] : memref<7x1x128xf32, #tpu.memory_space<vmem>>, vector<1x1x128xf32>
    %145 = vector.shape_cast %144 : vector<1x1x128xf32> to vector<1x128xf32>
    %146 = vector.shape_cast %138 : vector<1x128xf32> to vector<1x1x128xf32>
    tpu.vector_store %arg11[%c2_101, %c0_102, %c0_103], %146 {strides = array<i32>} : memref<7x1x128xf32, #tpu.memory_space<vmem>>, vector<1x1x128xf32>,
    %c3_i32 = arith.constant 3 : i32
    %c1_i32_104 = arith.constant 1 : i32
    %c1_i32_105 = arith.constant 1 : i32
    %c0_i32_106 = arith.constant 0 : i32
    %c0_i32_107 = arith.constant 0 : i32
    %147 = tpu.memref_slice %arg5[%c3_i32, %c0_i32_106, %c0_i32_107] : memref<6x256x512xbf16, #tpu.memory_space<any>> -> memref<1x256x512xbf16, #tpu.memory_space<any>>
    %148 = tpu.memref_squeeze %147 : memref<1x256x512xbf16, #tpu.memory_space<any>> -> memref<256x512xbf16, #tpu.memory_space<any>>
    %c0_i32_108 = arith.constant 0 : i32
    %c0_i32_109 = arith.constant 0 : i32
    %149 = tpu.memref_slice %arg12[%c1_i32_104, %c0_i32_108, %c0_i32_109] : memref<2x256x512xbf16, #tpu.memory_space<vmem>> -> memref<1x256x512xbf16, #tpu.memory_space<vmem>>
    %150 = tpu.memref_squeeze %149 : memref<1x256x512xbf16, #tpu.memory_space<vmem>> -> memref<256x512xbf16, #tpu.memory_space<vmem>>
    %151 = tpu.memref_slice %arg14[%c1_i32_105] : memref<2x!tpu.dma_semaphore, #tpu.memory_space<semaphore_mem>> -> memref<1x!tpu.dma_semaphore, #tpu.memory_space<semaphore_mem>>
    %152 = tpu.memref_squeeze %151 : memref<1x!tpu.dma_semaphore, #tpu.memory_space<semaphore_mem>> -> memref<!tpu.dma_semaphore, #tpu.memory_space<semaphore_mem>>
    tpu.enqueue_dma source(%148 : memref<256x512xbf16, #tpu.memory_space<any>>) target(%150 : memref<256x512xbf16, #tpu.memory_space<vmem>>) target_semaphore(%152 : memref<!tpu.dma_semaphore, #tpu.memory_space<semaphore_mem>>)
    %153 = arith.addf %140, %90 : vector<1x128xf32>
    %154 = arith.truncf %153 : vector<1x128xf32> to vector<1x128xbf16>
    %c0_110 = arith.constant 0 : index
    %c0_111 = arith.constant 0 : index
    %155 = vector.load %arg13[%c0_110, %c0_111] : memref<1x256xbf16, #tpu.memory_space<vmem>>, vector<1x128xbf16>
    tpu.vector_store %arg13[%c0_110, %c0_111], %154 {strides = array<i32>} : memref<1x256xbf16, #tpu.memory_space<vmem>>, vector<1x128xbf16>,
    %c3 = arith.constant 3 : index
    %c0_112 = arith.constant 0 : index
    %c0_113 = arith.constant 0 : index
    %156 = vector.load %arg1[%c3, %c0_112, %c0_113] : memref<7x1x128xf32, #tpu.memory_space<vmem>>, vector<1x1x128xf32>
    %157 = vector.shape_cast %156 : vector<1x1x128xf32> to vector<1x128xf32>
    %158 = arith.truncf %157 : vector<1x128xf32> to vector<1x128xbf16>
    %c0_114 = arith.constant 0 : index
    %c128_115 = arith.constant 128 : index
    %159 = vector.load %arg13[%c0_114, %c128_115] : memref<1x256xbf16, #tpu.memory_space<vmem>>, vector<1x128xbf16>
    tpu.vector_store %arg13[%c0_114, %c128_115], %158 {strides = array<i32>} : memref<1x256xbf16, #tpu.memory_space<vmem>>, vector<1x128xbf16>,
    %c2_i32_116 = arith.constant 2 : i32
    %c0_i32_117 = arith.constant 0 : i32
    %c0_i32_118 = arith.constant 0 : i32
    %c0_i32_119 = arith.constant 0 : i32
    %c0_i32_120 = arith.constant 0 : i32
    %160 = tpu.memref_slice %arg5[%c2_i32_116, %c0_i32_119, %c0_i32_120] : memref<6x256x512xbf16, #tpu.memory_space<any>> -> memref<1x256x512xbf16, #tpu.memory_space<any>>
    %161 = tpu.memref_squeeze %160 : memref<1x256x512xbf16, #tpu.memory_space<any>> -> memref<256x512xbf16, #tpu.memory_space<any>>
    %c0_i32_121 = arith.constant 0 : i32
    %c0_i32_122 = arith.constant 0 : i32
    %162 = tpu.memref_slice %arg12[%c0_i32_117, %c0_i32_121, %c0_i32_122] : memref<2x256x512xbf16, #tpu.memory_space<vmem>> -> memref<1x256x512xbf16, #tpu.memory_space<vmem>>
    %163 = tpu.memref_squeeze %162 : memref<1x256x512xbf16, #tpu.memory_space<vmem>> -> memref<256x512xbf16, #tpu.memory_space<vmem>>
    %164 = tpu.memref_slice %arg14[%c0_i32_118] : memref<2x!tpu.dma_semaphore, #tpu.memory_space<semaphore_mem>> -> memref<1x!tpu.dma_semaphore, #tpu.memory_space<semaphore_mem>>
    %165 = tpu.memref_squeeze %164 : memref<1x!tpu.dma_semaphore, #tpu.memory_space<semaphore_mem>> -> memref<!tpu.dma_semaphore, #tpu.memory_space<semaphore_mem>>
    tpu.wait_dma2 semaphore(%165 : memref<!tpu.dma_semaphore, #tpu.memory_space<semaphore_mem>>) src(%161 : memref<256x512xbf16, #tpu.memory_space<any>>) dst(%163 : memref<256x512xbf16, #tpu.memory_space<vmem>>)
    %c0_123 = arith.constant 0 : index
    %c0_124 = arith.constant 0 : index
    %166 = vector.load %arg13[%c0_123, %c0_124] : memref<1x256xbf16, #tpu.memory_space<vmem>>, vector<1x256xbf16>
    %c0_125 = arith.constant 0 : index
    %c0_126 = arith.constant 0 : index
    %c0_127 = arith.constant 0 : index
    %167 = vector.load %arg12[%c0_125, %c0_126, %c0_127] : memref<2x256x512xbf16, #tpu.memory_space<vmem>>, vector<1x256x512xbf16>
    %168 = vector.shape_cast %167 : vector<1x256x512xbf16> to vector<256x512xbf16>
    %cst_128 = arith.constant dense<0.000000e+00> : vector<1x512xf32>
    %169 = tpu.matmul %166, %168, %cst_128 {dimension_numbers = #tpu.dot_dimension_numbers<[1], [0], [0], [1], [0, 0, 1, 1], [], []>} : vector<1x256xbf16>, vector<256x512xbf16>, vector<1x512xf32> -> vector<1x512xf32>
    %c3_129 = arith.constant 3 : index
    %c0_130 = arith.constant 0 : index
    %c0_131 = arith.constant 0 : index
    %170 = vector.load %arg6[%c3_129, %c0_130, %c0_131] : memref<7x1x512xf32, #tpu.memory_space<vmem>>, vector<1x1x512xf32>
    %171 = vector.shape_cast %170 : vector<1x1x512xf32> to vector<1x512xf32>
    %172 = arith.addf %169, %171 : vector<1x512xf32>
    %c3_132 = arith.constant 3 : index
    %c0_133 = arith.constant 0 : index
    %c0_134 = arith.constant 0 : index
    %173 = vector.load %arg2[%c3_132, %c0_133, %c0_134] : memref<7x1x128xf32, #tpu.memory_space<vmem>>, vector<1x1x128xf32>
    %174 = vector.shape_cast %173 : vector<1x1x128xf32> to vector<1x128xf32>
    %175 = vector.extract_strided_slice %172 {offsets = [0, 0], sizes = [1, 384], strides = [1, 1]} : vector<1x512xf32> to vector<1x384xf32>
    %176 = arith.negf %175 : vector<1x384xf32>
    %177 = math.exp %176 : vector<1x384xf32>
    %cst_135 = arith.constant 1.000000e+00 : f32
    %178 = vector.broadcast %cst_135 : f32 to vector<1x384xf32>
    %179 = arith.addf %178, %177 : vector<1x384xf32>
    %180 = arith.divf %178, %179 : vector<1x384xf32>
    %181 = vector.extract_strided_slice %180 {offsets = [0, 0], sizes = [1, 128], strides = [1, 1]} : vector<1x384xf32> to vector<1x128xf32>
    %182 = vector.extract_strided_slice %180 {offsets = [0, 128], sizes = [1, 128], strides = [1, 1]} : vector<1x384xf32> to vector<1x128xf32>
    %183 = vector.extract_strided_slice %180 {offsets = [0, 256], sizes = [1, 128], strides = [1, 1]} : vector<1x384xf32> to vector<1x128xf32>
    %184 = vector.extract_strided_slice %172 {offsets = [0, 384], sizes = [1, 128], strides = [1, 1]} : vector<1x512xf32> to vector<1x128xf32>
    %185 = math.tanh %184 : vector<1x128xf32>
    %186 = arith.mulf %182, %174 : vector<1x128xf32>
    %187 = arith.mulf %181, %185 : vector<1x128xf32>
    %188 = arith.addf %186, %187 : vector<1x128xf32>
    %189 = math.tanh %188 : vector<1x128xf32>
    %190 = arith.mulf %183, %189 : vector<1x128xf32>
    %c3_136 = arith.constant 3 : index
    %c0_137 = arith.constant 0 : index
    %c0_138 = arith.constant 0 : index
    %191 = vector.load %arg10[%c3_136, %c0_137, %c0_138] : memref<7x1x128xf32, #tpu.memory_space<vmem>>, vector<1x1x128xf32>
    %192 = vector.shape_cast %191 : vector<1x1x128xf32> to vector<1x128xf32>
    %193 = vector.shape_cast %190 : vector<1x128xf32> to vector<1x1x128xf32>
    tpu.vector_store %arg10[%c3_136, %c0_137, %c0_138], %193 {strides = array<i32>} : memref<7x1x128xf32, #tpu.memory_space<vmem>>, vector<1x1x128xf32>,
    %c3_139 = arith.constant 3 : index
    %c0_140 = arith.constant 0 : index
    %c0_141 = arith.constant 0 : index
    %194 = vector.load %arg11[%c3_139, %c0_140, %c0_141] : memref<7x1x128xf32, #tpu.memory_space<vmem>>, vector<1x1x128xf32>
    %195 = vector.shape_cast %194 : vector<1x1x128xf32> to vector<1x128xf32>
    %196 = vector.shape_cast %188 : vector<1x128xf32> to vector<1x1x128xf32>
    tpu.vector_store %arg11[%c3_139, %c0_140, %c0_141], %196 {strides = array<i32>} : memref<7x1x128xf32, #tpu.memory_space<vmem>>, vector<1x1x128xf32>,
    %c4_i32 = arith.constant 4 : i32
    %c0_i32_142 = arith.constant 0 : i32
    %c0_i32_143 = arith.constant 0 : i32
    %c0_i32_144 = arith.constant 0 : i32
    %c0_i32_145 = arith.constant 0 : i32
    %197 = tpu.memref_slice %arg5[%c4_i32, %c0_i32_144, %c0_i32_145] : memref<6x256x512xbf16, #tpu.memory_space<any>> -> memref<1x256x512xbf16, #tpu.memory_space<any>>
    %198 = tpu.memref_squeeze %197 : memref<1x256x512xbf16, #tpu.memory_space<any>> -> memref<256x512xbf16, #tpu.memory_space<any>>
    %c0_i32_146 = arith.constant 0 : i32
    %c0_i32_147 = arith.constant 0 : i32
    %199 = tpu.memref_slice %arg12[%c0_i32_142, %c0_i32_146, %c0_i32_147] : memref<2x256x512xbf16, #tpu.memory_space<vmem>> -> memref<1x256x512xbf16, #tpu.memory_space<vmem>>
    %200 = tpu.memref_squeeze %199 : memref<1x256x512xbf16, #tpu.memory_space<vmem>> -> memref<256x512xbf16, #tpu.memory_space<vmem>>
    %201 = tpu.memref_slice %arg14[%c0_i32_143] : memref<2x!tpu.dma_semaphore, #tpu.memory_space<semaphore_mem>> -> memref<1x!tpu.dma_semaphore, #tpu.memory_space<semaphore_mem>>
    %202 = tpu.memref_squeeze %201 : memref<1x!tpu.dma_semaphore, #tpu.memory_space<semaphore_mem>> -> memref<!tpu.dma_semaphore, #tpu.memory_space<semaphore_mem>>
    tpu.enqueue_dma source(%198 : memref<256x512xbf16, #tpu.memory_space<any>>) target(%200 : memref<256x512xbf16, #tpu.memory_space<vmem>>) target_semaphore(%202 : memref<!tpu.dma_semaphore, #tpu.memory_space<semaphore_mem>>)
    %203 = arith.addf %190, %140 : vector<1x128xf32>
    %204 = arith.truncf %203 : vector<1x128xf32> to vector<1x128xbf16>
    %c0_148 = arith.constant 0 : index
    %c0_149 = arith.constant 0 : index
    %205 = vector.load %arg13[%c0_148, %c0_149] : memref<1x256xbf16, #tpu.memory_space<vmem>>, vector<1x128xbf16>
    tpu.vector_store %arg13[%c0_148, %c0_149], %204 {strides = array<i32>} : memref<1x256xbf16, #tpu.memory_space<vmem>>, vector<1x128xbf16>,
    %c4 = arith.constant 4 : index
    %c0_150 = arith.constant 0 : index
    %c0_151 = arith.constant 0 : index
    %206 = vector.load %arg1[%c4, %c0_150, %c0_151] : memref<7x1x128xf32, #tpu.memory_space<vmem>>, vector<1x1x128xf32>
    %207 = vector.shape_cast %206 : vector<1x1x128xf32> to vector<1x128xf32>
    %208 = arith.truncf %207 : vector<1x128xf32> to vector<1x128xbf16>
    %c0_152 = arith.constant 0 : index
    %c128_153 = arith.constant 128 : index
    %209 = vector.load %arg13[%c0_152, %c128_153] : memref<1x256xbf16, #tpu.memory_space<vmem>>, vector<1x128xbf16>
    tpu.vector_store %arg13[%c0_152, %c128_153], %208 {strides = array<i32>} : memref<1x256xbf16, #tpu.memory_space<vmem>>, vector<1x128xbf16>,
    %c3_i32_154 = arith.constant 3 : i32
    %c1_i32_155 = arith.constant 1 : i32
    %c1_i32_156 = arith.constant 1 : i32
    %c0_i32_157 = arith.constant 0 : i32
    %c0_i32_158 = arith.constant 0 : i32
    %210 = tpu.memref_slice %arg5[%c3_i32_154, %c0_i32_157, %c0_i32_158] : memref<6x256x512xbf16, #tpu.memory_space<any>> -> memref<1x256x512xbf16, #tpu.memory_space<any>>
    %211 = tpu.memref_squeeze %210 : memref<1x256x512xbf16, #tpu.memory_space<any>> -> memref<256x512xbf16, #tpu.memory_space<any>>
    %c0_i32_159 = arith.constant 0 : i32
    %c0_i32_160 = arith.constant 0 : i32
    %212 = tpu.memref_slice %arg12[%c1_i32_155, %c0_i32_159, %c0_i32_160] : memref<2x256x512xbf16, #tpu.memory_space<vmem>> -> memref<1x256x512xbf16, #tpu.memory_space<vmem>>
    %213 = tpu.memref_squeeze %212 : memref<1x256x512xbf16, #tpu.memory_space<vmem>> -> memref<256x512xbf16, #tpu.memory_space<vmem>>
    %214 = tpu.memref_slice %arg14[%c1_i32_156] : memref<2x!tpu.dma_semaphore, #tpu.memory_space<semaphore_mem>> -> memref<1x!tpu.dma_semaphore, #tpu.memory_space<semaphore_mem>>
    %215 = tpu.memref_squeeze %214 : memref<1x!tpu.dma_semaphore, #tpu.memory_space<semaphore_mem>> -> memref<!tpu.dma_semaphore, #tpu.memory_space<semaphore_mem>>
    tpu.wait_dma2 semaphore(%215 : memref<!tpu.dma_semaphore, #tpu.memory_space<semaphore_mem>>) src(%211 : memref<256x512xbf16, #tpu.memory_space<any>>) dst(%213 : memref<256x512xbf16, #tpu.memory_space<vmem>>)
    %c0_161 = arith.constant 0 : index
    %c0_162 = arith.constant 0 : index
    %216 = vector.load %arg13[%c0_161, %c0_162] : memref<1x256xbf16, #tpu.memory_space<vmem>>, vector<1x256xbf16>
    %c1_163 = arith.constant 1 : index
    %c0_164 = arith.constant 0 : index
    %c0_165 = arith.constant 0 : index
    %217 = vector.load %arg12[%c1_163, %c0_164, %c0_165] : memref<2x256x512xbf16, #tpu.memory_space<vmem>>, vector<1x256x512xbf16>
    %218 = vector.shape_cast %217 : vector<1x256x512xbf16> to vector<256x512xbf16>
    %cst_166 = arith.constant dense<0.000000e+00> : vector<1x512xf32>
    %219 = tpu.matmul %216, %218, %cst_166 {dimension_numbers = #tpu.dot_dimension_numbers<[1], [0], [0], [1], [0, 0, 1, 1], [], []>} : vector<1x256xbf16>, vector<256x512xbf16>, vector<1x512xf32> -> vector<1x512xf32>
    %c4_167 = arith.constant 4 : index
    %c0_168 = arith.constant 0 : index
    %c0_169 = arith.constant 0 : index
    %220 = vector.load %arg6[%c4_167, %c0_168, %c0_169] : memref<7x1x512xf32, #tpu.memory_space<vmem>>, vector<1x1x512xf32>
    %221 = vector.shape_cast %220 : vector<1x1x512xf32> to vector<1x512xf32>
    %222 = arith.addf %219, %221 : vector<1x512xf32>
    %c4_170 = arith.constant 4 : index
    %c0_171 = arith.constant 0 : index
    %c0_172 = arith.constant 0 : index
    %223 = vector.load %arg2[%c4_170, %c0_171, %c0_172] : memref<7x1x128xf32, #tpu.memory_space<vmem>>, vector<1x1x128xf32>
    %224 = vector.shape_cast %223 : vector<1x1x128xf32> to vector<1x128xf32>
    %225 = vector.extract_strided_slice %222 {offsets = [0, 0], sizes = [1, 384], strides = [1, 1]} : vector<1x512xf32> to vector<1x384xf32>
    %226 = arith.negf %225 : vector<1x384xf32>
    %227 = math.exp %226 : vector<1x384xf32>
    %cst_173 = arith.constant 1.000000e+00 : f32
    %228 = vector.broadcast %cst_173 : f32 to vector<1x384xf32>
    %229 = arith.addf %228, %227 : vector<1x384xf32>
    %230 = arith.divf %228, %229 : vector<1x384xf32>
    %231 = vector.extract_strided_slice %230 {offsets = [0, 0], sizes = [1, 128], strides = [1, 1]} : vector<1x384xf32> to vector<1x128xf32>
    %232 = vector.extract_strided_slice %230 {offsets = [0, 128], sizes = [1, 128], strides = [1, 1]} : vector<1x384xf32> to vector<1x128xf32>
    %233 = vector.extract_strided_slice %230 {offsets = [0, 256], sizes = [1, 128], strides = [1, 1]} : vector<1x384xf32> to vector<1x128xf32>
    %234 = vector.extract_strided_slice %222 {offsets = [0, 384], sizes = [1, 128], strides = [1, 1]} : vector<1x512xf32> to vector<1x128xf32>
    %235 = math.tanh %234 : vector<1x128xf32>
    %236 = arith.mulf %232, %224 : vector<1x128xf32>
    %237 = arith.mulf %231, %235 : vector<1x128xf32>
    %238 = arith.addf %236, %237 : vector<1x128xf32>
    %239 = math.tanh %238 : vector<1x128xf32>
    %240 = arith.mulf %233, %239 : vector<1x128xf32>
    %c4_174 = arith.constant 4 : index
    %c0_175 = arith.constant 0 : index
    %c0_176 = arith.constant 0 : index
    %241 = vector.load %arg10[%c4_174, %c0_175, %c0_176] : memref<7x1x128xf32, #tpu.memory_space<vmem>>, vector<1x1x128xf32>
    %242 = vector.shape_cast %241 : vector<1x1x128xf32> to vector<1x128xf32>
    %243 = vector.shape_cast %240 : vector<1x128xf32> to vector<1x1x128xf32>
    tpu.vector_store %arg10[%c4_174, %c0_175, %c0_176], %243 {strides = array<i32>} : memref<7x1x128xf32, #tpu.memory_space<vmem>>, vector<1x1x128xf32>,
    %c4_177 = arith.constant 4 : index
    %c0_178 = arith.constant 0 : index
    %c0_179 = arith.constant 0 : index
    %244 = vector.load %arg11[%c4_177, %c0_178, %c0_179] : memref<7x1x128xf32, #tpu.memory_space<vmem>>, vector<1x1x128xf32>
    %245 = vector.shape_cast %244 : vector<1x1x128xf32> to vector<1x128xf32>
    %246 = vector.shape_cast %238 : vector<1x128xf32> to vector<1x1x128xf32>
    tpu.vector_store %arg11[%c4_177, %c0_178, %c0_179], %246 {strides = array<i32>} : memref<7x1x128xf32, #tpu.memory_space<vmem>>, vector<1x1x128xf32>,
    %c5_i32 = arith.constant 5 : i32
    %c1_i32_180 = arith.constant 1 : i32
    %c1_i32_181 = arith.constant 1 : i32
    %c0_i32_182 = arith.constant 0 : i32
    %c0_i32_183 = arith.constant 0 : i32
    %247 = tpu.memref_slice %arg5[%c5_i32, %c0_i32_182, %c0_i32_183] : memref<6x256x512xbf16, #tpu.memory_space<any>> -> memref<1x256x512xbf16, #tpu.memory_space<any>>
    %248 = tpu.memref_squeeze %247 : memref<1x256x512xbf16, #tpu.memory_space<any>> -> memref<256x512xbf16, #tpu.memory_space<any>>
    %c0_i32_184 = arith.constant 0 : i32
    %c0_i32_185 = arith.constant 0 : i32
    %249 = tpu.memref_slice %arg12[%c1_i32_180, %c0_i32_184, %c0_i32_185] : memref<2x256x512xbf16, #tpu.memory_space<vmem>> -> memref<1x256x512xbf16, #tpu.memory_space<vmem>>
    %250 = tpu.memref_squeeze %249 : memref<1x256x512xbf16, #tpu.memory_space<vmem>> -> memref<256x512xbf16, #tpu.memory_space<vmem>>
    %251 = tpu.memref_slice %arg14[%c1_i32_181] : memref<2x!tpu.dma_semaphore, #tpu.memory_space<semaphore_mem>> -> memref<1x!tpu.dma_semaphore, #tpu.memory_space<semaphore_mem>>
    %252 = tpu.memref_squeeze %251 : memref<1x!tpu.dma_semaphore, #tpu.memory_space<semaphore_mem>> -> memref<!tpu.dma_semaphore, #tpu.memory_space<semaphore_mem>>
    tpu.enqueue_dma source(%248 : memref<256x512xbf16, #tpu.memory_space<any>>) target(%250 : memref<256x512xbf16, #tpu.memory_space<vmem>>) target_semaphore(%252 : memref<!tpu.dma_semaphore, #tpu.memory_space<semaphore_mem>>)
    %253 = arith.addf %240, %190 : vector<1x128xf32>
    %254 = arith.truncf %253 : vector<1x128xf32> to vector<1x128xbf16>
    %c0_186 = arith.constant 0 : index
    %c0_187 = arith.constant 0 : index
    %255 = vector.load %arg13[%c0_186, %c0_187] : memref<1x256xbf16, #tpu.memory_space<vmem>>, vector<1x128xbf16>
    tpu.vector_store %arg13[%c0_186, %c0_187], %254 {strides = array<i32>} : memref<1x256xbf16, #tpu.memory_space<vmem>>, vector<1x128xbf16>,
    %c5 = arith.constant 5 : index
    %c0_188 = arith.constant 0 : index
    %c0_189 = arith.constant 0 : index
    %256 = vector.load %arg1[%c5, %c0_188, %c0_189] : memref<7x1x128xf32, #tpu.memory_space<vmem>>, vector<1x1x128xf32>
    %257 = vector.shape_cast %256 : vector<1x1x128xf32> to vector<1x128xf32>
    %258 = arith.truncf %257 : vector<1x128xf32> to vector<1x128xbf16>
    %c0_190 = arith.constant 0 : index
    %c128_191 = arith.constant 128 : index
    %259 = vector.load %arg13[%c0_190, %c128_191] : memref<1x256xbf16, #tpu.memory_space<vmem>>, vector<1x128xbf16>
    tpu.vector_store %arg13[%c0_190, %c128_191], %258 {strides = array<i32>} : memref<1x256xbf16, #tpu.memory_space<vmem>>, vector<1x128xbf16>,
    %c4_i32_192 = arith.constant 4 : i32
    %c0_i32_193 = arith.constant 0 : i32
    %c0_i32_194 = arith.constant 0 : i32
    %c0_i32_195 = arith.constant 0 : i32
    %c0_i32_196 = arith.constant 0 : i32
    %260 = tpu.memref_slice %arg5[%c4_i32_192, %c0_i32_195, %c0_i32_196] : memref<6x256x512xbf16, #tpu.memory_space<any>> -> memref<1x256x512xbf16, #tpu.memory_space<any>>
    %261 = tpu.memref_squeeze %260 : memref<1x256x512xbf16, #tpu.memory_space<any>> -> memref<256x512xbf16, #tpu.memory_space<any>>
    %c0_i32_197 = arith.constant 0 : i32
    %c0_i32_198 = arith.constant 0 : i32
    %262 = tpu.memref_slice %arg12[%c0_i32_193, %c0_i32_197, %c0_i32_198] : memref<2x256x512xbf16, #tpu.memory_space<vmem>> -> memref<1x256x512xbf16, #tpu.memory_space<vmem>>
    %263 = tpu.memref_squeeze %262 : memref<1x256x512xbf16, #tpu.memory_space<vmem>> -> memref<256x512xbf16, #tpu.memory_space<vmem>>
    %264 = tpu.memref_slice %arg14[%c0_i32_194] : memref<2x!tpu.dma_semaphore, #tpu.memory_space<semaphore_mem>> -> memref<1x!tpu.dma_semaphore, #tpu.memory_space<semaphore_mem>>
    %265 = tpu.memref_squeeze %264 : memref<1x!tpu.dma_semaphore, #tpu.memory_space<semaphore_mem>> -> memref<!tpu.dma_semaphore, #tpu.memory_space<semaphore_mem>>
    tpu.wait_dma2 semaphore(%265 : memref<!tpu.dma_semaphore, #tpu.memory_space<semaphore_mem>>) src(%261 : memref<256x512xbf16, #tpu.memory_space<any>>) dst(%263 : memref<256x512xbf16, #tpu.memory_space<vmem>>)
    %c0_199 = arith.constant 0 : index
    %c0_200 = arith.constant 0 : index
    %266 = vector.load %arg13[%c0_199, %c0_200] : memref<1x256xbf16, #tpu.memory_space<vmem>>, vector<1x256xbf16>
    %c0_201 = arith.constant 0 : index
    %c0_202 = arith.constant 0 : index
    %c0_203 = arith.constant 0 : index
    %267 = vector.load %arg12[%c0_201, %c0_202, %c0_203] : memref<2x256x512xbf16, #tpu.memory_space<vmem>>, vector<1x256x512xbf16>
    %268 = vector.shape_cast %267 : vector<1x256x512xbf16> to vector<256x512xbf16>
    %cst_204 = arith.constant dense<0.000000e+00> : vector<1x512xf32>
    %269 = tpu.matmul %266, %268, %cst_204 {dimension_numbers = #tpu.dot_dimension_numbers<[1], [0], [0], [1], [0, 0, 1, 1], [], []>} : vector<1x256xbf16>, vector<256x512xbf16>, vector<1x512xf32> -> vector<1x512xf32>
    %c5_205 = arith.constant 5 : index
    %c0_206 = arith.constant 0 : index
    %c0_207 = arith.constant 0 : index
    %270 = vector.load %arg6[%c5_205, %c0_206, %c0_207] : memref<7x1x512xf32, #tpu.memory_space<vmem>>, vector<1x1x512xf32>
    %271 = vector.shape_cast %270 : vector<1x1x512xf32> to vector<1x512xf32>
    %272 = arith.addf %269, %271 : vector<1x512xf32>
    %c5_208 = arith.constant 5 : index
    %c0_209 = arith.constant 0 : index
    %c0_210 = arith.constant 0 : index
    %273 = vector.load %arg2[%c5_208, %c0_209, %c0_210] : memref<7x1x128xf32, #tpu.memory_space<vmem>>, vector<1x1x128xf32>
    %274 = vector.shape_cast %273 : vector<1x1x128xf32> to vector<1x128xf32>
    %275 = vector.extract_strided_slice %272 {offsets = [0, 0], sizes = [1, 384], strides = [1, 1]} : vector<1x512xf32> to vector<1x384xf32>
    %276 = arith.negf %275 : vector<1x384xf32>
    %277 = math.exp %276 : vector<1x384xf32>
    %cst_211 = arith.constant 1.000000e+00 : f32
    %278 = vector.broadcast %cst_211 : f32 to vector<1x384xf32>
    %279 = arith.addf %278, %277 : vector<1x384xf32>
    %280 = arith.divf %278, %279 : vector<1x384xf32>
    %281 = vector.extract_strided_slice %280 {offsets = [0, 0], sizes = [1, 128], strides = [1, 1]} : vector<1x384xf32> to vector<1x128xf32>
    %282 = vector.extract_strided_slice %280 {offsets = [0, 128], sizes = [1, 128], strides = [1, 1]} : vector<1x384xf32> to vector<1x128xf32>
    %283 = vector.extract_strided_slice %280 {offsets = [0, 256], sizes = [1, 128], strides = [1, 1]} : vector<1x384xf32> to vector<1x128xf32>
    %284 = vector.extract_strided_slice %272 {offsets = [0, 384], sizes = [1, 128], strides = [1, 1]} : vector<1x512xf32> to vector<1x128xf32>
    %285 = math.tanh %284 : vector<1x128xf32>
    %286 = arith.mulf %282, %274 : vector<1x128xf32>
    %287 = arith.mulf %281, %285 : vector<1x128xf32>
    %288 = arith.addf %286, %287 : vector<1x128xf32>
    %289 = math.tanh %288 : vector<1x128xf32>
    %290 = arith.mulf %283, %289 : vector<1x128xf32>
    %c5_212 = arith.constant 5 : index
    %c0_213 = arith.constant 0 : index
    %c0_214 = arith.constant 0 : index
    %291 = vector.load %arg10[%c5_212, %c0_213, %c0_214] : memref<7x1x128xf32, #tpu.memory_space<vmem>>, vector<1x1x128xf32>
    %292 = vector.shape_cast %291 : vector<1x1x128xf32> to vector<1x128xf32>
    %293 = vector.shape_cast %290 : vector<1x128xf32> to vector<1x1x128xf32>
    tpu.vector_store %arg10[%c5_212, %c0_213, %c0_214], %293 {strides = array<i32>} : memref<7x1x128xf32, #tpu.memory_space<vmem>>, vector<1x1x128xf32>,
    %c5_215 = arith.constant 5 : index
    %c0_216 = arith.constant 0 : index
    %c0_217 = arith.constant 0 : index
    %294 = vector.load %arg11[%c5_215, %c0_216, %c0_217] : memref<7x1x128xf32, #tpu.memory_space<vmem>>, vector<1x1x128xf32>
    %295 = vector.shape_cast %294 : vector<1x1x128xf32> to vector<1x128xf32>
    %296 = vector.shape_cast %288 : vector<1x128xf32> to vector<1x1x128xf32>
    tpu.vector_store %arg11[%c5_215, %c0_216, %c0_217], %296 {strides = array<i32>} : memref<7x1x128xf32, #tpu.memory_space<vmem>>, vector<1x1x128xf32>,
    %297 = arith.addf %290, %240 : vector<1x128xf32>
    %298 = arith.truncf %297 : vector<1x128xf32> to vector<1x128xbf16>
    %c0_218 = arith.constant 0 : index
    %c0_219 = arith.constant 0 : index
    %299 = vector.load %arg13[%c0_218, %c0_219] : memref<1x256xbf16, #tpu.memory_space<vmem>>, vector<1x128xbf16>
    tpu.vector_store %arg13[%c0_218, %c0_219], %298 {strides = array<i32>} : memref<1x256xbf16, #tpu.memory_space<vmem>>, vector<1x128xbf16>,
    %c6 = arith.constant 6 : index
    %c0_220 = arith.constant 0 : index
    %c0_221 = arith.constant 0 : index
    %300 = vector.load %arg1[%c6, %c0_220, %c0_221] : memref<7x1x128xf32, #tpu.memory_space<vmem>>, vector<1x1x128xf32>
    %301 = vector.shape_cast %300 : vector<1x1x128xf32> to vector<1x128xf32>
    %302 = arith.truncf %301 : vector<1x128xf32> to vector<1x128xbf16>
    %c0_222 = arith.constant 0 : index
    %c128_223 = arith.constant 128 : index
    %303 = vector.load %arg13[%c0_222, %c128_223] : memref<1x256xbf16, #tpu.memory_space<vmem>>, vector<1x128xbf16>
    tpu.vector_store %arg13[%c0_222, %c128_223], %302 {strides = array<i32>} : memref<1x256xbf16, #tpu.memory_space<vmem>>, vector<1x128xbf16>,
    %c5_i32_224 = arith.constant 5 : i32
    %c1_i32_225 = arith.constant 1 : i32
    %c1_i32_226 = arith.constant 1 : i32
    %c0_i32_227 = arith.constant 0 : i32
    %c0_i32_228 = arith.constant 0 : i32
    %304 = tpu.memref_slice %arg5[%c5_i32_224, %c0_i32_227, %c0_i32_228] : memref<6x256x512xbf16, #tpu.memory_space<any>> -> memref<1x256x512xbf16, #tpu.memory_space<any>>
    %305 = tpu.memref_squeeze %304 : memref<1x256x512xbf16, #tpu.memory_space<any>> -> memref<256x512xbf16, #tpu.memory_space<any>>
    %c0_i32_229 = arith.constant 0 : i32
    %c0_i32_230 = arith.constant 0 : i32
    %306 = tpu.memref_slice %arg12[%c1_i32_225, %c0_i32_229, %c0_i32_230] : memref<2x256x512xbf16, #tpu.memory_space<vmem>> -> memref<1x256x512xbf16, #tpu.memory_space<vmem>>
    %307 = tpu.memref_squeeze %306 : memref<1x256x512xbf16, #tpu.memory_space<vmem>> -> memref<256x512xbf16, #tpu.memory_space<vmem>>
    %308 = tpu.memref_slice %arg14[%c1_i32_226] : memref<2x!tpu.dma_semaphore, #tpu.memory_space<semaphore_mem>> -> memref<1x!tpu.dma_semaphore, #tpu.memory_space<semaphore_mem>>
    %309 = tpu.memref_squeeze %308 : memref<1x!tpu.dma_semaphore, #tpu.memory_space<semaphore_mem>> -> memref<!tpu.dma_semaphore, #tpu.memory_space<semaphore_mem>>
    tpu.wait_dma2 semaphore(%309 : memref<!tpu.dma_semaphore, #tpu.memory_space<semaphore_mem>>) src(%305 : memref<256x512xbf16, #tpu.memory_space<any>>) dst(%307 : memref<256x512xbf16, #tpu.memory_space<vmem>>)
    %c0_231 = arith.constant 0 : index
    %c0_232 = arith.constant 0 : index
    %310 = vector.load %arg13[%c0_231, %c0_232] : memref<1x256xbf16, #tpu.memory_space<vmem>>, vector<1x256xbf16>
    %c1_233 = arith.constant 1 : index
    %c0_234 = arith.constant 0 : index
    %c0_235 = arith.constant 0 : index
    %311 = vector.load %arg12[%c1_233, %c0_234, %c0_235] : memref<2x256x512xbf16, #tpu.memory_space<vmem>>, vector<1x256x512xbf16>
    %312 = vector.shape_cast %311 : vector<1x256x512xbf16> to vector<256x512xbf16>
    %cst_236 = arith.constant dense<0.000000e+00> : vector<1x512xf32>
    %313 = tpu.matmul %310, %312, %cst_236 {dimension_numbers = #tpu.dot_dimension_numbers<[1], [0], [0], [1], [0, 0, 1, 1], [], []>} : vector<1x256xbf16>, vector<256x512xbf16>, vector<1x512xf32> -> vector<1x512xf32>
    %c6_237 = arith.constant 6 : index
    %c0_238 = arith.constant 0 : index
    %c0_239 = arith.constant 0 : index
    %314 = vector.load %arg6[%c6_237, %c0_238, %c0_239] : memref<7x1x512xf32, #tpu.memory_space<vmem>>, vector<1x1x512xf32>
    %315 = vector.shape_cast %314 : vector<1x1x512xf32> to vector<1x512xf32>
    %316 = arith.addf %313, %315 : vector<1x512xf32>
    %c6_240 = arith.constant 6 : index
    %c0_241 = arith.constant 0 : index
    %c0_242 = arith.constant 0 : index
    %317 = vector.load %arg2[%c6_240, %c0_241, %c0_242] : memref<7x1x128xf32, #tpu.memory_space<vmem>>, vector<1x1x128xf32>
    %318 = vector.shape_cast %317 : vector<1x1x128xf32> to vector<1x128xf32>
    %319 = vector.extract_strided_slice %316 {offsets = [0, 0], sizes = [1, 384], strides = [1, 1]} : vector<1x512xf32> to vector<1x384xf32>
    %320 = arith.negf %319 : vector<1x384xf32>
    %321 = math.exp %320 : vector<1x384xf32>
    %cst_243 = arith.constant 1.000000e+00 : f32
    %322 = vector.broadcast %cst_243 : f32 to vector<1x384xf32>
    %323 = arith.addf %322, %321 : vector<1x384xf32>
    %324 = arith.divf %322, %323 : vector<1x384xf32>
    %325 = vector.extract_strided_slice %324 {offsets = [0, 0], sizes = [1, 128], strides = [1, 1]} : vector<1x384xf32> to vector<1x128xf32>
    %326 = vector.extract_strided_slice %324 {offsets = [0, 128], sizes = [1, 128], strides = [1, 1]} : vector<1x384xf32> to vector<1x128xf32>
    %327 = vector.extract_strided_slice %324 {offsets = [0, 256], sizes = [1, 128], strides = [1, 1]} : vector<1x384xf32> to vector<1x128xf32>
    %328 = vector.extract_strided_slice %316 {offsets = [0, 384], sizes = [1, 128], strides = [1, 1]} : vector<1x512xf32> to vector<1x128xf32>
    %329 = math.tanh %328 : vector<1x128xf32>
    %330 = arith.mulf %326, %318 : vector<1x128xf32>
    %331 = arith.mulf %325, %329 : vector<1x128xf32>
    %332 = arith.addf %330, %331 : vector<1x128xf32>
    %333 = math.tanh %332 : vector<1x128xf32>
    %334 = arith.mulf %327, %333 : vector<1x128xf32>
    %c6_244 = arith.constant 6 : index
    %c0_245 = arith.constant 0 : index
    %c0_246 = arith.constant 0 : index
    %335 = vector.load %arg10[%c6_244, %c0_245, %c0_246] : memref<7x1x128xf32, #tpu.memory_space<vmem>>, vector<1x1x128xf32>
    %336 = vector.shape_cast %335 : vector<1x1x128xf32> to vector<1x128xf32>
    %337 = vector.shape_cast %334 : vector<1x128xf32> to vector<1x1x128xf32>
    tpu.vector_store %arg10[%c6_244, %c0_245, %c0_246], %337 {strides = array<i32>} : memref<7x1x128xf32, #tpu.memory_space<vmem>>, vector<1x1x128xf32>,
    %c6_247 = arith.constant 6 : index
    %c0_248 = arith.constant 0 : index
    %c0_249 = arith.constant 0 : index
    %338 = vector.load %arg11[%c6_247, %c0_248, %c0_249] : memref<7x1x128xf32, #tpu.memory_space<vmem>>, vector<1x1x128xf32>
    %339 = vector.shape_cast %338 : vector<1x1x128xf32> to vector<1x128xf32>
    %340 = vector.shape_cast %332 : vector<1x128xf32> to vector<1x1x128xf32>
    tpu.vector_store %arg11[%c6_247, %c0_248, %c0_249], %340 {strides = array<i32>} : memref<7x1x128xf32, #tpu.memory_space<vmem>>, vector<1x1x128xf32>,
    %c0_250 = arith.constant 0 : index
    %c0_251 = arith.constant 0 : index
    %341 = vector.load %arg7[%c0_250, %c0_251] : memref<2x128xf32, #tpu.memory_space<vmem>>, vector<2x128xf32>
    %342 = vector.broadcast %334 : vector<1x128xf32> to vector<2x128xf32>
    %343 = arith.mulf %342, %341 : vector<2x128xf32>
    %cst_252 = arith.constant dense<0.000000e+00> : vector<2xf32>
    %344 = vector.multi_reduction <add>, %343, %cst_252 [1] : vector<2x128xf32> to vector<2xf32>
    %345 = vector.shape_cast %344 : vector<2xf32> to vector<2x1xf32>
    %c0_253 = arith.constant 0 : index
    %c0_254 = arith.constant 0 : index
    %346 = vector.load %arg8[%c0_253, %c0_254] : memref<2x1xf32, #tpu.memory_space<vmem>>, vector<2x1xf32>
    %347 = arith.addf %345, %346 : vector<2x1xf32>
    %cst_255 = arith.constant dense<0xFF800000> : vector<1xf32>
    %348 = vector.multi_reduction <maximumf>, %347, %cst_255 [0] : vector<2x1xf32> to vector<1xf32>
    %349 = vector.shape_cast %348 : vector<1xf32> to vector<1x1xf32>
    %350 = vector.broadcast %349 : vector<1x1xf32> to vector<2x1xf32>
    %351 = arith.subf %347, %350 : vector<2x1xf32>
    %352 = math.exp %351 : vector<2x1xf32>
    %cst_256 = arith.constant dense<0.000000e+00> : vector<1xf32>
    %353 = vector.multi_reduction <add>, %352, %cst_256 [0] : vector<2x1xf32> to vector<1xf32>
    %354 = vector.shape_cast %353 : vector<1xf32> to vector<1x1xf32>
    %355 = vector.broadcast %354 : vector<1x1xf32> to vector<2x1xf32>
    %356 = arith.divf %352, %355 : vector<2x1xf32>
    %c0_257 = arith.constant 0 : index
    %c0_258 = arith.constant 0 : index
    %357 = vector.load %arg9[%c0_257, %c0_258] : memref<2x1xf32, #tpu.memory_space<vmem>>, vector<2x1xf32>
    tpu.vector_store %arg9[%c0_257, %c0_258], %356 {strides = array<i32>} : memref<2x1xf32, #tpu.memory_space<vmem>>, vector<2x1xf32>,
    return
  }
}

</mosaic_0001>

<llo_original>
// kernel: tpu_custom_call.1
$region0: #{tpu_custom_call.1}
  #allocation0 [shape = 'u32[]', space=smem, size = 0x4, offset = 0x4, fixed_abs, tag = 'smem constant byte address 0x4 - core index']
  #allocation1 [shape = 'u32[144,128]{1,0:T(1,128)}', space=vmem, size = 0x12000, scoped, tag = 'internal scratch']
  #allocation2 [shape = 'bf16[2,256,512]{2,1,0:T(8,128)(2,1)}', space=vmem, size = 0x80000, scoped, tag = 'scratch operand']
  #allocation3 [shape = 'bf16[1,256]{1,0:T(2,128)(2,1)}', space=vmem, size = 0x400, scoped, tag = 'scratch operand']
  #allocation4 [shape = 's32[2]{0}', space=sflag, size = 0x8, scoped, tag = 'scratch operand']
  #allocation21 [shape = 's32[]', space=sflag, size = 0x4, offset = 0, fixed_abs, tag = 'sflag constant byte address 0x0 - dummy sync flag']
  #allocation22 [shape = 's32[]', space=sflag, size = 0x4, offset = 0, fixed_abs, tag = 'sflag constant byte address 0x0 - dummy sync flag']
  #allocation23 [shape = 'u32[]', space=smem, size = 0x4, offset = 0x44, fixed_abs, tag = 'smem constant byte address 0x44 - assertion arg 0']
  #allocation24 [shape = 'u32[]', space=smem, size = 0x4, offset = 0x48, fixed_abs, tag = 'smem constant byte address 0x48 - assertion arg 1']
  #allocation25 [shape = 's32[]', space=sflag, size = 0x4, offset = 0, fixed_abs, tag = 'sflag constant byte address 0x0 - dummy sync flag']
  #allocation26 [shape = 's32[]', space=sflag, size = 0x4, offset = 0, fixed_abs, tag = 'sflag constant byte address 0x0 - dummy sync flag']
  #allocation27 [shape = 's32[]', space=sflag, size = 0x4, offset = 0, fixed_abs, tag = 'sflag constant byte address 0x0 - dummy sync flag']
  #allocation28 [shape = 's32[]', space=sflag, size = 0x4, offset = 0, fixed_abs, tag = 'sflag constant byte address 0x0 - dummy sync flag']
  #allocation29 [shape = 's32[]', space=sflag, size = 0x4, offset = 0, fixed_abs, tag = 'sflag constant byte address 0x0 - dummy sync flag']
  #allocation30 [shape = 's32[]', space=sflag, size = 0x4, offset = 0, fixed_abs, tag = 'sflag constant byte address 0x0 - dummy sync flag']
  #allocation31 [shape = 's32[]', space=sflag, size = 0x4, offset = 0, fixed_abs, tag = 'sflag constant byte address 0x0 - dummy sync flag']
  #allocation32 [shape = 's32[]', space=sflag, size = 0x4, offset = 0, fixed_abs, tag = 'sflag constant byte address 0x0 - dummy sync flag']
  #allocation33 [shape = 's32[]', space=sflag, size = 0x4, offset = 0, fixed_abs, tag = 'sflag constant byte address 0x0 - dummy sync flag']
  #allocation34 [shape = 's32[]', space=sflag, size = 0x4, offset = 0, fixed_abs, tag = 'sflag constant byte address 0x0 - dummy sync flag']
  %s0 = inlined_call_operand.hbm [shape: f32[2], index: 0, kind: input, shape index: {}]
  %s1 = inlined_call_operand.hbm [shape: f32[7,1,128], index: 1, kind: input, shape index: {}]
  %s2 = inlined_call_operand.hbm [shape: f32[7,1,128], index: 2, kind: input, shape index: {}]
  %s3 = inlined_call_operand.hbm [shape: f32[2,512], index: 3, kind: input, shape index: {}]
  %s4 = inlined_call_operand.hbm [shape: bf16[128,512], index: 4, kind: input, shape index: {}]
  %s5 = inlined_call_operand.hbm [shape: bf16[6,256,512], index: 5, kind: input, shape index: {}]
  %s6 = inlined_call_operand.hbm [shape: f32[7,1,512], index: 6, kind: input, shape index: {}]
  %s7 = inlined_call_operand.hbm [shape: f32[2,128], index: 7, kind: input, shape index: {}]
  %s8 = inlined_call_operand.vmem [shape: f32[2,1], index: 8, kind: input, shape index: {}]
  %s9 = inlined_call_operand.vmem [shape: f32[2,1], index: 9, kind: output, shape index: {0}]
  %s10 = inlined_call_operand.hbm [shape: f32[7,1,128], index: 10, kind: output, shape index: {1}]
  %s11 = inlined_call_operand.hbm [shape: f32[7,1,128], index: 11, kind: output, shape index: {2}]
  %12 = xla_tuple %s9, %s10, %s11
  %s13 = sld [smem:[#allocation0]]
  $region110: #{tpu_custom_call.1} parent=0
    _
  %s15 = ssub.s32 1, %s13
  %s16 = scalar_select 0, %s15, %s13
  $region1: #{tpu_custom_call.1} parent=0
    #allocation5 [shape = 'u8[512]{0}', space=smem, size = 0x200, scoped, tag = 'input window, operand 0, single buffered']
    #allocation6 [shape = 's32[1]{0}', space=sflag, size = 0x4, scoped, tag = 'scoped memory for tpu_custom_call.1']
    #allocation7 [shape = 's32[1]{0}', space=sflag, size = 0x4, scoped, tag = 'scoped memory for tpu_custom_call.1']
    #allocation8 [shape = 's32[1]{0}', space=sflag, size = 0x4, scoped, tag = 'scoped memory for tpu_custom_call.1']
    #allocation9 [shape = 'u8[3584]{0}', space=vmem, size = 0x1000, scoped, tag = 'input window, operand 1, single buffered']
    #allocation10 [shape = 'u8[3584]{0}', space=vmem, size = 0x1000, scoped, tag = 'input window, operand 2, single buffered']
    #allocation11 [shape = 's32[1]{0}', space=sflag, size = 0x4, scoped, tag = 'scoped memory for tpu_custom_call.1']
    #allocation12 [shape = 'u8[4096]{0}', space=vmem, size = 0x1000, scoped, tag = 'input window, operand 3, single buffered']
    #allocation13 [shape = 'u8[131072]{0}', space=vmem, size = 0x20000, scoped, tag = 'input window, operand 4, single buffered']
    #allocation14 [shape = 's32[1]{0}', space=sflag, size = 0x4, scoped, tag = 'scoped memory for tpu_custom_call.1']
    #allocation15 [shape = 'u8[14336]{0}', space=vmem, size = 0x3800, scoped, tag = 'input window, operand 6, single buffered']
    #allocation16 [shape = 'u8[1024]{0}', space=vmem, size = 0x400, scoped, tag = 'input window, operand 7, single buffered']
    #allocation17 [shape = 's32[1]{0}', space=sflag, size = 0x4, scoped, tag = 'scoped memory for tpu_custom_call.1']
    #allocation18 [shape = 'u8[3584]{0}', space=vmem, size = 0x1000, scoped, tag = 'output window, operand 1, single buffered']
    #allocation19 [shape = 'u8[3584]{0}', space=vmem, size = 0x1000, scoped, tag = 'output window, operand 2, single buffered']
    #allocation20 [shape = 's32[1]{0}', space=sflag, size = 0x4, scoped, tag = 'scoped memory for tpu_custom_call.1']
    %17 = vsyncpa [#allocation8], 0
    %18 = vsyncpa [#allocation6], 0
    %19 = vsyncpa [#allocation11], 0
    %20 = vsyncpa [#allocation14], 0
    %21 = vsyncpa [#allocation17], 0
    %22 = vsyncpa [#allocation7], 0
    %23 = vsyncpa [#allocation20], 0
    // Predicated region
    $region2: #{tpu_custom_call.1} parent=1 // pred_check
      _
    $region3: #{tpu_custom_call.1} parent=1 // pred_check_branch
      %25 = sbr.rel (0) target = $region5
    $region4: #{tpu_custom_call.1} parent=1 // pred_region
      %s27 = ssub.s32 16, 16
      %28 = vsyncadd [#allocation8], %s27
      %31 = dma.hbm_to_smem %s0, 16, [#allocation5], [#allocation8]
    $region5: #{tpu_custom_call.1} parent=1 // pred_fallthru
      _
    // Predicated region
    $region6: #{tpu_custom_call.1} parent=1 // pred_check
      _
    $region7: #{tpu_custom_call.1} parent=1 // pred_check_branch
      %33 = sbr.rel (0) target = $region9
    $region8: #{tpu_custom_call.1} parent=1 // pred_region
      %s35 = ssub.s32 112, 112
      %36 = vsyncadd [#allocation6], %s35
      %s37 = sshll.u32 [#allocation9], 4
      %s38 = int_to_ptr.vmem [resolvable:$true] %s37
      %43 = dma.hbm_to_vmem [thread:$0]  %s1, 112, %s38, [#allocation6], 16, 16, 1
    $region9: #{tpu_custom_call.1} parent=1 // pred_fallthru
      _
    // Predicated region
    $region10: #{tpu_custom_call.1} parent=1 // pred_check
      _
    $region11: #{tpu_custom_call.1} parent=1 // pred_check_branch
      %45 = sbr.rel (0) target = $region13
    $region12: #{tpu_custom_call.1} parent=1 // pred_region
      %s47 = ssub.s32 112, 112
      %48 = vsyncadd [#allocation11], %s47
      %s49 = sshll.u32 [#allocation10], 4
      %s50 = int_to_ptr.vmem [resolvable:$true] %s49
      %55 = dma.hbm_to_vmem [thread:$0]  %s2, 112, %s50, [#allocation11], 16, 16, 1
    $region13: #{tpu_custom_call.1} parent=1 // pred_fallthru
      _
    // Predicated region
    $region14: #{tpu_custom_call.1} parent=1 // pred_check
      _
    $region15: #{tpu_custom_call.1} parent=1 // pred_check_branch
      %57 = sbr.rel (0) target = $region17
    $region16: #{tpu_custom_call.1} parent=1 // pred_region
      %s59 = ssub.s32 128, 128
      %60 = vsyncadd [#allocation11], %s59
      %s62 = sshll.u32 [#allocation12], 4
      %s63 = int_to_ptr.vmem [resolvable:$true] %s62
      %65 = dma.hbm_to_vmem [thread:$0]  %s3, 128, %s63, [#allocation11]
    $region17: #{tpu_custom_call.1} parent=1 // pred_fallthru
      _
    // Predicated region
    $region18: #{tpu_custom_call.1} parent=1 // pred_check
      _
    $region19: #{tpu_custom_call.1} parent=1 // pred_check_branch
      %67 = sbr.rel (0) target = $region21
    $region20: #{tpu_custom_call.1} parent=1 // pred_region
      %s69 = ssub.s32 4096, 4096
      %70 = vsyncadd [#allocation14], %s69
      %s71 = sshll.u32 [#allocation13], 4
      %s72 = int_to_ptr.vmem [resolvable:$true] %s71
      %77 = dma.hbm_to_vmem [thread:$0]  %s4, 4096, %s72, [#allocation14], 256, 256, 16
    $region21: #{tpu_custom_call.1} parent=1 // pred_fallthru
      _
    // Predicated region
    $region22: #{tpu_custom_call.1} parent=1 // pred_check
      _
    $region23: #{tpu_custom_call.1} parent=1 // pred_check_branch
      %79 = sbr.rel (0) target = $region25
    $region24: #{tpu_custom_call.1} parent=1 // pred_region
      %s81 = ssub.s32 448, 448
      %82 = vsyncadd [#allocation14], %s81
      %s83 = sshll.u32 [#allocation15], 4
      %s84 = int_to_ptr.vmem [resolvable:$true] %s83
      %89 = dma.hbm_to_vmem [thread:$0]  %s6, 448, %s84, [#allocation14], 64, 64, 4
    $region25: #{tpu_custom_call.1} parent=1 // pred_fallthru
      _
    // Predicated region
    $region26: #{tpu_custom_call.1} parent=1 // pred_check
      _
    $region27: #{tpu_custom_call.1} parent=1 // pred_check_branch
      %91 = sbr.rel (0) target = $region29
    $region28: #{tpu_custom_call.1} parent=1 // pred_region
      %s93 = ssub.s32 32, 32
      %94 = vsyncadd [#allocation17], %s93
      %s96 = sshll.u32 [#allocation16], 4
      %s97 = int_to_ptr.vmem [resolvable:$true] %s96
      %99 = dma.hbm_to_vmem [thread:$0]  %s7, 32, %s97, [#allocation17]
    $region29: #{tpu_custom_call.1} parent=1 // pred_fallthru
      _
    // Predicated region
    $region30: #{tpu_custom_call.1} parent=1 // pred_check
      _
    $region31: #{tpu_custom_call.1} parent=1 // pred_check_branch
      %101 = sbr.rel (0) target = $region33
    $region32: #{tpu_custom_call.1} parent=1 // pred_region
      _
    $region33: #{tpu_custom_call.1} parent=1 // pred_fallthru
      _
    // Predicated region
    $region34: #{tpu_custom_call.1} parent=1 // pred_check
      _
    $region35: #{tpu_custom_call.1} parent=1 // pred_check_branch
      %103 = sbr.rel (0) target = $region37
    $region36: #{tpu_custom_call.1} parent=1 // pred_region
      %104 = dma.done [#allocation8], 16
    $region37: #{tpu_custom_call.1} parent=1 // pred_fallthru
      _
    // Predicated region
    $region38: #{tpu_custom_call.1} parent=1 // pred_check
      _
    $region39: #{tpu_custom_call.1} parent=1 // pred_check_branch
      %106 = sbr.rel (0) target = $region41
    $region40: #{tpu_custom_call.1} parent=1 // pred_region
      %107 = dma.done [#allocation6], 112
    $region41: #{tpu_custom_call.1} parent=1 // pred_fallthru
      _
    // Predicated region
    $region42: #{tpu_custom_call.1} parent=1 // pred_check
      _
    $region43: #{tpu_custom_call.1} parent=1 // pred_check_branch
      %109 = sbr.rel (0) target = $region45
    $region44: #{tpu_custom_call.1} parent=1 // pred_region
      %110 = dma.done [#allocation11], 112
    $region45: #{tpu_custom_call.1} parent=1 // pred_fallthru
      _
    // Predicated region
    $region46: #{tpu_custom_call.1} parent=1 // pred_check
      _
    $region47: #{tpu_custom_call.1} parent=1 // pred_check_branch
      %112 = sbr.rel (0) target = $region49
    $region48: #{tpu_custom_call.1} parent=1 // pred_region
      %113 = dma.done [#allocation11], 128
    $region49: #{tpu_custom_call.1} parent=1 // pred_fallthru
      _
    // Predicated region
    $region50: #{tpu_custom_call.1} parent=1 // pred_check
      _
    $region51: #{tpu_custom_call.1} parent=1 // pred_check_branch
      %115 = sbr.rel (0) target = $region53
    $region52: #{tpu_custom_call.1} parent=1 // pred_region
      %116 = dma.done [#allocation14], 4096
    $region53: #{tpu_custom_call.1} parent=1 // pred_fallthru
      _
    // Predicated region
    $region54: #{tpu_custom_call.1} parent=1 // pred_check
      _
    $region55: #{tpu_custom_call.1} parent=1 // pred_check_branch
      %118 = sbr.rel (0) target = $region57
    $region56: #{tpu_custom_call.1} parent=1 // pred_region
      %119 = dma.done [#allocation14], 448
    $region57: #{tpu_custom_call.1} parent=1 // pred_fallthru
      _
    // Predicated region
    $region58: #{tpu_custom_call.1} parent=1 // pred_check
      _
    $region59: #{tpu_custom_call.1} parent=1 // pred_check_branch
      %121 = sbr.rel (0) target = $region61
    $region60: #{tpu_custom_call.1} parent=1 // pred_region
      %122 = dma.done [#allocation17], 32
    $region61: #{tpu_custom_call.1} parent=1 // pred_fallthru
      _
    %123 = sfence
    // Predicated region
    $region62: #{tpu_custom_call.1} parent=1 // pred_check
      _
    $region63: #{tpu_custom_call.1} parent=1 // pred_check_branch
      %126 = sbr.rel target = $region65
    $region64: #{tpu_custom_call.1} parent=1 // pred_region
      %127 = sst [smem:[#allocation23]] [#allocation22]
      %128 = sst [smem:[#allocation24]] [#allocation21]
    $region65: #{tpu_custom_call.1} parent=1 // pred_fallthru
      _
    %130 = shalt.err (0)
    %s132 = sshll.u32 [#allocation2], 4
    %s133 = int_to_ptr.vmem [resolvable:$true] %s132
    %135 = dma.hbm_to_vmem [thread:$0]  %s5, 8192, %s133, [#allocation4]
    %s136 = sld [smem:[#allocation5]]
    %v137 = vld [vmem:[#allocation12] ss:$2 sm:$0xf]
    %v138 = vstv %s136
    %v139 = vmul.f32 %v138, %v137
    %s140 = sld [smem:[#allocation5 + $0x1]]
    %s141 = scalar_lea.vmem [#allocation12], 1
    %v142 = vld [vmem:[%s141] ss:$2 sm:$0xf]
    %v143 = vstv %s140
    %v144 = vmul.f32 %v143, %v142
    %v145 = vadd.f32 %v139, %v144
    %v146 = vld [vmem:[#allocation9] sm:$0x1]
    %v147 = vpack.c.bf16 %v146, %v146
    %v148 = vld [vmem:[#allocation13] sm:$0xff]
    %v149 = vld [vmem:[#allocation13 + $0x8] sm:$0xff]
    %v150 = vld [vmem:[#allocation13 + $0x10] sm:$0xff]
    %v151 = vld [vmem:[#allocation13 + $0x18] sm:$0xff]
    %v152 = vld [vmem:[#allocation13 + $0x20] sm:$0xff]
    %v153 = vld [vmem:[#allocation13 + $0x28] sm:$0xff]
    %v154 = vld [vmem:[#allocation13 + $0x30] sm:$0xff]
    %v155 = vld [vmem:[#allocation13 + $0x38] sm:$0xff]
    %v156 = vld [vmem:[#allocation13 + $0x40] sm:$0xff]
    %v157 = vld [vmem:[#allocation13 + $0x48] sm:$0xff]
    %v158 = vld [vmem:[#allocation13 + $0x50] sm:$0xff]
    %v159 = vld [vmem:[#allocation13 + $0x58] sm:$0xff]
    %v160 = vld [vmem:[#allocation13 + $0x60] sm:$0xff]
    %v161 = vld [vmem:[#allocation13 + $0x68] sm:$0xff]
    %v162 = vld [vmem:[#allocation13 + $0x70] sm:$0xff]
    %v163 = vld [vmem:[#allocation13 + $0x78] sm:$0xff]
    %v164 = vld [vmem:[#allocation13 + $0x80] sm:$0xff]
    %v165 = vld [vmem:[#allocation13 + $0x88] sm:$0xff]
    %v166 = vld [vmem:[#allocation13 + $0x90] sm:$0xff]
    %v167 = vld [vmem:[#allocation13 + $0x98] sm:$0xff]
    %v168 = vld [vmem:[#allocation13 + $0xa0] sm:$0xff]
    %v169 = vld [vmem:[#allocation13 + $0xa8] sm:$0xff]
    %v170 = vld [vmem:[#allocation13 + $0xb0] sm:$0xff]
    %v171 = vld [vmem:[#allocation13 + $0xb8] sm:$0xff]
    %v172 = vld [vmem:[#allocation13 + $0xc0] sm:$0xff]
    %v173 = vld [vmem:[#allocation13 + $0xc8] sm:$0xff]
    %v174 = vld [vmem:[#allocation13 + $0xd0] sm:$0xff]
    %v175 = vld [vmem:[#allocation13 + $0xd8] sm:$0xff]
    %v176 = vld [vmem:[#allocation13 + $0xe0] sm:$0xff]
    %v177 = vld [vmem:[#allocation13 + $0xe8] sm:$0xff]
    %v178 = vld [vmem:[#allocation13 + $0xf0] sm:$0xff]
    %v179 = vld [vmem:[#allocation13 + $0xf8] sm:$0xff]
    %v212 = vunpack.c.l.b16 %v148
    %v213 = vunpack.c.h.b16 %v148
    %v214 = vunpack.c.l.b16 %v149
    %v215 = vunpack.c.h.b16 %v149
    %v216 = vunpack.c.l.b16 %v150
    %v217 = vunpack.c.h.b16 %v150
    %v218 = vunpack.c.l.b16 %v151
    %v219 = vunpack.c.h.b16 %v151
    %v220 = vunpack.c.l.b16 %v152
    %v221 = vunpack.c.h.b16 %v152
    %v222 = vunpack.c.l.b16 %v153
    %v223 = vunpack.c.h.b16 %v153
    %v224 = vunpack.c.l.b16 %v154
    %v225 = vunpack.c.h.b16 %v154
    %v226 = vunpack.c.l.b16 %v155
    %v227 = vunpack.c.h.b16 %v155
    %v228 = vunpack.c.l.b16 %v156
    %v229 = vunpack.c.h.b16 %v156
    %v230 = vunpack.c.l.b16 %v157
    %v231 = vunpack.c.h.b16 %v157
    %v232 = vunpack.c.l.b16 %v158
    %v233 = vunpack.c.h.b16 %v158
    %v234 = vunpack.c.l.b16 %v159
    %v235 = vunpack.c.h.b16 %v159
    %v236 = vunpack.c.l.b16 %v160
    %v237 = vunpack.c.h.b16 %v160
    %v238 = vunpack.c.l.b16 %v161
    %v239 = vunpack.c.h.b16 %v161
    %v240 = vunpack.c.l.b16 %v162
    %v241 = vunpack.c.h.b16 %v162
    %v242 = vunpack.c.l.b16 %v163
    %v243 = vunpack.c.h.b16 %v163
    %v244 = vunpack.c.l.b16 %v164
    %v245 = vunpack.c.h.b16 %v164
    %v246 = vunpack.c.l.b16 %v165
    %v247 = vunpack.c.h.b16 %v165
    %v248 = vunpack.c.l.b16 %v166
    %v249 = vunpack.c.h.b16 %v166
    %v250 = vunpack.c.l.b16 %v167
    %v251 = vunpack.c.h.b16 %v167
    %v252 = vunpack.c.l.b16 %v168
    %v253 = vunpack.c.h.b16 %v168
    %v254 = vunpack.c.l.b16 %v169
    %v255 = vunpack.c.h.b16 %v169
    %v256 = vunpack.c.l.b16 %v170
    %v257 = vunpack.c.h.b16 %v170
    %v258 = vunpack.c.l.b16 %v171
    %v259 = vunpack.c.h.b16 %v171
    %v260 = vunpack.c.l.b16 %v172
    %v261 = vunpack.c.h.b16 %v172
    %v262 = vunpack.c.l.b16 %v173
    %v263 = vunpack.c.h.b16 %v173
    %v264 = vunpack.c.l.b16 %v174
    %v265 = vunpack.c.h.b16 %v174
    %v266 = vunpack.c.l.b16 %v175
    %v267 = vunpack.c.h.b16 %v175
    %v268 = vunpack.c.l.b16 %v176
    %v269 = vunpack.c.h.b16 %v176
    %v270 = vunpack.c.l.b16 %v177
    %v271 = vunpack.c.h.b16 %v177
    %v272 = vunpack.c.l.b16 %v178
    %v273 = vunpack.c.h.b16 %v178
    %v274 = vunpack.c.l.b16 %v179
    %v275 = vunpack.c.h.b16 %v179
    %v276 = vpack.c.b16 %v216, %v212
    %v277 = vpack.c.b16 %v217, %v213
    %v278 = vpack.c.b16 %v218, %v214
    %v279 = vpack.c.b16 %v219, %v215
    %v280 = vpack.c.b16 %v224, %v220
    %v281 = vpack.c.b16 %v225, %v221
    %v282 = vpack.c.b16 %v226, %v222
    %v283 = vpack.c.b16 %v227, %v223
    %v284 = vpack.c.b16 %v232, %v228
    %v285 = vpack.c.b16 %v233, %v229
    %v286 = vpack.c.b16 %v234, %v230
    %v287 = vpack.c.b16 %v235, %v231
    %v288 = vpack.c.b16 %v240, %v236
    %v289 = vpack.c.b16 %v241, %v237
    %v290 = vpack.c.b16 %v242, %v238
    %v291 = vpack.c.b16 %v243, %v239
    %v292 = vpack.c.b16 %v248, %v244
    %v293 = vpack.c.b16 %v249, %v245
    %v294 = vpack.c.b16 %v250, %v246
    %v295 = vpack.c.b16 %v251, %v247
    %v296 = vpack.c.b16 %v256, %v252
    %v297 = vpack.c.b16 %v257, %v253
    %v298 = vpack.c.b16 %v258, %v254
    %v299 = vpack.c.b16 %v259, %v255
    %v300 = vpack.c.b16 %v264, %v260
    %v301 = vpack.c.b16 %v265, %v261
    %v302 = vpack.c.b16 %v266, %v262
    %v303 = vpack.c.b16 %v267, %v263
    %v304 = vpack.c.b16 %v272, %v268
    %v305 = vpack.c.b16 %v273, %v269
    %v306 = vpack.c.b16 %v274, %v270
    %v307 = vpack.c.b16 %v275, %v271
    %340 = vmatprep.subr.bf16.mxu0 %v305
    %341 = vmatpush1.bf16.msra.mxu0 %v304
    %342 = vmatprep.subr.bf16.mxu0 %v301
    %343 = vmatpush1.bf16.msra.mxu0 %v300
    %344 = vmatprep.subr.bf16.mxu0 %v297
    %345 = vmatpush1.bf16.msra.mxu0 %v296
    %346 = vmatprep.subr.bf16.mxu0 %v293
    %347 = vmatpush1.bf16.msra.mxu0 %v292
    %348 = vmatprep.subr.bf16.mxu0 %v289
    %349 = vmatpush1.bf16.msra.mxu0 %v288
    %350 = vmatprep.subr.bf16.mxu0 %v285
    %351 = vmatpush1.bf16.msra.mxu0 %v284
    %352 = vmatprep.subr.bf16.mxu0 %v281
    %353 = vmatpush1.bf16.msra.mxu0 %v280
    %354 = vmatprep.subr.bf16.mxu0 %v277
    %355 = vmatpush1.bf16.msra.mxu0 %v276
    %356 = vmatprep.subr.bf16.mxu0 0
    %357 = vmatpush2.bf16.msra.mxu0 0
    %358 = vmatprep.subr.bf16.mxu0 0
    %359 = vmatpush2.bf16.msra.mxu0 0
    %360 = vmatprep.subr.bf16.mxu0 0
    %361 = vmatpush2.bf16.msra.mxu0 0
    %362 = vmatprep.subr.bf16.mxu0 0
    %363 = vmatpush2.bf16.msra.mxu0 0
    %364 = vmatprep.subr.bf16.mxu0 0
    %365 = vmatpush2.bf16.msra.mxu0 0
    %366 = vmatprep.subr.bf16.mxu0 0
    %367 = vmatpush2.bf16.msra.mxu0 0
    %368 = vmatprep.subr.bf16.mxu0 0
    %369 = vmatpush2.bf16.msra.mxu0 0
    %370 = vmatprep.subr.bf16.mxu0 0
    %371 = vmatpush2.bf16.msra.mxu0 0
    %372 = vmatprep.mubr.bf16.mxu0 0
    %373 = vmatmul.mubr.bf16.gmra.mxu0 %v147
    %v374 = vpop.f32.mrf.mxu0
    %v375 = vadd.f32 0.0, %v374
    %v376 = vpop.f32.mrf.mxu0
    %v377 = vadd.f32 0.0, %v376
    %v378 = vpop.f32.mrf.mxu0
    %v379 = vpop.f32.mrf.mxu0
    %380 = vdwg.mxu0
    %381 = vmatprep.subr.bf16.mxu0 %v307
    %382 = vmatpush1.bf16.msra.mxu0 %v306
    %383 = vmatprep.subr.bf16.mxu0 %v303
    %384 = vmatpush1.bf16.msra.mxu0 %v302
    %385 = vmatprep.subr.bf16.mxu0 %v299
    %386 = vmatpush1.bf16.msra.mxu0 %v298
    %387 = vmatprep.subr.bf16.mxu0 %v295
    %388 = vmatpush1.bf16.msra.mxu0 %v294
    %389 = vmatprep.subr.bf16.mxu0 %v291
    %390 = vmatpush1.bf16.msra.mxu0 %v290
    %391 = vmatprep.subr.bf16.mxu0 %v287
    %392 = vmatpush1.bf16.msra.mxu0 %v286
    %393 = vmatprep.subr.bf16.mxu0 %v283
    %394 = vmatpush1.bf16.msra.mxu0 %v282
    %395 = vmatprep.subr.bf16.mxu0 %v279
    %396 = vmatpush1.bf16.msra.mxu0 %v278
    %397 = vmatprep.subr.bf16.mxu0 0
    %398 = vmatpush2.bf16.msra.mxu0 0
    %399 = vmatprep.subr.bf16.mxu0 0
    %400 = vmatpush2.bf16.msra.mxu0 0
    %401 = vmatprep.subr.bf16.mxu0 0
    %402 = vmatpush2.bf16.msra.mxu0 0
    %403 = vmatprep.subr.bf16.mxu0 0
    %404 = vmatpush2.bf16.msra.mxu0 0
    %405 = vmatprep.subr.bf16.mxu0 0
    %406 = vmatpush2.bf16.msra.mxu0 0
    %407 = vmatprep.subr.bf16.mxu0 0
    %408 = vmatpush2.bf16.msra.mxu0 0
    %409 = vmatprep.subr.bf16.mxu0 0
    %410 = vmatpush2.bf16.msra.mxu0 0
    %411 = vmatprep.subr.bf16.mxu0 0
    %412 = vmatpush2.bf16.msra.mxu0 0
    %413 = vmatprep.mubr.bf16.mxu0 0
    %414 = vmatmul.mubr.bf16.gmra.mxu0 %v147
    %v415 = vpop.f32.mrf.mxu0
    %v416 = vadd.f32 0.0, %v415
    %v417 = vpop.f32.mrf.mxu0
    %v418 = vadd.f32 0.0, %v417
    %v419 = vpop.f32.mrf.mxu0
    %v420 = vpop.f32.mrf.mxu0
    %421 = vdwg.mxu0
    %v426 = vcombine.low %v375, %v377
    %v427 = vcombine.low %v416, %v418
    %v429 = vunpack.c.l.s4 1966171168
    %v430 = vunpack.c.0.s8 %v429
    %v431 = vlaneseq
    %v432 = vshrl.u32 %v431, 7
    %v433 = vsub.s32 %v430, %v432
    %v434 = vrot.slane %v426, %v433
    %v436 = vunpack.c.l.s4 1966171168
    %v437 = vunpack.c.0.s8 %v436
    %v438 = vlaneseq
    %v439 = vshrl.u32 %v438, 7
    %v440 = vsub.s32 %v437, %v439
    %v441 = vrot.slane %v427, %v440
    %v442 = vcombine.low %v434, %v441
    %v444 = vunpack.c.l.s4 1966171168
    %v445 = vunpack.c.0.s8 %v444
    %v446 = vlaneseq
    %v447 = vshrl.u32 %v446, 7
    %v448 = vsub.s32 %v445, %v447
    %v449 = vrot.slane %v442, %v448
    %v451 = vadd.f32 %v145, %v449
    %v452 = vld [vmem:[#allocation15] sm:$0xf]
    %v453 = vadd.f32 %v451, %v452
    %v454 = vld [vmem:[#allocation10] sm:$0x1]
    %v455 = vxor.u32 %v453, 2147483648
    %v456 = vmul.f32 %v455, 1.442695
    %v457 = vpow.pop %v456
    %v458 = vadd.f32 %v457, 1.0
    %v459 = vrcp.pop %v458
    %v460 = vmul.f32 1.0, %v459
    %v462 = vrot.slane %v453, 3
    %v464 = vtanh.pop %v462
    %v466 = vrot.slane %v460, 1
    %v468 = vmul.f32 %v466, %v454
    %v469 = vmul.f32 %v460, %v464
    %v470 = vadd.f32 %v468, %v469
    %v471 = vtanh.pop %v470
    %v472 = vrot.slane %v460, 2
    %v474 = vmul.f32 %v472, %v471
    %475 = vst [vmem:[#allocation18] sm:$0x1] %v474
    %476 = vst [vmem:[#allocation19] sm:$0x1] %v470
    %s477 = scalar_lea.hbm %s5, 8192
    %s478 = scalar_lea.vmem [#allocation2], 512
    %s479 = scalar_lea.sflag [#allocation4], 1
    // Predicated region
    $region66: #{tpu_custom_call.1} parent=1 // pred_check
      _
    $region67: #{tpu_custom_call.1} parent=1 // pred_check_branch
      %481 = sbr.rel target = $region69
    $region68: #{tpu_custom_call.1} parent=1 // pred_region
      %482 = sst [smem:[#allocation23]] [#allocation26]
      %483 = sst [smem:[#allocation24]] [#allocation25]
    $region69: #{tpu_custom_call.1} parent=1 // pred_fallthru
      _
    %485 = shalt.err (0)
    %s487 = sshll.u32 %s478, 4
    %s488 = int_to_ptr.vmem [resolvable:$true] %s487
    %490 = dma.hbm_to_vmem [thread:$0]  %s477, 8192, %s488, %s479
    %v491 = vpack.c.bf16 %v474, %v474
    %vm492 = vcmask 1040384
    %vm493 = vsmask.f32 256
    %vm494 = vmand %vm492, %vm493
    %v495 = vld [vmem:[#allocation3] sm:$0x1]
    %v496 = vsel %vm494, %v491, %v495
    %497 = vst [vmem:[#allocation3] sm:$0x1] %v496
    %s498 = scalar_lea.vmem [#allocation9], 1
    %v499 = vld [vmem:[%s498] sm:$0x1]
    %v500 = vpack.c.bf16 %v499, %v499
    %v501 = vld [vmem:[#allocation3 + $0x1] sm:$0x1]
    %v502 = vsel %vm494, %v500, %v501
    %503 = vst [vmem:[#allocation3 + $0x1] sm:$0x1] %v502
    %s504 = smul.u32 4, 32
    %s505 = smul.u32 %s504, 4
    %s506 = sshll.u32 %s505, 4
    %507 = dma.done [#allocation4], %s506
    %v508 = vld [vmem:[#allocation3] sm:$0x3]
    %v509 = vld [vmem:[#allocation2] sm:$0xff]
    %v510 = vld [vmem:[#allocation2 + $0x8] sm:$0xff]
    %v511 = vld [vmem:[#allocation2 + $0x10] sm:$0xff]
    %v512 = vld [vmem:[#allocation2 + $0x18] sm:$0xff]
    %v513 = vld [vmem:[#allocation2 + $0x20] sm:$0xff]
    %v514 = vld [vmem:[#allocation2 + $0x28] sm:$0xff]
    %v515 = vld [vmem:[#allocation2 + $0x30] sm:$0xff]
    %v516 = vld [vmem:[#allocation2 + $0x38] sm:$0xff]
    %v517 = vld [vmem:[#allocation2 + $0x40] sm:$0xff]
    %v518 = vld [vmem:[#allocation2 + $0x48] sm:$0xff]
    %v519 = vld [vmem:[#allocation2 + $0x50] sm:$0xff]
    %v520 = vld [vmem:[#allocation2 + $0x58] sm:$0xff]
    %v521 = vld [vmem:[#allocation2 + $0x60] sm:$0xff]
    %v522 = vld [vmem:[#allocation2 + $0x68] sm:$0xff]
    %v523 = vld [vmem:[#allocation2 + $0x70] sm:$0xff]
    %v524 = vld [vmem:[#allocation2 + $0x78] sm:$0xff]
    %v525 = vld [vmem:[#allocation2 + $0x80] sm:$0xff]
    %v526 = vld [vmem:[#allocation2 + $0x88] sm:$0xff]
    %v527 = vld [vmem:[#allocation2 + $0x90] sm:$0xff]
    %v528 = vld [vmem:[#allocation2 + $0x98] sm:$0xff]
    %v529 = vld [vmem:[#allocation2 + $0xa0] sm:$0xff]
    %v530 = vld [vmem:[#allocation2 + $0xa8] sm:$0xff]
    %v531 = vld [vmem:[#allocation2 + $0xb0] sm:$0xff]
    %v532 = vld [vmem:[#allocation2 + $0xb8] sm:$0xff]
    %v533 = vld [vmem:[#allocation2 + $0xc0] sm:$0xff]
    %v534 = vld [vmem:[#allocation2 + $0xc8] sm:$0xff]
    %v535 = vld [vmem:[#allocation2 + $0xd0] sm:$0xff]
    %v536 = vld [vmem:[#allocation2 + $0xd8] sm:$0xff]
    %v537 = vld [vmem:[#allocation2 + $0xe0] sm:$0xff]
    %v538 = vld [vmem:[#allocation2 + $0xe8] sm:$0xff]
    %v539 = vld [vmem:[#allocation2 + $0xf0] sm:$0xff]
    %v540 = vld [vmem:[#allocation2 + $0xf8] sm:$0xff]
    %v541 = vld [vmem:[#allocation2 + $0x100] sm:$0xff]
    %v542 = vld [vmem:[#allocation2 + $0x108] sm:$0xff]
    %v543 = vld [vmem:[#allocation2 + $0x110] sm:$0xff]
    %v544 = vld [vmem:[#allocation2 + $0x118] sm:$0xff]
    %v545 = vld [vmem:[#allocation2 + $0x120] sm:$0xff]
    %v546 = vld [vmem:[#allocation2 + $0x128] sm:$0xff]
    %v547 = vld [vmem:[#allocation2 + $0x130] sm:$0xff]
    %v548 = vld [vmem:[#allocation2 + $0x138] sm:$0xff]
    %v549 = vld [vmem:[#allocation2 + $0x140] sm:$0xff]
    %v550 = vld [vmem:[#allocation2 + $0x148] sm:$0xff]
    %v551 = vld [vmem:[#allocation2 + $0x150] sm:$0xff]
    %v552 = vld [vmem:[#allocation2 + $0x158] sm:$0xff]
    %v553 = vld [vmem:[#allocation2 + $0x160] sm:$0xff]
    %v554 = vld [vmem:[#allocation2 + $0x168] sm:$0xff]
    %v555 = vld [vmem:[#allocation2 + $0x170] sm:$0xff]
    %v556 = vld [vmem:[#allocation2 + $0x178] sm:$0xff]
    %v557 = vld [vmem:[#allocation2 + $0x180] sm:$0xff]
    %v558 = vld [vmem:[#allocation2 + $0x188] sm:$0xff]
    %v559 = vld [vmem:[#allocation2 + $0x190] sm:$0xff]
    %v560 = vld [vmem:[#allocation2 + $0x198] sm:$0xff]
    %v561 = vld [vmem:[#allocation2 + $0x1a0] sm:$0xff]
    %v562 = vld [vmem:[#allocation2 + $0x1a8] sm:$0xff]
    %v563 = vld [vmem:[#allocation2 + $0x1b0] sm:$0xff]
    %v564 = vld [vmem:[#allocation2 + $0x1b8] sm:$0xff]
    %v565 = vld [vmem:[#allocation2 + $0x1c0] sm:$0xff]
    %v566 = vld [vmem:[#allocation2 + $0x1c8] sm:$0xff]
    %v567 = vld [vmem:[#allocation2 + $0x1d0] sm:$0xff]
    %v568 = vld [vmem:[#allocation2 + $0x1d8] sm:$0xff]
    %v569 = vld [vmem:[#allocation2 + $0x1e0] sm:$0xff]
    %v570 = vld [vmem:[#allocation2 + $0x1e8] sm:$0xff]
    %v571 = vld [vmem:[#allocation2 + $0x1f0] sm:$0xff]
    %v572 = vld [vmem:[#allocation2 + $0x1f8] sm:$0xff]
    %s573 = scalar_lea.vmem [#allocation15], 4
    %v574 = vld [vmem:[%s573] sm:$0xf]
    %v577 = vunpack.c.l.s4 1966171168
    %v578 = vunpack.c.0.s8 %v577
    %v579 = vlaneseq
    %v580 = vshrl.u32 %v579, 7
    %v581 = vsub.s32 %v578, %v580
    %v582 = vrot.slane %v508, %v581
    %v583 = vcombine.high %v582, %v582
    %v585 = vunpack.c.l.s4 1966171168
    %v586 = vunpack.c.0.s8 %v585
    %v587 = vlaneseq
    %v588 = vshrl.u32 %v587, 7
    %v589 = vsub.s32 %v586, %v588
    %v590 = vrot.slane %v582, %v589
    %v592 = vunpack.c.l.s4 1966171168
    %v593 = vunpack.c.0.s8 %v592
    %v594 = vlaneseq
    %v595 = vshrl.u32 %v594, 7
    %v596 = vsub.s32 %v593, %v595
    %v597 = vrot.slane %v583, %v596
    %v664 = vunpack.c.l.b16 %v509
    %v665 = vunpack.c.h.b16 %v509
    %v666 = vunpack.c.l.b16 %v510
    %v667 = vunpack.c.h.b16 %v510
    %v668 = vunpack.c.l.b16 %v511
    %v669 = vunpack.c.h.b16 %v511
    %v670 = vunpack.c.l.b16 %v512
    %v671 = vunpack.c.h.b16 %v512
    %v672 = vunpack.c.l.b16 %v513
    %v673 = vunpack.c.h.b16 %v513
    %v674 = vunpack.c.l.b16 %v514
    %v675 = vunpack.c.h.b16 %v514
    %v676 = vunpack.c.l.b16 %v515
    %v677 = vunpack.c.h.b16 %v515
    %v678 = vunpack.c.l.b16 %v516
    %v679 = vunpack.c.h.b16 %v516
    %v680 = vunpack.c.l.b16 %v517
    %v681 = vunpack.c.h.b16 %v517
    %v682 = vunpack.c.l.b16 %v518
    %v683 = vunpack.c.h.b16 %v518
    %v684 = vunpack.c.l.b16 %v519
    %v685 = vunpack.c.h.b16 %v519
    %v686 = vunpack.c.l.b16 %v520
    %v687 = vunpack.c.h.b16 %v520
    %v688 = vunpack.c.l.b16 %v521
    %v689 = vunpack.c.h.b16 %v521
    %v690 = vunpack.c.l.b16 %v522
    %v691 = vunpack.c.h.b16 %v522
    %v692 = vunpack.c.l.b16 %v523
    %v693 = vunpack.c.h.b16 %v523
    %v694 = vunpack.c.l.b16 %v524
    %v695 = vunpack.c.h.b16 %v524
    %v696 = vunpack.c.l.b16 %v525
    %v697 = vunpack.c.h.b16 %v525
    %v698 = vunpack.c.l.b16 %v526
    %v699 = vunpack.c.h.b16 %v526
    %v700 = vunpack.c.l.b16 %v527
    %v701 = vunpack.c.h.b16 %v527
    %v702 = vunpack.c.l.b16 %v528
    %v703 = vunpack.c.h.b16 %v528
    %v704 = vunpack.c.l.b16 %v529
    %v705 = vunpack.c.h.b16 %v529
    %v706 = vunpack.c.l.b16 %v530
    %v707 = vunpack.c.h.b16 %v530
    %v708 = vunpack.c.l.b16 %v531
    %v709 = vunpack.c.h.b16 %v531
    %v710 = vunpack.c.l.b16 %v532
    %v711 = vunpack.c.h.b16 %v532
    %v712 = vunpack.c.l.b16 %v533
    %v713 = vunpack.c.h.b16 %v533
    %v714 = vunpack.c.l.b16 %v534
    %v715 = vunpack.c.h.b16 %v534
    %v716 = vunpack.c.l.b16 %v535
    %v717 = vunpack.c.h.b16 %v535
    %v718 = vunpack.c.l.b16 %v536
    %v719 = vunpack.c.h.b16 %v536
    %v720 = vunpack.c.l.b16 %v537
    %v721 = vunpack.c.h.b16 %v537
    %v722 = vunpack.c.l.b16 %v538
    %v723 = vunpack.c.h.b16 %v538
    %v724 = vunpack.c.l.b16 %v539
    %v725 = vunpack.c.h.b16 %v539
    %v726 = vunpack.c.l.b16 %v540
    %v727 = vunpack.c.h.b16 %v540
    %v728 = vunpack.c.l.b16 %v541
    %v729 = vunpack.c.h.b16 %v541
    %v730 = vunpack.c.l.b16 %v542
    %v731 = vunpack.c.h.b16 %v542
    %v732 = vunpack.c.l.b16 %v543
    %v733 = vunpack.c.h.b16 %v543
    %v734 = vunpack.c.l.b16 %v544
    %v735 = vunpack.c.h.b16 %v544
    %v736 = vunpack.c.l.b16 %v545
    %v737 = vunpack.c.h.b16 %v545
    %v738 = vunpack.c.l.b16 %v546
    %v739 = vunpack.c.h.b16 %v546
    %v740 = vunpack.c.l.b16 %v547
    %v741 = vunpack.c.h.b16 %v547
    %v742 = vunpack.c.l.b16 %v548
    %v743 = vunpack.c.h.b16 %v548
    %v744 = vunpack.c.l.b16 %v549
    %v745 = vunpack.c.h.b16 %v549
    %v746 = vunpack.c.l.b16 %v550
    %v747 = vunpack.c.h.b16 %v550
    %v748 = vunpack.c.l.b16 %v551
    %v749 = vunpack.c.h.b16 %v551
    %v750 = vunpack.c.l.b16 %v552
    %v751 = vunpack.c.h.b16 %v552
    %v752 = vunpack.c.l.b16 %v553
    %v753 = vunpack.c.h.b16 %v553
    %v754 = vunpack.c.l.b16 %v554
    %v755 = vunpack.c.h.b16 %v554
    %v756 = vunpack.c.l.b16 %v555
    %v757 = vunpack.c.h.b16 %v555
    %v758 = vunpack.c.l.b16 %v556
    %v759 = vunpack.c.h.b16 %v556
    %v760 = vunpack.c.l.b16 %v557
    %v761 = vunpack.c.h.b16 %v557
    %v762 = vunpack.c.l.b16 %v558
    %v763 = vunpack.c.h.b16 %v558
    %v764 = vunpack.c.l.b16 %v559
    %v765 = vunpack.c.h.b16 %v559
    %v766 = vunpack.c.l.b16 %v560
    %v767 = vunpack.c.h.b16 %v560
    %v768 = vunpack.c.l.b16 %v561
    %v769 = vunpack.c.h.b16 %v561
    %v770 = vunpack.c.l.b16 %v562
    %v771 = vunpack.c.h.b16 %v562
    %v772 = vunpack.c.l.b16 %v563
    %v773 = vunpack.c.h.b16 %v563
    %v774 = vunpack.c.l.b16 %v564
    %v775 = vunpack.c.h.b16 %v564
    %v776 = vunpack.c.l.b16 %v565
    %v777 = vunpack.c.h.b16 %v565
    %v778 = vunpack.c.l.b16 %v566
    %v779 = vunpack.c.h.b16 %v566
    %v780 = vunpack.c.l.b16 %v567
    %v781 = vunpack.c.h.b16 %v567
    %v782 = vunpack.c.l.b16 %v568
    %v783 = vunpack.c.h.b16 %v568
    %v784 = vunpack.c.l.b16 %v569
    %v785 = vunpack.c.h.b16 %v569
    %v786 = vunpack.c.l.b16 %v570
    %v787 = vunpack.c.h.b16 %v570
    %v788 = vunpack.c.l.b16 %v571
    %v789 = vunpack.c.h.b16 %v571
    %v790 = vunpack.c.l.b16 %v572
    %v791 = vunpack.c.h.b16 %v572
    %v792 = vpack.c.b16 %v668, %v664
    %v793 = vpack.c.b16 %v669, %v665
    %v794 = vpack.c.b16 %v670, %v666
    %v795 = vpack.c.b16 %v671, %v667
    %v796 = vpack.c.b16 %v676, %v672
    %v797 = vpack.c.b16 %v677, %v673
    %v798 = vpack.c.b16 %v678, %v674
    %v799 = vpack.c.b16 %v679, %v675
    %v800 = vpack.c.b16 %v684, %v680
    %v801 = vpack.c.b16 %v685, %v681
    %v802 = vpack.c.b16 %v686, %v682
    %v803 = vpack.c.b16 %v687, %v683
    %v804 = vpack.c.b16 %v692, %v688
    %v805 = vpack.c.b16 %v693, %v689
    %v806 = vpack.c.b16 %v694, %v690
    %v807 = vpack.c.b16 %v695, %v691
    %v808 = vpack.c.b16 %v700, %v696
    %v809 = vpack.c.b16 %v701, %v697
    %v810 = vpack.c.b16 %v702, %v698
    %v811 = vpack.c.b16 %v703, %v699
    %v812 = vpack.c.b16 %v708, %v704
    %v813 = vpack.c.b16 %v709, %v705
    %v814 = vpack.c.b16 %v710, %v706
    %v815 = vpack.c.b16 %v711, %v707
    %v816 = vpack.c.b16 %v716, %v712
    %v817 = vpack.c.b16 %v717, %v713
    %v818 = vpack.c.b16 %v718, %v714
    %v819 = vpack.c.b16 %v719, %v715
    %v820 = vpack.c.b16 %v724, %v720
    %v821 = vpack.c.b16 %v725, %v721
    %v822 = vpack.c.b16 %v726, %v722
    %v823 = vpack.c.b16 %v727, %v723
    %v824 = vpack.c.b16 %v732, %v728
    %v825 = vpack.c.b16 %v733, %v729
    %v826 = vpack.c.b16 %v734, %v730
    %v827 = vpack.c.b16 %v735, %v731
    %v828 = vpack.c.b16 %v740, %v736
    %v829 = vpack.c.b16 %v741, %v737
    %v830 = vpack.c.b16 %v742, %v738
    %v831 = vpack.c.b16 %v743, %v739
    %v832 = vpack.c.b16 %v748, %v744
    %v833 = vpack.c.b16 %v749, %v745
    %v834 = vpack.c.b16 %v750, %v746
    %v835 = vpack.c.b16 %v751, %v747
    %v836 = vpack.c.b16 %v756, %v752
    %v837 = vpack.c.b16 %v757, %v753
    %v838 = vpack.c.b16 %v758, %v754
    %v839 = vpack.c.b16 %v759, %v755
    %v840 = vpack.c.b16 %v764, %v760
    %v841 = vpack.c.b16 %v765, %v761
    %v842 = vpack.c.b16 %v766, %v762
    %v843 = vpack.c.b16 %v767, %v763
    %v844 = vpack.c.b16 %v772, %v768
    %v845 = vpack.c.b16 %v773, %v769
    %v846 = vpack.c.b16 %v774, %v770
    %v847 = vpack.c.b16 %v775, %v771
    %v848 = vpack.c.b16 %v780, %v776
    %v849 = vpack.c.b16 %v781, %v777
    %v850 = vpack.c.b16 %v782, %v778
    %v851 = vpack.c.b16 %v783, %v779
    %v852 = vpack.c.b16 %v788, %v784
    %v853 = vpack.c.b16 %v789, %v785
    %v854 = vpack.c.b16 %v790, %v786
    %v855 = vpack.c.b16 %v791, %v787
    %v921 = vlaneseq
    %v922 = vshrl.u32 %v921, 7
    %v923 = vsub.s32 0, %v922
    %v924 = vrot.slane %v574, %v923
    %v925 = vlaneseq
    %v926 = vshrl.u32 %v925, 7
    %v927 = vsub.s32 1, %v926
    %v928 = vrot.slane %v574, %v927
    %v929 = vlaneseq
    %v930 = vshrl.u32 %v929, 7
    %v931 = vsub.s32 2, %v930
    %v932 = vrot.slane %v574, %v931
    %v933 = vlaneseq
    %v934 = vshrl.u32 %v933, 7
    %v935 = vsub.s32 3, %v934
    %v936 = vrot.slane %v574, %v935
    %941 = vmatprep.subr.bf16.mxu0 %v821
    %942 = vmatpush1.bf16.msra.mxu0 %v820
    %943 = vmatprep.subr.bf16.mxu0 %v817
    %944 = vmatpush1.bf16.msra.mxu0 %v816
    %945 = vmatprep.subr.bf16.mxu0 %v813
    %946 = vmatpush1.bf16.msra.mxu0 %v812
    %947 = vmatprep.subr.bf16.mxu0 %v809
    %948 = vmatpush1.bf16.msra.mxu0 %v808
    %949 = vmatprep.subr.bf16.mxu0 %v805
    %950 = vmatpush1.bf16.msra.mxu0 %v804
    %951 = vmatprep.subr.bf16.mxu0 %v801
    %952 = vmatpush1.bf16.msra.mxu0 %v800
    %953 = vmatprep.subr.bf16.mxu0 %v797
    %954 = vmatpush1.bf16.msra.mxu0 %v796
    %955 = vmatprep.subr.bf16.mxu0 %v793
    %956 = vmatpush1.bf16.msra.mxu0 %v792
    %957 = vmatprep.subr.bf16.mxu0 %v853
    %958 = vmatpush2.bf16.msra.mxu0 %v852
    %959 = vmatprep.subr.bf16.mxu0 %v849
    %960 = vmatpush2.bf16.msra.mxu0 %v848
    %961 = vmatprep.subr.bf16.mxu0 %v845
    %962 = vmatpush2.bf16.msra.mxu0 %v844
    %963 = vmatprep.subr.bf16.mxu0 %v841
    %964 = vmatpush2.bf16.msra.mxu0 %v840
    %965 = vmatprep.subr.bf16.mxu0 %v837
    %966 = vmatpush2.bf16.msra.mxu0 %v836
    %967 = vmatprep.subr.bf16.mxu0 %v833
    %968 = vmatpush2.bf16.msra.mxu0 %v832
    %969 = vmatprep.subr.bf16.mxu0 %v829
    %970 = vmatpush2.bf16.msra.mxu0 %v828
    %971 = vmatprep.subr.bf16.mxu0 %v825
    %972 = vmatpush2.bf16.msra.mxu0 %v824
    %973 = vmatprep.mubr.bf16.mxu0 %v597
    %974 = vmatmul.mubr.bf16.gmra.mxu0 %v590
    %v975 = vpop.f32.mrf.mxu0
    %v976 = vadd.f32 %v924, %v975
    %v977 = vpop.f32.mrf.mxu0
    %v978 = vadd.f32 %v928, %v977
    %v979 = vpop.f32.mrf.mxu0
    %v980 = vpop.f32.mrf.mxu0
    %981 = vdwg.mxu0
    %982 = vmatprep.subr.bf16.mxu0 %v823
    %983 = vmatpush1.bf16.msra.mxu0 %v822
    %984 = vmatprep.subr.bf16.mxu0 %v819
    %985 = vmatpush1.bf16.msra.mxu0 %v818
    %986 = vmatprep.subr.bf16.mxu0 %v815
    %987 = vmatpush1.bf16.msra.mxu0 %v814
    %988 = vmatprep.subr.bf16.mxu0 %v811
    %989 = vmatpush1.bf16.msra.mxu0 %v810
    %990 = vmatprep.subr.bf16.mxu0 %v807
    %991 = vmatpush1.bf16.msra.mxu0 %v806
    %992 = vmatprep.subr.bf16.mxu0 %v803
    %993 = vmatpush1.bf16.msra.mxu0 %v802
    %994 = vmatprep.subr.bf16.mxu0 %v799
    %995 = vmatpush1.bf16.msra.mxu0 %v798
    %996 = vmatprep.subr.bf16.mxu0 %v795
    %997 = vmatpush1.bf16.msra.mxu0 %v794
    %998 = vmatprep.subr.bf16.mxu0 %v855
    %999 = vmatpush2.bf16.msra.mxu0 %v854
    %1000 = vmatprep.subr.bf16.mxu0 %v851
    %1001 = vmatpush2.bf16.msra.mxu0 %v850
    %1002 = vmatprep.subr.bf16.mxu0 %v847
    %1003 = vmatpush2.bf16.msra.mxu0 %v846
    %1004 = vmatprep.subr.bf16.mxu0 %v843
    %1005 = vmatpush2.bf16.msra.mxu0 %v842
    %1006 = vmatprep.subr.bf16.mxu0 %v839
    %1007 = vmatpush2.bf16.msra.mxu0 %v838
    %1008 = vmatprep.subr.bf16.mxu0 %v835
    %1009 = vmatpush2.bf16.msra.mxu0 %v834
    %1010 = vmatprep.subr.bf16.mxu0 %v831
    %1011 = vmatpush2.bf16.msra.mxu0 %v830
    %1012 = vmatprep.subr.bf16.mxu0 %v827
    %1013 = vmatpush2.bf16.msra.mxu0 %v826
    %1014 = vmatprep.mubr.bf16.mxu0 %v597
    %1015 = vmatmul.mubr.bf16.gmra.mxu0 %v590
    %v1016 = vpop.f32.mrf.mxu0
    %v1017 = vadd.f32 %v932, %v1016
    %v1018 = vpop.f32.mrf.mxu0
    %v1019 = vadd.f32 %v936, %v1018
    %v1020 = vpop.f32.mrf.mxu0
    %v1021 = vpop.f32.mrf.mxu0
    %1022 = vdwg.mxu0
    %s1023 = scalar_lea.vmem [#allocation10], 1
    %v1024 = vld [vmem:[%s1023] sm:$0x1]
    %v1025 = vxor.u32 %v976, 2147483648
    %v1026 = vxor.u32 %v978, 2147483648
    %v1027 = vxor.u32 %v1017, 2147483648
    %v1028 = vmul.f32 %v1025, 1.442695
    %v1029 = vpow.pop %v1028
    %v1030 = vmul.f32 %v1026, 1.442695
    %v1031 = vpow.pop %v1030
    %v1032 = vmul.f32 %v1027, 1.442695
    %v1033 = vpow.pop %v1032
    %v1034 = vadd.f32 %v1029, 1.0
    %v1035 = vadd.f32 %v1031, 1.0
    %v1036 = vadd.f32 %v1033, 1.0
    %v1037 = vrcp.pop %v1034
    %v1038 = vmul.f32 1.0, %v1037
    %v1039 = vrcp.pop %v1035
    %v1040 = vmul.f32 1.0, %v1039
    %v1041 = vrcp.pop %v1036
    %v1042 = vmul.f32 1.0, %v1041
    %v1043 = vtanh.pop %v1019
    %v1044 = vmul.f32 %v1040, %v1024
    %v1045 = vmul.f32 %v1038, %v1043
    %v1046 = vadd.f32 %v1044, %v1045
    %v1047 = vtanh.pop %v1046
    %v1048 = vmul.f32 %v1042, %v1047
    %s1049 = scalar_lea.vmem [#allocation18], 1
    %1050 = vst [vmem:[%s1049] sm:$0x1] %v1048
    %s1051 = scalar_lea.vmem [#allocation19], 1
    %1052 = vst [vmem:[%s1051] sm:$0x1] %v1046
    %s1053 = scalar_lea.hbm %s5, 16384
    // Predicated region
    $region70: #{tpu_custom_call.1} parent=1 // pred_check
      _
    $region71: #{tpu_custom_call.1} parent=1 // pred_check_branch
      %1055 = sbr.rel target = $region73
    $region72: #{tpu_custom_call.1} parent=1 // pred_region
      %1056 = sst [smem:[#allocation23]] [#allocation28]
      %1057 = sst [smem:[#allocation24]] [#allocation27]
    $region73: #{tpu_custom_call.1} parent=1 // pred_fallthru
      _
    %1059 = shalt.err (0)
    %s1061 = sshll.u32 [#allocation2], 4
    %s1062 = int_to_ptr.vmem [resolvable:$true] %s1061
    %1064 = dma.hbm_to_vmem [thread:$0]  %s1053, 8192, %s1062, [#allocation4]
    %v1065 = vadd.f32 %v1048, %v474
    %v1066 = vpack.c.bf16 %v1065, %v1065
    %v1067 = vld [vmem:[#allocation3] sm:$0x1]
    %v1068 = vsel %vm494, %v1066, %v1067
    %1069 = vst [vmem:[#allocation3] sm:$0x1] %v1068
    %s1070 = scalar_lea.vmem [#allocation9], 2
    %v1071 = vld [vmem:[%s1070] sm:$0x1]
    %v1072 = vpack.c.bf16 %v1071, %v1071
    %v1073 = vld [vmem:[#allocation3 + $0x1] sm:$0x1]
    %v1074 = vsel %vm494, %v1072, %v1073
    %1075 = vst [vmem:[#allocation3 + $0x1] sm:$0x1] %v1074
    %s1076 = sshll.u32 %s505, 4
    %1077 = dma.done %s479, %s1076
    %v1078 = vld [vmem:[#allocation3] sm:$0x3]
    %v1079 = vld [vmem:[%s478] sm:$0xff]
    %v1080 = vld [vmem:[%s478 + $0x8] sm:$0xff]
    %v1081 = vld [vmem:[%s478 + $0x10] sm:$0xff]
    %v1082 = vld [vmem:[%s478 + $0x18] sm:$0xff]
    %v1083 = vld [vmem:[%s478 + $0x20] sm:$0xff]
    %v1084 = vld [vmem:[%s478 + $0x28] sm:$0xff]
    %v1085 = vld [vmem:[%s478 + $0x30] sm:$0xff]
    %v1086 = vld [vmem:[%s478 + $0x38] sm:$0xff]
    %v1087 = vld [vmem:[%s478 + $0x40] sm:$0xff]
    %v1088 = vld [vmem:[%s478 + $0x48] sm:$0xff]
    %v1089 = vld [vmem:[%s478 + $0x50] sm:$0xff]
    %v1090 = vld [vmem:[%s478 + $0x58] sm:$0xff]
    %v1091 = vld [vmem:[%s478 + $0x60] sm:$0xff]
    %v1092 = vld [vmem:[%s478 + $0x68] sm:$0xff]
    %v1093 = vld [vmem:[%s478 + $0x70] sm:$0xff]
    %v1094 = vld [vmem:[%s478 + $0x78] sm:$0xff]
    %v1095 = vld [vmem:[%s478 + $0x80] sm:$0xff]
    %v1096 = vld [vmem:[%s478 + $0x88] sm:$0xff]
    %v1097 = vld [vmem:[%s478 + $0x90] sm:$0xff]
    %v1098 = vld [vmem:[%s478 + $0x98] sm:$0xff]
    %v1099 = vld [vmem:[%s478 + $0xa0] sm:$0xff]
    %v1100 = vld [vmem:[%s478 + $0xa8] sm:$0xff]
    %v1101 = vld [vmem:[%s478 + $0xb0] sm:$0xff]
    %v1102 = vld [vmem:[%s478 + $0xb8] sm:$0xff]
    %v1103 = vld [vmem:[%s478 + $0xc0] sm:$0xff]
    %v1104 = vld [vmem:[%s478 + $0xc8] sm:$0xff]
    %v1105 = vld [vmem:[%s478 + $0xd0] sm:$0xff]
    %v1106 = vld [vmem:[%s478 + $0xd8] sm:$0xff]
    %v1107 = vld [vmem:[%s478 + $0xe0] sm:$0xff]
    %v1108 = vld [vmem:[%s478 + $0xe8] sm:$0xff]
    %v1109 = vld [vmem:[%s478 + $0xf0] sm:$0xff]
    %v1110 = vld [vmem:[%s478 + $0xf8] sm:$0xff]
    %v1111 = vld [vmem:[%s478 + $0x100] sm:$0xff]
    %v1112 = vld [vmem:[%s478 + $0x108] sm:$0xff]
    %v1113 = vld [vmem:[%s478 + $0x110] sm:$0xff]
    %v1114 = vld [vmem:[%s478 + $0x118] sm:$0xff]
    %v1115 = vld [vmem:[%s478 + $0x120] sm:$0xff]
    %v1116 = vld [vmem:[%s478 + $0x128] sm:$0xff]
    %v1117 = vld [vmem:[%s478 + $0x130] sm:$0xff]
    %v1118 = vld [vmem:[%s478 + $0x138] sm:$0xff]
    %v1119 = vld [vmem:[%s478 + $0x140] sm:$0xff]
    %v1120 = vld [vmem:[%s478 + $0x148] sm:$0xff]
    %v1121 = vld [vmem:[%s478 + $0x150] sm:$0xff]
    %v1122 = vld [vmem:[%s478 + $0x158] sm:$0xff]
    %v1123 = vld [vmem:[%s478 + $0x160] sm:$0xff]
    %v1124 = vld [vmem:[%s478 + $0x168] sm:$0xff]
    %v1125 = vld [vmem:[%s478 + $0x170] sm:$0xff]
    %v1126 = vld [vmem:[%s478 + $0x178] sm:$0xff]
    %v1127 = vld [vmem:[%s478 + $0x180] sm:$0xff]
    %v1128 = vld [vmem:[%s478 + $0x188] sm:$0xff]
    %v1129 = vld [vmem:[%s478 + $0x190] sm:$0xff]
    %v1130 = vld [vmem:[%s478 + $0x198] sm:$0xff]
    %v1131 = vld [vmem:[%s478 + $0x1a0] sm:$0xff]
    %v1132 = vld [vmem:[%s478 + $0x1a8] sm:$0xff]
    %v1133 = vld [vmem:[%s478 + $0x1b0] sm:$0xff]
    %v1134 = vld [vmem:[%s478 + $0x1b8] sm:$0xff]
    %v1135 = vld [vmem:[%s478 + $0x1c0] sm:$0xff]
    %v1136 = vld [vmem:[%s478 + $0x1c8] sm:$0xff]
    %v1137 = vld [vmem:[%s478 + $0x1d0] sm:$0xff]
    %v1138 = vld [vmem:[%s478 + $0x1d8] sm:$0xff]
    %v1139 = vld [vmem:[%s478 + $0x1e0] sm:$0xff]
    %v1140 = vld [vmem:[%s478 + $0x1e8] sm:$0xff]
    %v1141 = vld [vmem:[%s478 + $0x1f0] sm:$0xff]
    %v1142 = vld [vmem:[%s478 + $0x1f8] sm:$0xff]
    %s1143 = scalar_lea.vmem [#allocation15], 8
    %v1144 = vld [vmem:[%s1143] sm:$0xf]
    %v1147 = vunpack.c.l.s4 1966171168
    %v1148 = vunpack.c.0.s8 %v1147
    %v1149 = vlaneseq
    %v1150 = vshrl.u32 %v1149, 7
    %v1151 = vsub.s32 %v1148, %v1150
    %v1152 = vrot.slane %v1078, %v1151
    %v1153 = vcombine.high %v1152, %v1152
    %v1155 = vunpack.c.l.s4 1966171168
    %v1156 = vunpack.c.0.s8 %v1155
    %v1157 = vlaneseq
    %v1158 = vshrl.u32 %v1157, 7
    %v1159 = vsub.s32 %v1156, %v1158
    %v1160 = vrot.slane %v1152, %v1159
    %v1162 = vunpack.c.l.s4 1966171168
    %v1163 = vunpack.c.0.s8 %v1162
    %v1164 = vlaneseq
    %v1165 = vshrl.u32 %v1164, 7
    %v1166 = vsub.s32 %v1163, %v1165
    %v1167 = vrot.slane %v1153, %v1166
    %v1234 = vunpack.c.l.b16 %v1079
    %v1235 = vunpack.c.h.b16 %v1079
    %v1236 = vunpack.c.l.b16 %v1080
    %v1237 = vunpack.c.h.b16 %v1080
    %v1238 = vunpack.c.l.b16 %v1081
    %v1239 = vunpack.c.h.b16 %v1081
    %v1240 = vunpack.c.l.b16 %v1082
    %v1241 = vunpack.c.h.b16 %v1082
    %v1242 = vunpack.c.l.b16 %v1083
    %v1243 = vunpack.c.h.b16 %v1083
    %v1244 = vunpack.c.l.b16 %v1084
    %v1245 = vunpack.c.h.b16 %v1084
    %v1246 = vunpack.c.l.b16 %v1085
    %v1247 = vunpack.c.h.b16 %v1085
    %v1248 = vunpack.c.l.b16 %v1086
    %v1249 = vunpack.c.h.b16 %v1086
    %v1250 = vunpack.c.l.b16 %v1087
    %v1251 = vunpack.c.h.b16 %v1087
    %v1252 = vunpack.c.l.b16 %v1088
    %v1253 = vunpack.c.h.b16 %v1088
    %v1254 = vunpack.c.l.b16 %v1089
    %v1255 = vunpack.c.h.b16 %v1089
    %v1256 = vunpack.c.l.b16 %v1090
    %v1257 = vunpack.c.h.b16 %v1090
    %v1258 = vunpack.c.l.b16 %v1091
    %v1259 = vunpack.c.h.b16 %v1091
    %v1260 = vunpack.c.l.b16 %v1092
    %v1261 = vunpack.c.h.b16 %v1092
    %v1262 = vunpack.c.l.b16 %v1093
    %v1263 = vunpack.c.h.b16 %v1093
    %v1264 = vunpack.c.l.b16 %v1094
    %v1265 = vunpack.c.h.b16 %v1094
    %v1266 = vunpack.c.l.b16 %v1095
    %v1267 = vunpack.c.h.b16 %v1095
    %v1268 = vunpack.c.l.b16 %v1096
    %v1269 = vunpack.c.h.b16 %v1096
    %v1270 = vunpack.c.l.b16 %v1097
    %v1271 = vunpack.c.h.b16 %v1097
    %v1272 = vunpack.c.l.b16 %v1098
    %v1273 = vunpack.c.h.b16 %v1098
    %v1274 = vunpack.c.l.b16 %v1099
    %v1275 = vunpack.c.h.b16 %v1099
    %v1276 = vunpack.c.l.b16 %v1100
    %v1277 = vunpack.c.h.b16 %v1100
    %v1278 = vunpack.c.l.b16 %v1101
    %v1279 = vunpack.c.h.b16 %v1101
    %v1280 = vunpack.c.l.b16 %v1102
    %v1281 = vunpack.c.h.b16 %v1102
    %v1282 = vunpack.c.l.b16 %v1103
    %v1283 = vunpack.c.h.b16 %v1103
    %v1284 = vunpack.c.l.b16 %v1104
    %v1285 = vunpack.c.h.b16 %v1104
    %v1286 = vunpack.c.l.b16 %v1105
    %v1287 = vunpack.c.h.b16 %v1105
    %v1288 = vunpack.c.l.b16 %v1106
    %v1289 = vunpack.c.h.b16 %v1106
    %v1290 = vunpack.c.l.b16 %v1107
    %v1291 = vunpack.c.h.b16 %v1107
    %v1292 = vunpack.c.l.b16 %v1108
    %v1293 = vunpack.c.h.b16 %v1108
    %v1294 = vunpack.c.l.b16 %v1109
    %v1295 = vunpack.c.h.b16 %v1109
    %v1296 = vunpack.c.l.b16 %v1110
    %v1297 = vunpack.c.h.b16 %v1110
    %v1298 = vunpack.c.l.b16 %v1111
    %v1299 = vunpack.c.h.b16 %v1111
    %v1300 = vunpack.c.l.b16 %v1112
    %v1301 = vunpack.c.h.b16 %v1112
    %v1302 = vunpack.c.l.b16 %v1113
    %v1303 = vunpack.c.h.b16 %v1113
    %v1304 = vunpack.c.l.b16 %v1114
    %v1305 = vunpack.c.h.b16 %v1114
    %v1306 = vunpack.c.l.b16 %v1115
    %v1307 = vunpack.c.h.b16 %v1115
    %v1308 = vunpack.c.l.b16 %v1116
    %v1309 = vunpack.c.h.b16 %v1116
    %v1310 = vunpack.c.l.b16 %v1117
    %v1311 = vunpack.c.h.b16 %v1117
    %v1312 = vunpack.c.l.b16 %v1118
    %v1313 = vunpack.c.h.b16 %v1118
    %v1314 = vunpack.c.l.b16 %v1119
    %v1315 = vunpack.c.h.b16 %v1119
    %v1316 = vunpack.c.l.b16 %v1120
    %v1317 = vunpack.c.h.b16 %v1120
    %v1318 = vunpack.c.l.b16 %v1121
    %v1319 = vunpack.c.h.b16 %v1121
    %v1320 = vunpack.c.l.b16 %v1122
    %v1321 = vunpack.c.h.b16 %v1122
    %v1322 = vunpack.c.l.b16 %v1123
    %v1323 = vunpack.c.h.b16 %v1123
    %v1324 = vunpack.c.l.b16 %v1124
    %v1325 = vunpack.c.h.b16 %v1124
    %v1326 = vunpack.c.l.b16 %v1125
    %v1327 = vunpack.c.h.b16 %v1125
    %v1328 = vunpack.c.l.b16 %v1126
    %v1329 = vunpack.c.h.b16 %v1126
    %v1330 = vunpack.c.l.b16 %v1127
    %v1331 = vunpack.c.h.b16 %v1127
    %v1332 = vunpack.c.l.b16 %v1128
    %v1333 = vunpack.c.h.b16 %v1128
    %v1334 = vunpack.c.l.b16 %v1129
    %v1335 = vunpack.c.h.b16 %v1129
    %v1336 = vunpack.c.l.b16 %v1130
    %v1337 = vunpack.c.h.b16 %v1130
    %v1338 = vunpack.c.l.b16 %v1131
    %v1339 = vunpack.c.h.b16 %v1131
    %v1340 = vunpack.c.l.b16 %v1132
    %v1341 = vunpack.c.h.b16 %v1132
    %v1342 = vunpack.c.l.b16 %v1133
    %v1343 = vunpack.c.h.b16 %v1133
    %v1344 = vunpack.c.l.b16 %v1134
    %v1345 = vunpack.c.h.b16 %v1134
    %v1346 = vunpack.c.l.b16 %v1135
    %v1347 = vunpack.c.h.b16 %v1135
    %v1348 = vunpack.c.l.b16 %v1136
    %v1349 = vunpack.c.h.b16 %v1136
    %v1350 = vunpack.c.l.b16 %v1137
    %v1351 = vunpack.c.h.b16 %v1137
    %v1352 = vunpack.c.l.b16 %v1138
    %v1353 = vunpack.c.h.b16 %v1138
    %v1354 = vunpack.c.l.b16 %v1139
    %v1355 = vunpack.c.h.b16 %v1139
    %v1356 = vunpack.c.l.b16 %v1140
    %v1357 = vunpack.c.h.b16 %v1140
    %v1358 = vunpack.c.l.b16 %v1141
    %v1359 = vunpack.c.h.b16 %v1141
    %v1360 = vunpack.c.l.b16 %v1142
    %v1361 = vunpack.c.h.b16 %v1142
    %v1362 = vpack.c.b16 %v1238, %v1234
    %v1363 = vpack.c.b16 %v1239, %v1235
    %v1364 = vpack.c.b16 %v1240, %v1236
    %v1365 = vpack.c.b16 %v1241, %v1237
    %v1366 = vpack.c.b16 %v1246, %v1242
    %v1367 = vpack.c.b16 %v1247, %v1243
    %v1368 = vpack.c.b16 %v1248, %v1244
    %v1369 = vpack.c.b16 %v1249, %v1245
    %v1370 = vpack.c.b16 %v1254, %v1250
    %v1371 = vpack.c.b16 %v1255, %v1251
    %v1372 = vpack.c.b16 %v1256, %v1252
    %v1373 = vpack.c.b16 %v1257, %v1253
    %v1374 = vpack.c.b16 %v1262, %v1258
    %v1375 = vpack.c.b16 %v1263, %v1259
    %v1376 = vpack.c.b16 %v1264, %v1260
    %v1377 = vpack.c.b16 %v1265, %v1261
    %v1378 = vpack.c.b16 %v1270, %v1266
    %v1379 = vpack.c.b16 %v1271, %v1267
    %v1380 = vpack.c.b16 %v1272, %v1268
    %v1381 = vpack.c.b16 %v1273, %v1269
    %v1382 = vpack.c.b16 %v1278, %v1274
    %v1383 = vpack.c.b16 %v1279, %v1275
    %v1384 = vpack.c.b16 %v1280, %v1276
    %v1385 = vpack.c.b16 %v1281, %v1277
    %v1386 = vpack.c.b16 %v1286, %v1282
    %v1387 = vpack.c.b16 %v1287, %v1283
    %v1388 = vpack.c.b16 %v1288, %v1284
    %v1389 = vpack.c.b16 %v1289, %v1285
    %v1390 = vpack.c.b16 %v1294, %v1290
    %v1391 = vpack.c.b16 %v1295, %v1291
    %v1392 = vpack.c.b16 %v1296, %v1292
    %v1393 = vpack.c.b16 %v1297, %v1293
    %v1394 = vpack.c.b16 %v1302, %v1298
    %v1395 = vpack.c.b16 %v1303, %v1299
    %v1396 = vpack.c.b16 %v1304, %v1300
    %v1397 = vpack.c.b16 %v1305, %v1301
    %v1398 = vpack.c.b16 %v1310, %v1306
    %v1399 = vpack.c.b16 %v1311, %v1307
    %v1400 = vpack.c.b16 %v1312, %v1308
    %v1401 = vpack.c.b16 %v1313, %v1309
    %v1402 = vpack.c.b16 %v1318, %v1314
    %v1403 = vpack.c.b16 %v1319, %v1315
    %v1404 = vpack.c.b16 %v1320, %v1316
    %v1405 = vpack.c.b16 %v1321, %v1317
    %v1406 = vpack.c.b16 %v1326, %v1322
    %v1407 = vpack.c.b16 %v1327, %v1323
    %v1408 = vpack.c.b16 %v1328, %v1324
    %v1409 = vpack.c.b16 %v1329, %v1325
    %v1410 = vpack.c.b16 %v1334, %v1330
    %v1411 = vpack.c.b16 %v1335, %v1331
    %v1412 = vpack.c.b16 %v1336, %v1332
    %v1413 = vpack.c.b16 %v1337, %v1333
    %v1414 = vpack.c.b16 %v1342, %v1338
    %v1415 = vpack.c.b16 %v1343, %v1339
    %v1416 = vpack.c.b16 %v1344, %v1340
    %v1417 = vpack.c.b16 %v1345, %v1341
    %v1418 = vpack.c.b16 %v1350, %v1346
    %v1419 = vpack.c.b16 %v1351, %v1347
    %v1420 = vpack.c.b16 %v1352, %v1348
    %v1421 = vpack.c.b16 %v1353, %v1349
    %v1422 = vpack.c.b16 %v1358, %v1354
    %v1423 = vpack.c.b16 %v1359, %v1355
    %v1424 = vpack.c.b16 %v1360, %v1356
    %v1425 = vpack.c.b16 %v1361, %v1357
    %v1491 = vlaneseq
    %v1492 = vshrl.u32 %v1491, 7
    %v1493 = vsub.s32 0, %v1492
    %v1494 = vrot.slane %v1144, %v1493
    %v1495 = vlaneseq
    %v1496 = vshrl.u32 %v1495, 7
    %v1497 = vsub.s32 1, %v1496
    %v1498 = vrot.slane %v1144, %v1497
    %v1499 = vlaneseq
    %v1500 = vshrl.u32 %v1499, 7
    %v1501 = vsub.s32 2, %v1500
    %v1502 = vrot.slane %v1144, %v1501
    %v1503 = vlaneseq
    %v1504 = vshrl.u32 %v1503, 7
    %v1505 = vsub.s32 3, %v1504
    %v1506 = vrot.slane %v1144, %v1505
    %1511 = vmatprep.subr.bf16.mxu0 %v1391
    %1512 = vmatpush1.bf16.msra.mxu0 %v1390
    %1513 = vmatprep.subr.bf16.mxu0 %v1387
    %1514 = vmatpush1.bf16.msra.mxu0 %v1386
    %1515 = vmatprep.subr.bf16.mxu0 %v1383
    %1516 = vmatpush1.bf16.msra.mxu0 %v1382
    %1517 = vmatprep.subr.bf16.mxu0 %v1379
    %1518 = vmatpush1.bf16.msra.mxu0 %v1378
    %1519 = vmatprep.subr.bf16.mxu0 %v1375
    %1520 = vmatpush1.bf16.msra.mxu0 %v1374
    %1521 = vmatprep.subr.bf16.mxu0 %v1371
    %1522 = vmatpush1.bf16.msra.mxu0 %v1370
    %1523 = vmatprep.subr.bf16.mxu0 %v1367
    %1524 = vmatpush1.bf16.msra.mxu0 %v1366
    %1525 = vmatprep.subr.bf16.mxu0 %v1363
    %1526 = vmatpush1.bf16.msra.mxu0 %v1362
    %1527 = vmatprep.subr.bf16.mxu0 %v1423
    %1528 = vmatpush2.bf16.msra.mxu0 %v1422
    %1529 = vmatprep.subr.bf16.mxu0 %v1419
    %1530 = vmatpush2.bf16.msra.mxu0 %v1418
    %1531 = vmatprep.subr.bf16.mxu0 %v1415
    %1532 = vmatpush2.bf16.msra.mxu0 %v1414
    %1533 = vmatprep.subr.bf16.mxu0 %v1411
    %1534 = vmatpush2.bf16.msra.mxu0 %v1410
    %1535 = vmatprep.subr.bf16.mxu0 %v1407
    %1536 = vmatpush2.bf16.msra.mxu0 %v1406
    %1537 = vmatprep.subr.bf16.mxu0 %v1403
    %1538 = vmatpush2.bf16.msra.mxu0 %v1402
    %1539 = vmatprep.subr.bf16.mxu0 %v1399
    %1540 = vmatpush2.bf16.msra.mxu0 %v1398
    %1541 = vmatprep.subr.bf16.mxu0 %v1395
    %1542 = vmatpush2.bf16.msra.mxu0 %v1394
    %1543 = vmatprep.mubr.bf16.mxu0 %v1167
    %1544 = vmatmul.mubr.bf16.gmra.mxu0 %v1160
    %v1545 = vpop.f32.mrf.mxu0
    %v1546 = vadd.f32 %v1494, %v1545
    %v1547 = vpop.f32.mrf.mxu0
    %v1548 = vadd.f32 %v1498, %v1547
    %v1549 = vpop.f32.mrf.mxu0
    %v1550 = vpop.f32.mrf.mxu0
    %1551 = vdwg.mxu0
    %1552 = vmatprep.subr.bf16.mxu0 %v1393
    %1553 = vmatpush1.bf16.msra.mxu0 %v1392
    %1554 = vmatprep.subr.bf16.mxu0 %v1389
    %1555 = vmatpush1.bf16.msra.mxu0 %v1388
    %1556 = vmatprep.subr.bf16.mxu0 %v1385
    %1557 = vmatpush1.bf16.msra.mxu0 %v1384
    %1558 = vmatprep.subr.bf16.mxu0 %v1381
    %1559 = vmatpush1.bf16.msra.mxu0 %v1380
    %1560 = vmatprep.subr.bf16.mxu0 %v1377
    %1561 = vmatpush1.bf16.msra.mxu0 %v1376
    %1562 = vmatprep.subr.bf16.mxu0 %v1373
    %1563 = vmatpush1.bf16.msra.mxu0 %v1372
    %1564 = vmatprep.subr.bf16.mxu0 %v1369
    %1565 = vmatpush1.bf16.msra.mxu0 %v1368
    %1566 = vmatprep.subr.bf16.mxu0 %v1365
    %1567 = vmatpush1.bf16.msra.mxu0 %v1364
    %1568 = vmatprep.subr.bf16.mxu0 %v1425
    %1569 = vmatpush2.bf16.msra.mxu0 %v1424
    %1570 = vmatprep.subr.bf16.mxu0 %v1421
    %1571 = vmatpush2.bf16.msra.mxu0 %v1420
    %1572 = vmatprep.subr.bf16.mxu0 %v1417
    %1573 = vmatpush2.bf16.msra.mxu0 %v1416
    %1574 = vmatprep.subr.bf16.mxu0 %v1413
    %1575 = vmatpush2.bf16.msra.mxu0 %v1412
    %1576 = vmatprep.subr.bf16.mxu0 %v1409
    %1577 = vmatpush2.bf16.msra.mxu0 %v1408
    %1578 = vmatprep.subr.bf16.mxu0 %v1405
    %1579 = vmatpush2.bf16.msra.mxu0 %v1404
    %1580 = vmatprep.subr.bf16.mxu0 %v1401
    %1581 = vmatpush2.bf16.msra.mxu0 %v1400
    %1582 = vmatprep.subr.bf16.mxu0 %v1397
    %1583 = vmatpush2.bf16.msra.mxu0 %v1396
    %1584 = vmatprep.mubr.bf16.mxu0 %v1167
    %1585 = vmatmul.mubr.bf16.gmra.mxu0 %v1160
    %v1586 = vpop.f32.mrf.mxu0
    %v1587 = vadd.f32 %v1502, %v1586
    %v1588 = vpop.f32.mrf.mxu0
    %v1589 = vadd.f32 %v1506, %v1588
    %v1590 = vpop.f32.mrf.mxu0
    %v1591 = vpop.f32.mrf.mxu0
    %1592 = vdwg.mxu0
    %s1593 = scalar_lea.vmem [#allocation10], 2
    %v1594 = vld [vmem:[%s1593] sm:$0x1]
    %v1595 = vxor.u32 %v1546, 2147483648
    %v1596 = vxor.u32 %v1548, 2147483648
    %v1597 = vxor.u32 %v1587, 2147483648
    %v1598 = vmul.f32 %v1595, 1.442695
    %v1599 = vpow.pop %v1598
    %v1600 = vmul.f32 %v1596, 1.442695
    %v1601 = vpow.pop %v1600
    %v1602 = vmul.f32 %v1597, 1.442695
    %v1603 = vpow.pop %v1602
    %v1604 = vadd.f32 %v1599, 1.0
    %v1605 = vadd.f32 %v1601, 1.0
    %v1606 = vadd.f32 %v1603, 1.0
    %v1607 = vrcp.pop %v1604
    %v1608 = vmul.f32 1.0, %v1607
    %v1609 = vrcp.pop %v1605
    %v1610 = vmul.f32 1.0, %v1609
    %v1611 = vrcp.pop %v1606
    %v1612 = vmul.f32 1.0, %v1611
    %v1613 = vtanh.pop %v1589
    %v1614 = vmul.f32 %v1610, %v1594
    %v1615 = vmul.f32 %v1608, %v1613
    %v1616 = vadd.f32 %v1614, %v1615
    %v1617 = vtanh.pop %v1616
    %v1618 = vmul.f32 %v1612, %v1617
    %s1619 = scalar_lea.vmem [#allocation18], 2
    %1620 = vst [vmem:[%s1619] sm:$0x1] %v1618
    %s1621 = scalar_lea.vmem [#allocation19], 2
    %1622 = vst [vmem:[%s1621] sm:$0x1] %v1616
    %s1623 = scalar_lea.hbm %s5, 24576
    // Predicated region
    $region74: #{tpu_custom_call.1} parent=1 // pred_check
      _
    $region75: #{tpu_custom_call.1} parent=1 // pred_check_branch
      %1625 = sbr.rel target = $region77
    $region76: #{tpu_custom_call.1} parent=1 // pred_region
      %1626 = sst [smem:[#allocation23]] [#allocation30]
      %1627 = sst [smem:[#allocation24]] [#allocation29]
    $region77: #{tpu_custom_call.1} parent=1 // pred_fallthru
      _
    %1629 = shalt.err (0)
    %s1631 = sshll.u32 %s478, 4
    %s1632 = int_to_ptr.vmem [resolvable:$true] %s1631
    %1634 = dma.hbm_to_vmem [thread:$0]  %s1623, 8192, %s1632, %s479
    %v1635 = vadd.f32 %v1618, %v1048
    %v1636 = vpack.c.bf16 %v1635, %v1635
    %v1637 = vld [vmem:[#allocation3] sm:$0x1]
    %v1638 = vsel %vm494, %v1636, %v1637
    %1639 = vst [vmem:[#allocation3] sm:$0x1] %v1638
    %s1640 = scalar_lea.vmem [#allocation9], 3
    %v1641 = vld [vmem:[%s1640] sm:$0x1]
    %v1642 = vpack.c.bf16 %v1641, %v1641
    %v1643 = vld [vmem:[#allocation3 + $0x1] sm:$0x1]
    %v1644 = vsel %vm494, %v1642, %v1643
    %1645 = vst [vmem:[#allocation3 + $0x1] sm:$0x1] %v1644
    %s1646 = sshll.u32 %s505, 4
    %1647 = dma.done [#allocation4], %s1646
    %v1648 = vld [vmem:[#allocation3] sm:$0x3]
    %v1649 = vld [vmem:[#allocation2] sm:$0xff]
    %v1650 = vld [vmem:[#allocation2 + $0x8] sm:$0xff]
    %v1651 = vld [vmem:[#allocation2 + $0x10] sm:$0xff]
    %v1652 = vld [vmem:[#allocation2 + $0x18] sm:$0xff]
    %v1653 = vld [vmem:[#allocation2 + $0x20] sm:$0xff]
    %v1654 = vld [vmem:[#allocation2 + $0x28] sm:$0xff]
    %v1655 = vld [vmem:[#allocation2 + $0x30] sm:$0xff]
    %v1656 = vld [vmem:[#allocation2 + $0x38] sm:$0xff]
    %v1657 = vld [vmem:[#allocation2 + $0x40] sm:$0xff]
    %v1658 = vld [vmem:[#allocation2 + $0x48] sm:$0xff]
    %v1659 = vld [vmem:[#allocation2 + $0x50] sm:$0xff]
    %v1660 = vld [vmem:[#allocation2 + $0x58] sm:$0xff]
    %v1661 = vld [vmem:[#allocation2 + $0x60] sm:$0xff]
    %v1662 = vld [vmem:[#allocation2 + $0x68] sm:$0xff]
    %v1663 = vld [vmem:[#allocation2 + $0x70] sm:$0xff]
    %v1664 = vld [vmem:[#allocation2 + $0x78] sm:$0xff]
    %v1665 = vld [vmem:[#allocation2 + $0x80] sm:$0xff]
    %v1666 = vld [vmem:[#allocation2 + $0x88] sm:$0xff]
    %v1667 = vld [vmem:[#allocation2 + $0x90] sm:$0xff]
    %v1668 = vld [vmem:[#allocation2 + $0x98] sm:$0xff]
    %v1669 = vld [vmem:[#allocation2 + $0xa0] sm:$0xff]
    %v1670 = vld [vmem:[#allocation2 + $0xa8] sm:$0xff]
    %v1671 = vld [vmem:[#allocation2 + $0xb0] sm:$0xff]
    %v1672 = vld [vmem:[#allocation2 + $0xb8] sm:$0xff]
    %v1673 = vld [vmem:[#allocation2 + $0xc0] sm:$0xff]
    %v1674 = vld [vmem:[#allocation2 + $0xc8] sm:$0xff]
    %v1675 = vld [vmem:[#allocation2 + $0xd0] sm:$0xff]
    %v1676 = vld [vmem:[#allocation2 + $0xd8] sm:$0xff]
    %v1677 = vld [vmem:[#allocation2 + $0xe0] sm:$0xff]
    %v1678 = vld [vmem:[#allocation2 + $0xe8] sm:$0xff]
    %v1679 = vld [vmem:[#allocation2 + $0xf0] sm:$0xff]
    %v1680 = vld [vmem:[#allocation2 + $0xf8] sm:$0xff]
    %v1681 = vld [vmem:[#allocation2 + $0x100] sm:$0xff]
    %v1682 = vld [vmem:[#allocation2 + $0x108] sm:$0xff]
    %v1683 = vld [vmem:[#allocation2 + $0x110] sm:$0xff]
    %v1684 = vld [vmem:[#allocation2 + $0x118] sm:$0xff]
    %v1685 = vld [vmem:[#allocation2 + $0x120] sm:$0xff]
    %v1686 = vld [vmem:[#allocation2 + $0x128] sm:$0xff]
    %v1687 = vld [vmem:[#allocation2 + $0x130] sm:$0xff]
    %v1688 = vld [vmem:[#allocation2 + $0x138] sm:$0xff]
    %v1689 = vld [vmem:[#allocation2 + $0x140] sm:$0xff]
    %v1690 = vld [vmem:[#allocation2 + $0x148] sm:$0xff]
    %v1691 = vld [vmem:[#allocation2 + $0x150] sm:$0xff]
    %v1692 = vld [vmem:[#allocation2 + $0x158] sm:$0xff]
    %v1693 = vld [vmem:[#allocation2 + $0x160] sm:$0xff]
    %v1694 = vld [vmem:[#allocation2 + $0x168] sm:$0xff]
    %v1695 = vld [vmem:[#allocation2 + $0x170] sm:$0xff]
    %v1696 = vld [vmem:[#allocation2 + $0x178] sm:$0xff]
    %v1697 = vld [vmem:[#allocation2 + $0x180] sm:$0xff]
    %v1698 = vld [vmem:[#allocation2 + $0x188] sm:$0xff]
    %v1699 = vld [vmem:[#allocation2 + $0x190] sm:$0xff]
    %v1700 = vld [vmem:[#allocation2 + $0x198] sm:$0xff]
    %v1701 = vld [vmem:[#allocation2 + $0x1a0] sm:$0xff]
    %v1702 = vld [vmem:[#allocation2 + $0x1a8] sm:$0xff]
    %v1703 = vld [vmem:[#allocation2 + $0x1b0] sm:$0xff]
    %v1704 = vld [vmem:[#allocation2 + $0x1b8] sm:$0xff]
    %v1705 = vld [vmem:[#allocation2 + $0x1c0] sm:$0xff]
    %v1706 = vld [vmem:[#allocation2 + $0x1c8] sm:$0xff]
    %v1707 = vld [vmem:[#allocation2 + $0x1d0] sm:$0xff]
    %v1708 = vld [vmem:[#allocation2 + $0x1d8] sm:$0xff]
    %v1709 = vld [vmem:[#allocation2 + $0x1e0] sm:$0xff]
    %v1710 = vld [vmem:[#allocation2 + $0x1e8] sm:$0xff]
    %v1711 = vld [vmem:[#allocation2 + $0x1f0] sm:$0xff]
    %v1712 = vld [vmem:[#allocation2 + $0x1f8] sm:$0xff]
    %s1713 = scalar_lea.vmem [#allocation15], 12
    %v1714 = vld [vmem:[%s1713] sm:$0xf]
    %v1717 = vunpack.c.l.s4 1966171168
    %v1718 = vunpack.c.0.s8 %v1717
    %v1719 = vlaneseq
    %v1720 = vshrl.u32 %v1719, 7
    %v1721 = vsub.s32 %v1718, %v1720
    %v1722 = vrot.slane %v1648, %v1721
    %v1723 = vcombine.high %v1722, %v1722
    %v1725 = vunpack.c.l.s4 1966171168
    %v1726 = vunpack.c.0.s8 %v1725
    %v1727 = vlaneseq
    %v1728 = vshrl.u32 %v1727, 7
    %v1729 = vsub.s32 %v1726, %v1728
    %v1730 = vrot.slane %v1722, %v1729
    %v1732 = vunpack.c.l.s4 1966171168
    %v1733 = vunpack.c.0.s8 %v1732
    %v1734 = vlaneseq
    %v1735 = vshrl.u32 %v1734, 7
    %v1736 = vsub.s32 %v1733, %v1735
    %v1737 = vrot.slane %v1723, %v1736
    %v1804 = vunpack.c.l.b16 %v1649
    %v1805 = vunpack.c.h.b16 %v1649
    %v1806 = vunpack.c.l.b16 %v1650
    %v1807 = vunpack.c.h.b16 %v1650
    %v1808 = vunpack.c.l.b16 %v1651
    %v1809 = vunpack.c.h.b16 %v1651
    %v1810 = vunpack.c.l.b16 %v1652
    %v1811 = vunpack.c.h.b16 %v1652
    %v1812 = vunpack.c.l.b16 %v1653
    %v1813 = vunpack.c.h.b16 %v1653
    %v1814 = vunpack.c.l.b16 %v1654
    %v1815 = vunpack.c.h.b16 %v1654
    %v1816 = vunpack.c.l.b16 %v1655
    %v1817 = vunpack.c.h.b16 %v1655
    %v1818 = vunpack.c.l.b16 %v1656
    %v1819 = vunpack.c.h.b16 %v1656
    %v1820 = vunpack.c.l.b16 %v1657
    %v1821 = vunpack.c.h.b16 %v1657
    %v1822 = vunpack.c.l.b16 %v1658
    %v1823 = vunpack.c.h.b16 %v1658
    %v1824 = vunpack.c.l.b16 %v1659
    %v1825 = vunpack.c.h.b16 %v1659
    %v1826 = vunpack.c.l.b16 %v1660
    %v1827 = vunpack.c.h.b16 %v1660
    %v1828 = vunpack.c.l.b16 %v1661
    %v1829 = vunpack.c.h.b16 %v1661
    %v1830 = vunpack.c.l.b16 %v1662
    %v1831 = vunpack.c.h.b16 %v1662
    %v1832 = vunpack.c.l.b16 %v1663
    %v1833 = vunpack.c.h.b16 %v1663
    %v1834 = vunpack.c.l.b16 %v1664
    %v1835 = vunpack.c.h.b16 %v1664
    %v1836 = vunpack.c.l.b16 %v1665
    %v1837 = vunpack.c.h.b16 %v1665
    %v1838 = vunpack.c.l.b16 %v1666
    %v1839 = vunpack.c.h.b16 %v1666
    %v1840 = vunpack.c.l.b16 %v1667
    %v1841 = vunpack.c.h.b16 %v1667
    %v1842 = vunpack.c.l.b16 %v1668
    %v1843 = vunpack.c.h.b16 %v1668
    %v1844 = vunpack.c.l.b16 %v1669
    %v1845 = vunpack.c.h.b16 %v1669
    %v1846 = vunpack.c.l.b16 %v1670
    %v1847 = vunpack.c.h.b16 %v1670
    %v1848 = vunpack.c.l.b16 %v1671
    %v1849 = vunpack.c.h.b16 %v1671
    %v1850 = vunpack.c.l.b16 %v1672
    %v1851 = vunpack.c.h.b16 %v1672
    %v1852 = vunpack.c.l.b16 %v1673
    %v1853 = vunpack.c.h.b16 %v1673
    %v1854 = vunpack.c.l.b16 %v1674
    %v1855 = vunpack.c.h.b16 %v1674
    %v1856 = vunpack.c.l.b16 %v1675
    %v1857 = vunpack.c.h.b16 %v1675
    %v1858 = vunpack.c.l.b16 %v1676
    %v1859 = vunpack.c.h.b16 %v1676
    %v1860 = vunpack.c.l.b16 %v1677
    %v1861 = vunpack.c.h.b16 %v1677
    %v1862 = vunpack.c.l.b16 %v1678
    %v1863 = vunpack.c.h.b16 %v1678
    %v1864 = vunpack.c.l.b16 %v1679
    %v1865 = vunpack.c.h.b16 %v1679
    %v1866 = vunpack.c.l.b16 %v1680
    %v1867 = vunpack.c.h.b16 %v1680
    %v1868 = vunpack.c.l.b16 %v1681
    %v1869 = vunpack.c.h.b16 %v1681
    %v1870 = vunpack.c.l.b16 %v1682
    %v1871 = vunpack.c.h.b16 %v1682
    %v1872 = vunpack.c.l.b16 %v1683
    %v1873 = vunpack.c.h.b16 %v1683
    %v1874 = vunpack.c.l.b16 %v1684
    %v1875 = vunpack.c.h.b16 %v1684
    %v1876 = vunpack.c.l.b16 %v1685
    %v1877 = vunpack.c.h.b16 %v1685
    %v1878 = vunpack.c.l.b16 %v1686
    %v1879 = vunpack.c.h.b16 %v1686
    %v1880 = vunpack.c.l.b16 %v1687
    %v1881 = vunpack.c.h.b16 %v1687
    %v1882 = vunpack.c.l.b16 %v1688
    %v1883 = vunpack.c.h.b16 %v1688
    %v1884 = vunpack.c.l.b16 %v1689
    %v1885 = vunpack.c.h.b16 %v1689
    %v1886 = vunpack.c.l.b16 %v1690
    %v1887 = vunpack.c.h.b16 %v1690
    %v1888 = vunpack.c.l.b16 %v1691
    %v1889 = vunpack.c.h.b16 %v1691
    %v1890 = vunpack.c.l.b16 %v1692
    %v1891 = vunpack.c.h.b16 %v1692
    %v1892 = vunpack.c.l.b16 %v1693
    %v1893 = vunpack.c.h.b16 %v1693
    %v1894 = vunpack.c.l.b16 %v1694
    %v1895 = vunpack.c.h.b16 %v1694
    %v1896 = vunpack.c.l.b16 %v1695
    %v1897 = vunpack.c.h.b16 %v1695
    %v1898 = vunpack.c.l.b16 %v1696
    %v1899 = vunpack.c.h.b16 %v1696
    %v1900 = vunpack.c.l.b16 %v1697
    %v1901 = vunpack.c.h.b16 %v1697
    %v1902 = vunpack.c.l.b16 %v1698
    %v1903 = vunpack.c.h.b16 %v1698
    %v1904 = vunpack.c.l.b16 %v1699
    %v1905 = vunpack.c.h.b16 %v1699
    %v1906 = vunpack.c.l.b16 %v1700
    %v1907 = vunpack.c.h.b16 %v1700
    %v1908 = vunpack.c.l.b16 %v1701
    %v1909 = vunpack.c.h.b16 %v1701
    %v1910 = vunpack.c.l.b16 %v1702
    %v1911 = vunpack.c.h.b16 %v1702
    %v1912 = vunpack.c.l.b16 %v1703
    %v1913 = vunpack.c.h.b16 %v1703
    %v1914 = vunpack.c.l.b16 %v1704
    %v1915 = vunpack.c.h.b16 %v1704
    %v1916 = vunpack.c.l.b16 %v1705
    %v1917 = vunpack.c.h.b16 %v1705
    %v1918 = vunpack.c.l.b16 %v1706
    %v1919 = vunpack.c.h.b16 %v1706
    %v1920 = vunpack.c.l.b16 %v1707
    %v1921 = vunpack.c.h.b16 %v1707
    %v1922 = vunpack.c.l.b16 %v1708
    %v1923 = vunpack.c.h.b16 %v1708
    %v1924 = vunpack.c.l.b16 %v1709
    %v1925 = vunpack.c.h.b16 %v1709
    %v1926 = vunpack.c.l.b16 %v1710
    %v1927 = vunpack.c.h.b16 %v1710
    %v1928 = vunpack.c.l.b16 %v1711
    %v1929 = vunpack.c.h.b16 %v1711
    %v1930 = vunpack.c.l.b16 %v1712
    %v1931 = vunpack.c.h.b16 %v1712
    %v1932 = vpack.c.b16 %v1808, %v1804
    %v1933 = vpack.c.b16 %v1809, %v1805
    %v1934 = vpack.c.b16 %v1810, %v1806
    %v1935 = vpack.c.b16 %v1811, %v1807
    %v1936 = vpack.c.b16 %v1816, %v1812
    %v1937 = vpack.c.b16 %v1817, %v1813
    %v1938 = vpack.c.b16 %v1818, %v1814
    %v1939 = vpack.c.b16 %v1819, %v1815
    %v1940 = vpack.c.b16 %v1824, %v1820
    %v1941 = vpack.c.b16 %v1825, %v1821
    %v1942 = vpack.c.b16 %v1826, %v1822
    %v1943 = vpack.c.b16 %v1827, %v1823
    %v1944 = vpack.c.b16 %v1832, %v1828
    %v1945 = vpack.c.b16 %v1833, %v1829
    %v1946 = vpack.c.b16 %v1834, %v1830
    %v1947 = vpack.c.b16 %v1835, %v1831
    %v1948 = vpack.c.b16 %v1840, %v1836
    %v1949 = vpack.c.b16 %v1841, %v1837
    %v1950 = vpack.c.b16 %v1842, %v1838
    %v1951 = vpack.c.b16 %v1843, %v1839
    %v1952 = vpack.c.b16 %v1848, %v1844
    %v1953 = vpack.c.b16 %v1849, %v1845
    %v1954 = vpack.c.b16 %v1850, %v1846
    %v1955 = vpack.c.b16 %v1851, %v1847
    %v1956 = vpack.c.b16 %v1856, %v1852
    %v1957 = vpack.c.b16 %v1857, %v1853
    %v1958 = vpack.c.b16 %v1858, %v1854
    %v1959 = vpack.c.b16 %v1859, %v1855
    %v1960 = vpack.c.b16 %v1864, %v1860
    %v1961 = vpack.c.b16 %v1865, %v1861
    %v1962 = vpack.c.b16 %v1866, %v1862
    %v1963 = vpack.c.b16 %v1867, %v1863
    %v1964 = vpack.c.b16 %v1872, %v1868
    %v1965 = vpack.c.b16 %v1873, %v1869
    %v1966 = vpack.c.b16 %v1874, %v1870
    %v1967 = vpack.c.b16 %v1875, %v1871
    %v1968 = vpack.c.b16 %v1880, %v1876
    %v1969 = vpack.c.b16 %v1881, %v1877
    %v1970 = vpack.c.b16 %v1882, %v1878
    %v1971 = vpack.c.b16 %v1883, %v1879
    %v1972 = vpack.c.b16 %v1888, %v1884
    %v1973 = vpack.c.b16 %v1889, %v1885
    %v1974 = vpack.c.b16 %v1890, %v1886
    %v1975 = vpack.c.b16 %v1891, %v1887
    %v1976 = vpack.c.b16 %v1896, %v1892
    %v1977 = vpack.c.b16 %v1897, %v1893
    %v1978 = vpack.c.b16 %v1898, %v1894
    %v1979 = vpack.c.b16 %v1899, %v1895
    %v1980 = vpack.c.b16 %v1904, %v1900
    %v1981 = vpack.c.b16 %v1905, %v1901
    %v1982 = vpack.c.b16 %v1906, %v1902
    %v1983 = vpack.c.b16 %v1907, %v1903
    %v1984 = vpack.c.b16 %v1912, %v1908
    %v1985 = vpack.c.b16 %v1913, %v1909
    %v1986 = vpack.c.b16 %v1914, %v1910
    %v1987 = vpack.c.b16 %v1915, %v1911
    %v1988 = vpack.c.b16 %v1920, %v1916
    %v1989 = vpack.c.b16 %v1921, %v1917
    %v1990 = vpack.c.b16 %v1922, %v1918
    %v1991 = vpack.c.b16 %v1923, %v1919
    %v1992 = vpack.c.b16 %v1928, %v1924
    %v1993 = vpack.c.b16 %v1929, %v1925
    %v1994 = vpack.c.b16 %v1930, %v1926
    %v1995 = vpack.c.b16 %v1931, %v1927
    %v2061 = vlaneseq
    %v2062 = vshrl.u32 %v2061, 7
    %v2063 = vsub.s32 0, %v2062
    %v2064 = vrot.slane %v1714, %v2063
    %v2065 = vlaneseq
    %v2066 = vshrl.u32 %v2065, 7
    %v2067 = vsub.s32 1, %v2066
    %v2068 = vrot.slane %v1714, %v2067
    %v2069 = vlaneseq
    %v2070 = vshrl.u32 %v2069, 7
    %v2071 = vsub.s32 2, %v2070
    %v2072 = vrot.slane %v1714, %v2071
    %v2073 = vlaneseq
    %v2074 = vshrl.u32 %v2073, 7
    %v2075 = vsub.s32 3, %v2074
    %v2076 = vrot.slane %v1714, %v2075
    %2081 = vmatprep.subr.bf16.mxu0 %v1961
    %2082 = vmatpush1.bf16.msra.mxu0 %v1960
    %2083 = vmatprep.subr.bf16.mxu0 %v1957
    %2084 = vmatpush1.bf16.msra.mxu0 %v1956
    %2085 = vmatprep.subr.bf16.mxu0 %v1953
    %2086 = vmatpush1.bf16.msra.mxu0 %v1952
    %2087 = vmatprep.subr.bf16.mxu0 %v1949
    %2088 = vmatpush1.bf16.msra.mxu0 %v1948
    %2089 = vmatprep.subr.bf16.mxu0 %v1945
    %2090 = vmatpush1.bf16.msra.mxu0 %v1944
    %2091 = vmatprep.subr.bf16.mxu0 %v1941
    %2092 = vmatpush1.bf16.msra.mxu0 %v1940
    %2093 = vmatprep.subr.bf16.mxu0 %v1937
    %2094 = vmatpush1.bf16.msra.mxu0 %v1936
    %2095 = vmatprep.subr.bf16.mxu0 %v1933
    %2096 = vmatpush1.bf16.msra.mxu0 %v1932
    %2097 = vmatprep.subr.bf16.mxu0 %v1993
    %2098 = vmatpush2.bf16.msra.mxu0 %v1992
    %2099 = vmatprep.subr.bf16.mxu0 %v1989
    %2100 = vmatpush2.bf16.msra.mxu0 %v1988
    %2101 = vmatprep.subr.bf16.mxu0 %v1985
    %2102 = vmatpush2.bf16.msra.mxu0 %v1984
    %2103 = vmatprep.subr.bf16.mxu0 %v1981
    %2104 = vmatpush2.bf16.msra.mxu0 %v1980
    %2105 = vmatprep.subr.bf16.mxu0 %v1977
    %2106 = vmatpush2.bf16.msra.mxu0 %v1976
    %2107 = vmatprep.subr.bf16.mxu0 %v1973
    %2108 = vmatpush2.bf16.msra.mxu0 %v1972
    %2109 = vmatprep.subr.bf16.mxu0 %v1969
    %2110 = vmatpush2.bf16.msra.mxu0 %v1968
    %2111 = vmatprep.subr.bf16.mxu0 %v1965
    %2112 = vmatpush2.bf16.msra.mxu0 %v1964
    %2113 = vmatprep.mubr.bf16.mxu0 %v1737
    %2114 = vmatmul.mubr.bf16.gmra.mxu0 %v1730
    %v2115 = vpop.f32.mrf.mxu0
    %v2116 = vadd.f32 %v2064, %v2115
    %v2117 = vpop.f32.mrf.mxu0
    %v2118 = vadd.f32 %v2068, %v2117
    %v2119 = vpop.f32.mrf.mxu0
    %v2120 = vpop.f32.mrf.mxu0
    %2121 = vdwg.mxu0
    %2122 = vmatprep.subr.bf16.mxu0 %v1963
    %2123 = vmatpush1.bf16.msra.mxu0 %v1962
    %2124 = vmatprep.subr.bf16.mxu0 %v1959
    %2125 = vmatpush1.bf16.msra.mxu0 %v1958
    %2126 = vmatprep.subr.bf16.mxu0 %v1955
    %2127 = vmatpush1.bf16.msra.mxu0 %v1954
    %2128 = vmatprep.subr.bf16.mxu0 %v1951
    %2129 = vmatpush1.bf16.msra.mxu0 %v1950
    %2130 = vmatprep.subr.bf16.mxu0 %v1947
    %2131 = vmatpush1.bf16.msra.mxu0 %v1946
    %2132 = vmatprep.subr.bf16.mxu0 %v1943
    %2133 = vmatpush1.bf16.msra.mxu0 %v1942
    %2134 = vmatprep.subr.bf16.mxu0 %v1939
    %2135 = vmatpush1.bf16.msra.mxu0 %v1938
    %2136 = vmatprep.subr.bf16.mxu0 %v1935
    %2137 = vmatpush1.bf16.msra.mxu0 %v1934
    %2138 = vmatprep.subr.bf16.mxu0 %v1995
    %2139 = vmatpush2.bf16.msra.mxu0 %v1994
    %2140 = vmatprep.subr.bf16.mxu0 %v1991
    %2141 = vmatpush2.bf16.msra.mxu0 %v1990
    %2142 = vmatprep.subr.bf16.mxu0 %v1987
    %2143 = vmatpush2.bf16.msra.mxu0 %v1986
    %2144 = vmatprep.subr.bf16.mxu0 %v1983
    %2145 = vmatpush2.bf16.msra.mxu0 %v1982
    %2146 = vmatprep.subr.bf16.mxu0 %v1979
    %2147 = vmatpush2.bf16.msra.mxu0 %v1978
    %2148 = vmatprep.subr.bf16.mxu0 %v1975
    %2149 = vmatpush2.bf16.msra.mxu0 %v1974
    %2150 = vmatprep.subr.bf16.mxu0 %v1971
    %2151 = vmatpush2.bf16.msra.mxu0 %v1970
    %2152 = vmatprep.subr.bf16.mxu0 %v1967
    %2153 = vmatpush2.bf16.msra.mxu0 %v1966
    %2154 = vmatprep.mubr.bf16.mxu0 %v1737
    %2155 = vmatmul.mubr.bf16.gmra.mxu0 %v1730
    %v2156 = vpop.f32.mrf.mxu0
    %v2157 = vadd.f32 %v2072, %v2156
    %v2158 = vpop.f32.mrf.mxu0
    %v2159 = vadd.f32 %v2076, %v2158
    %v2160 = vpop.f32.mrf.mxu0
    %v2161 = vpop.f32.mrf.mxu0
    %2162 = vdwg.mxu0
    %s2163 = scalar_lea.vmem [#allocation10], 3
    %v2164 = vld [vmem:[%s2163] sm:$0x1]
    %v2165 = vxor.u32 %v2116, 2147483648
    %v2166 = vxor.u32 %v2118, 2147483648
    %v2167 = vxor.u32 %v2157, 2147483648
    %v2168 = vmul.f32 %v2165, 1.442695
    %v2169 = vpow.pop %v2168
    %v2170 = vmul.f32 %v2166, 1.442695
    %v2171 = vpow.pop %v2170
    %v2172 = vmul.f32 %v2167, 1.442695
    %v2173 = vpow.pop %v2172
    %v2174 = vadd.f32 %v2169, 1.0
    %v2175 = vadd.f32 %v2171, 1.0
    %v2176 = vadd.f32 %v2173, 1.0
    %v2177 = vrcp.pop %v2174
    %v2178 = vmul.f32 1.0, %v2177
    %v2179 = vrcp.pop %v2175
    %v2180 = vmul.f32 1.0, %v2179
    %v2181 = vrcp.pop %v2176
    %v2182 = vmul.f32 1.0, %v2181
    %v2183 = vtanh.pop %v2159
    %v2184 = vmul.f32 %v2180, %v2164
    %v2185 = vmul.f32 %v2178, %v2183
    %v2186 = vadd.f32 %v2184, %v2185
    %v2187 = vtanh.pop %v2186
    %v2188 = vmul.f32 %v2182, %v2187
    %s2189 = scalar_lea.vmem [#allocation18], 3
    %2190 = vst [vmem:[%s2189] sm:$0x1] %v2188
    %s2191 = scalar_lea.vmem [#allocation19], 3
    %2192 = vst [vmem:[%s2191] sm:$0x1] %v2186
    %s2193 = scalar_lea.hbm %s5, 32768
    // Predicated region
    $region78: #{tpu_custom_call.1} parent=1 // pred_check
      _
    $region79: #{tpu_custom_call.1} parent=1 // pred_check_branch
      %2195 = sbr.rel target = $region81
    $region80: #{tpu_custom_call.1} parent=1 // pred_region
      %2196 = sst [smem:[#allocation23]] [#allocation32]
      %2197 = sst [smem:[#allocation24]] [#allocation31]
    $region81: #{tpu_custom_call.1} parent=1 // pred_fallthru
      _
    %2199 = shalt.err (0)
    %s2201 = sshll.u32 [#allocation2], 4
    %s2202 = int_to_ptr.vmem [resolvable:$true] %s2201
    %2204 = dma.hbm_to_vmem [thread:$0]  %s2193, 8192, %s2202, [#allocation4]
    %v2205 = vadd.f32 %v2188, %v1618
    %v2206 = vpack.c.bf16 %v2205, %v2205
    %v2207 = vld [vmem:[#allocation3] sm:$0x1]
    %v2208 = vsel %vm494, %v2206, %v2207
    %2209 = vst [vmem:[#allocation3] sm:$0x1] %v2208
    %s2210 = scalar_lea.vmem [#allocation9], 4
    %v2211 = vld [vmem:[%s2210] sm:$0x1]
    %v2212 = vpack.c.bf16 %v2211, %v2211
    %v2213 = vld [vmem:[#allocation3 + $0x1] sm:$0x1]
    %v2214 = vsel %vm494, %v2212, %v2213
    %2215 = vst [vmem:[#allocation3 + $0x1] sm:$0x1] %v2214
    %s2216 = sshll.u32 %s505, 4
    %2217 = dma.done %s479, %s2216
    %v2218 = vld [vmem:[#allocation3] sm:$0x3]
    %v2219 = vld [vmem:[%s478] sm:$0xff]
    %v2220 = vld [vmem:[%s478 + $0x8] sm:$0xff]
    %v2221 = vld [vmem:[%s478 + $0x10] sm:$0xff]
    %v2222 = vld [vmem:[%s478 + $0x18] sm:$0xff]
    %v2223 = vld [vmem:[%s478 + $0x20] sm:$0xff]
    %v2224 = vld [vmem:[%s478 + $0x28] sm:$0xff]
    %v2225 = vld [vmem:[%s478 + $0x30] sm:$0xff]
    %v2226 = vld [vmem:[%s478 + $0x38] sm:$0xff]
    %v2227 = vld [vmem:[%s478 + $0x40] sm:$0xff]
    %v2228 = vld [vmem:[%s478 + $0x48] sm:$0xff]
    %v2229 = vld [vmem:[%s478 + $0x50] sm:$0xff]
    %v2230 = vld [vmem:[%s478 + $0x58] sm:$0xff]
    %v2231 = vld [vmem:[%s478 + $0x60] sm:$0xff]
    %v2232 = vld [vmem:[%s478 + $0x68] sm:$0xff]
    %v2233 = vld [vmem:[%s478 + $0x70] sm:$0xff]
    %v2234 = vld [vmem:[%s478 + $0x78] sm:$0xff]
    %v2235 = vld [vmem:[%s478 + $0x80] sm:$0xff]
    %v2236 = vld [vmem:[%s478 + $0x88] sm:$0xff]
    %v2237 = vld [vmem:[%s478 + $0x90] sm:$0xff]
    %v2238 = vld [vmem:[%s478 + $0x98] sm:$0xff]
    %v2239 = vld [vmem:[%s478 + $0xa0] sm:$0xff]
    %v2240 = vld [vmem:[%s478 + $0xa8] sm:$0xff]
    %v2241 = vld [vmem:[%s478 + $0xb0] sm:$0xff]
    %v2242 = vld [vmem:[%s478 + $0xb8] sm:$0xff]
    %v2243 = vld [vmem:[%s478 + $0xc0] sm:$0xff]
    %v2244 = vld [vmem:[%s478 + $0xc8] sm:$0xff]
    %v2245 = vld [vmem:[%s478 + $0xd0] sm:$0xff]
    %v2246 = vld [vmem:[%s478 + $0xd8] sm:$0xff]
    %v2247 = vld [vmem:[%s478 + $0xe0] sm:$0xff]
    %v2248 = vld [vmem:[%s478 + $0xe8] sm:$0xff]
    %v2249 = vld [vmem:[%s478 + $0xf0] sm:$0xff]
    %v2250 = vld [vmem:[%s478 + $0xf8] sm:$0xff]
    %v2251 = vld [vmem:[%s478 + $0x100] sm:$0xff]
    %v2252 = vld [vmem:[%s478 + $0x108] sm:$0xff]
    %v2253 = vld [vmem:[%s478 + $0x110] sm:$0xff]
    %v2254 = vld [vmem:[%s478 + $0x118] sm:$0xff]
    %v2255 = vld [vmem:[%s478 + $0x120] sm:$0xff]
    %v2256 = vld [vmem:[%s478 + $0x128] sm:$0xff]
    %v2257 = vld [vmem:[%s478 + $0x130] sm:$0xff]
    %v2258 = vld [vmem:[%s478 + $0x138] sm:$0xff]
    %v2259 = vld [vmem:[%s478 + $0x140] sm:$0xff]
    %v2260 = vld [vmem:[%s478 + $0x148] sm:$0xff]
    %v2261 = vld [vmem:[%s478 + $0x150] sm:$0xff]
    %v2262 = vld [vmem:[%s478 + $0x158] sm:$0xff]
    %v2263 = vld [vmem:[%s478 + $0x160] sm:$0xff]
    %v2264 = vld [vmem:[%s478 + $0x168] sm:$0xff]
    %v2265 = vld [vmem:[%s478 + $0x170] sm:$0xff]
    %v2266 = vld [vmem:[%s478 + $0x178] sm:$0xff]
    %v2267 = vld [vmem:[%s478 + $0x180] sm:$0xff]
    %v2268 = vld [vmem:[%s478 + $0x188] sm:$0xff]
    %v2269 = vld [vmem:[%s478 + $0x190] sm:$0xff]
    %v2270 = vld [vmem:[%s478 + $0x198] sm:$0xff]
    %v2271 = vld [vmem:[%s478 + $0x1a0] sm:$0xff]
    %v2272 = vld [vmem:[%s478 + $0x1a8] sm:$0xff]
    %v2273 = vld [vmem:[%s478 + $0x1b0] sm:$0xff]
    %v2274 = vld [vmem:[%s478 + $0x1b8] sm:$0xff]
    %v2275 = vld [vmem:[%s478 + $0x1c0] sm:$0xff]
    %v2276 = vld [vmem:[%s478 + $0x1c8] sm:$0xff]
    %v2277 = vld [vmem:[%s478 + $0x1d0] sm:$0xff]
    %v2278 = vld [vmem:[%s478 + $0x1d8] sm:$0xff]
    %v2279 = vld [vmem:[%s478 + $0x1e0] sm:$0xff]
    %v2280 = vld [vmem:[%s478 + $0x1e8] sm:$0xff]
    %v2281 = vld [vmem:[%s478 + $0x1f0] sm:$0xff]
    %v2282 = vld [vmem:[%s478 + $0x1f8] sm:$0xff]
    %s2283 = scalar_lea.vmem [#allocation15], 16
    %v2284 = vld [vmem:[%s2283] sm:$0xf]
    %v2287 = vunpack.c.l.s4 1966171168
    %v2288 = vunpack.c.0.s8 %v2287
    %v2289 = vlaneseq
    %v2290 = vshrl.u32 %v2289, 7
    %v2291 = vsub.s32 %v2288, %v2290
    %v2292 = vrot.slane %v2218, %v2291
    %v2293 = vcombine.high %v2292, %v2292
    %v2295 = vunpack.c.l.s4 1966171168
    %v2296 = vunpack.c.0.s8 %v2295
    %v2297 = vlaneseq
    %v2298 = vshrl.u32 %v2297, 7
    %v2299 = vsub.s32 %v2296, %v2298
    %v2300 = vrot.slane %v2292, %v2299
    %v2302 = vunpack.c.l.s4 1966171168
    %v2303 = vunpack.c.0.s8 %v2302
    %v2304 = vlaneseq
    %v2305 = vshrl.u32 %v2304, 7
    %v2306 = vsub.s32 %v2303, %v2305
    %v2307 = vrot.slane %v2293, %v2306
    %v2374 = vunpack.c.l.b16 %v2219
    %v2375 = vunpack.c.h.b16 %v2219
    %v2376 = vunpack.c.l.b16 %v2220
    %v2377 = vunpack.c.h.b16 %v2220
    %v2378 = vunpack.c.l.b16 %v2221
    %v2379 = vunpack.c.h.b16 %v2221
    %v2380 = vunpack.c.l.b16 %v2222
    %v2381 = vunpack.c.h.b16 %v2222
    %v2382 = vunpack.c.l.b16 %v2223
    %v2383 = vunpack.c.h.b16 %v2223
    %v2384 = vunpack.c.l.b16 %v2224
    %v2385 = vunpack.c.h.b16 %v2224
    %v2386 = vunpack.c.l.b16 %v2225
    %v2387 = vunpack.c.h.b16 %v2225
    %v2388 = vunpack.c.l.b16 %v2226
    %v2389 = vunpack.c.h.b16 %v2226
    %v2390 = vunpack.c.l.b16 %v2227
    %v2391 = vunpack.c.h.b16 %v2227
    %v2392 = vunpack.c.l.b16 %v2228
    %v2393 = vunpack.c.h.b16 %v2228
    %v2394 = vunpack.c.l.b16 %v2229
    %v2395 = vunpack.c.h.b16 %v2229
    %v2396 = vunpack.c.l.b16 %v2230
    %v2397 = vunpack.c.h.b16 %v2230
    %v2398 = vunpack.c.l.b16 %v2231
    %v2399 = vunpack.c.h.b16 %v2231
    %v2400 = vunpack.c.l.b16 %v2232
    %v2401 = vunpack.c.h.b16 %v2232
    %v2402 = vunpack.c.l.b16 %v2233
    %v2403 = vunpack.c.h.b16 %v2233
    %v2404 = vunpack.c.l.b16 %v2234
    %v2405 = vunpack.c.h.b16 %v2234
    %v2406 = vunpack.c.l.b16 %v2235
    %v2407 = vunpack.c.h.b16 %v2235
    %v2408 = vunpack.c.l.b16 %v2236
    %v2409 = vunpack.c.h.b16 %v2236
    %v2410 = vunpack.c.l.b16 %v2237
    %v2411 = vunpack.c.h.b16 %v2237
    %v2412 = vunpack.c.l.b16 %v2238
    %v2413 = vunpack.c.h.b16 %v2238
    %v2414 = vunpack.c.l.b16 %v2239
    %v2415 = vunpack.c.h.b16 %v2239
    %v2416 = vunpack.c.l.b16 %v2240
    %v2417 = vunpack.c.h.b16 %v2240
    %v2418 = vunpack.c.l.b16 %v2241
    %v2419 = vunpack.c.h.b16 %v2241
    %v2420 = vunpack.c.l.b16 %v2242
    %v2421 = vunpack.c.h.b16 %v2242
    %v2422 = vunpack.c.l.b16 %v2243
    %v2423 = vunpack.c.h.b16 %v2243
    %v2424 = vunpack.c.l.b16 %v2244
    %v2425 = vunpack.c.h.b16 %v2244
    %v2426 = vunpack.c.l.b16 %v2245
    %v2427 = vunpack.c.h.b16 %v2245
    %v2428 = vunpack.c.l.b16 %v2246
    %v2429 = vunpack.c.h.b16 %v2246
    %v2430 = vunpack.c.l.b16 %v2247
    %v2431 = vunpack.c.h.b16 %v2247
    %v2432 = vunpack.c.l.b16 %v2248
    %v2433 = vunpack.c.h.b16 %v2248
    %v2434 = vunpack.c.l.b16 %v2249
    %v2435 = vunpack.c.h.b16 %v2249
    %v2436 = vunpack.c.l.b16 %v2250
    %v2437 = vunpack.c.h.b16 %v2250
    %v2438 = vunpack.c.l.b16 %v2251
    %v2439 = vunpack.c.h.b16 %v2251
    %v2440 = vunpack.c.l.b16 %v2252
    %v2441 = vunpack.c.h.b16 %v2252
    %v2442 = vunpack.c.l.b16 %v2253
    %v2443 = vunpack.c.h.b16 %v2253
    %v2444 = vunpack.c.l.b16 %v2254
    %v2445 = vunpack.c.h.b16 %v2254
    %v2446 = vunpack.c.l.b16 %v2255
    %v2447 = vunpack.c.h.b16 %v2255
    %v2448 = vunpack.c.l.b16 %v2256
    %v2449 = vunpack.c.h.b16 %v2256
    %v2450 = vunpack.c.l.b16 %v2257
    %v2451 = vunpack.c.h.b16 %v2257
    %v2452 = vunpack.c.l.b16 %v2258
    %v2453 = vunpack.c.h.b16 %v2258
    %v2454 = vunpack.c.l.b16 %v2259
    %v2455 = vunpack.c.h.b16 %v2259
    %v2456 = vunpack.c.l.b16 %v2260
    %v2457 = vunpack.c.h.b16 %v2260
    %v2458 = vunpack.c.l.b16 %v2261
    %v2459 = vunpack.c.h.b16 %v2261
    %v2460 = vunpack.c.l.b16 %v2262
    %v2461 = vunpack.c.h.b16 %v2262
    %v2462 = vunpack.c.l.b16 %v2263
    %v2463 = vunpack.c.h.b16 %v2263
    %v2464 = vunpack.c.l.b16 %v2264
    %v2465 = vunpack.c.h.b16 %v2264
    %v2466 = vunpack.c.l.b16 %v2265
    %v2467 = vunpack.c.h.b16 %v2265
    %v2468 = vunpack.c.l.b16 %v2266
    %v2469 = vunpack.c.h.b16 %v2266
    %v2470 = vunpack.c.l.b16 %v2267
    %v2471 = vunpack.c.h.b16 %v2267
    %v2472 = vunpack.c.l.b16 %v2268
    %v2473 = vunpack.c.h.b16 %v2268
    %v2474 = vunpack.c.l.b16 %v2269
    %v2475 = vunpack.c.h.b16 %v2269
    %v2476 = vunpack.c.l.b16 %v2270
    %v2477 = vunpack.c.h.b16 %v2270
    %v2478 = vunpack.c.l.b16 %v2271
    %v2479 = vunpack.c.h.b16 %v2271
    %v2480 = vunpack.c.l.b16 %v2272
    %v2481 = vunpack.c.h.b16 %v2272
    %v2482 = vunpack.c.l.b16 %v2273
    %v2483 = vunpack.c.h.b16 %v2273
    %v2484 = vunpack.c.l.b16 %v2274
    %v2485 = vunpack.c.h.b16 %v2274
    %v2486 = vunpack.c.l.b16 %v2275
    %v2487 = vunpack.c.h.b16 %v2275
    %v2488 = vunpack.c.l.b16 %v2276
    %v2489 = vunpack.c.h.b16 %v2276
    %v2490 = vunpack.c.l.b16 %v2277
    %v2491 = vunpack.c.h.b16 %v2277
    %v2492 = vunpack.c.l.b16 %v2278
    %v2493 = vunpack.c.h.b16 %v2278
    %v2494 = vunpack.c.l.b16 %v2279
    %v2495 = vunpack.c.h.b16 %v2279
    %v2496 = vunpack.c.l.b16 %v2280
    %v2497 = vunpack.c.h.b16 %v2280
    %v2498 = vunpack.c.l.b16 %v2281
    %v2499 = vunpack.c.h.b16 %v2281
    %v2500 = vunpack.c.l.b16 %v2282
    %v2501 = vunpack.c.h.b16 %v2282
    %v2502 = vpack.c.b16 %v2378, %v2374
    %v2503 = vpack.c.b16 %v2379, %v2375
    %v2504 = vpack.c.b16 %v2380, %v2376
    %v2505 = vpack.c.b16 %v2381, %v2377
    %v2506 = vpack.c.b16 %v2386, %v2382
    %v2507 = vpack.c.b16 %v2387, %v2383
    %v2508 = vpack.c.b16 %v2388, %v2384
    %v2509 = vpack.c.b16 %v2389, %v2385
    %v2510 = vpack.c.b16 %v2394, %v2390
    %v2511 = vpack.c.b16 %v2395, %v2391
    %v2512 = vpack.c.b16 %v2396, %v2392
    %v2513 = vpack.c.b16 %v2397, %v2393
    %v2514 = vpack.c.b16 %v2402, %v2398
    %v2515 = vpack.c.b16 %v2403, %v2399
    %v2516 = vpack.c.b16 %v2404, %v2400
    %v2517 = vpack.c.b16 %v2405, %v2401
    %v2518 = vpack.c.b16 %v2410, %v2406
    %v2519 = vpack.c.b16 %v2411, %v2407
    %v2520 = vpack.c.b16 %v2412, %v2408
    %v2521 = vpack.c.b16 %v2413, %v2409
    %v2522 = vpack.c.b16 %v2418, %v2414
    %v2523 = vpack.c.b16 %v2419, %v2415
    %v2524 = vpack.c.b16 %v2420, %v2416
    %v2525 = vpack.c.b16 %v2421, %v2417
    %v2526 = vpack.c.b16 %v2426, %v2422
    %v2527 = vpack.c.b16 %v2427, %v2423
    %v2528 = vpack.c.b16 %v2428, %v2424
    %v2529 = vpack.c.b16 %v2429, %v2425
    %v2530 = vpack.c.b16 %v2434, %v2430
    %v2531 = vpack.c.b16 %v2435, %v2431
    %v2532 = vpack.c.b16 %v2436, %v2432
    %v2533 = vpack.c.b16 %v2437, %v2433
    %v2534 = vpack.c.b16 %v2442, %v2438
    %v2535 = vpack.c.b16 %v2443, %v2439
    %v2536 = vpack.c.b16 %v2444, %v2440
    %v2537 = vpack.c.b16 %v2445, %v2441
    %v2538 = vpack.c.b16 %v2450, %v2446
    %v2539 = vpack.c.b16 %v2451, %v2447
    %v2540 = vpack.c.b16 %v2452, %v2448
    %v2541 = vpack.c.b16 %v2453, %v2449
    %v2542 = vpack.c.b16 %v2458, %v2454
    %v2543 = vpack.c.b16 %v2459, %v2455
    %v2544 = vpack.c.b16 %v2460, %v2456
    %v2545 = vpack.c.b16 %v2461, %v2457
    %v2546 = vpack.c.b16 %v2466, %v2462
    %v2547 = vpack.c.b16 %v2467, %v2463
    %v2548 = vpack.c.b16 %v2468, %v2464
    %v2549 = vpack.c.b16 %v2469, %v2465
    %v2550 = vpack.c.b16 %v2474, %v2470
    %v2551 = vpack.c.b16 %v2475, %v2471
    %v2552 = vpack.c.b16 %v2476, %v2472
    %v2553 = vpack.c.b16 %v2477, %v2473
    %v2554 = vpack.c.b16 %v2482, %v2478
    %v2555 = vpack.c.b16 %v2483, %v2479
    %v2556 = vpack.c.b16 %v2484, %v2480
    %v2557 = vpack.c.b16 %v2485, %v2481
    %v2558 = vpack.c.b16 %v2490, %v2486
    %v2559 = vpack.c.b16 %v2491, %v2487
    %v2560 = vpack.c.b16 %v2492, %v2488
    %v2561 = vpack.c.b16 %v2493, %v2489
    %v2562 = vpack.c.b16 %v2498, %v2494
    %v2563 = vpack.c.b16 %v2499, %v2495
    %v2564 = vpack.c.b16 %v2500, %v2496
    %v2565 = vpack.c.b16 %v2501, %v2497
    %v2631 = vlaneseq
    %v2632 = vshrl.u32 %v2631, 7
    %v2633 = vsub.s32 0, %v2632
    %v2634 = vrot.slane %v2284, %v2633
    %v2635 = vlaneseq
    %v2636 = vshrl.u32 %v2635, 7
    %v2637 = vsub.s32 1, %v2636
    %v2638 = vrot.slane %v2284, %v2637
    %v2639 = vlaneseq
    %v2640 = vshrl.u32 %v2639, 7
    %v2641 = vsub.s32 2, %v2640
    %v2642 = vrot.slane %v2284, %v2641
    %v2643 = vlaneseq
    %v2644 = vshrl.u32 %v2643, 7
    %v2645 = vsub.s32 3, %v2644
    %v2646 = vrot.slane %v2284, %v2645
    %2651 = vmatprep.subr.bf16.mxu0 %v2531
    %2652 = vmatpush1.bf16.msra.mxu0 %v2530
    %2653 = vmatprep.subr.bf16.mxu0 %v2527
    %2654 = vmatpush1.bf16.msra.mxu0 %v2526
    %2655 = vmatprep.subr.bf16.mxu0 %v2523
    %2656 = vmatpush1.bf16.msra.mxu0 %v2522
    %2657 = vmatprep.subr.bf16.mxu0 %v2519
    %2658 = vmatpush1.bf16.msra.mxu0 %v2518
    %2659 = vmatprep.subr.bf16.mxu0 %v2515
    %2660 = vmatpush1.bf16.msra.mxu0 %v2514
    %2661 = vmatprep.subr.bf16.mxu0 %v2511
    %2662 = vmatpush1.bf16.msra.mxu0 %v2510
    %2663 = vmatprep.subr.bf16.mxu0 %v2507
    %2664 = vmatpush1.bf16.msra.mxu0 %v2506
    %2665 = vmatprep.subr.bf16.mxu0 %v2503
    %2666 = vmatpush1.bf16.msra.mxu0 %v2502
    %2667 = vmatprep.subr.bf16.mxu0 %v2563
    %2668 = vmatpush2.bf16.msra.mxu0 %v2562
    %2669 = vmatprep.subr.bf16.mxu0 %v2559
    %2670 = vmatpush2.bf16.msra.mxu0 %v2558
    %2671 = vmatprep.subr.bf16.mxu0 %v2555
    %2672 = vmatpush2.bf16.msra.mxu0 %v2554
    %2673 = vmatprep.subr.bf16.mxu0 %v2551
    %2674 = vmatpush2.bf16.msra.mxu0 %v2550
    %2675 = vmatprep.subr.bf16.mxu0 %v2547
    %2676 = vmatpush2.bf16.msra.mxu0 %v2546
    %2677 = vmatprep.subr.bf16.mxu0 %v2543
    %2678 = vmatpush2.bf16.msra.mxu0 %v2542
    %2679 = vmatprep.subr.bf16.mxu0 %v2539
    %2680 = vmatpush2.bf16.msra.mxu0 %v2538
    %2681 = vmatprep.subr.bf16.mxu0 %v2535
    %2682 = vmatpush2.bf16.msra.mxu0 %v2534
    %2683 = vmatprep.mubr.bf16.mxu0 %v2307
    %2684 = vmatmul.mubr.bf16.gmra.mxu0 %v2300
    %v2685 = vpop.f32.mrf.mxu0
    %v2686 = vadd.f32 %v2634, %v2685
    %v2687 = vpop.f32.mrf.mxu0
    %v2688 = vadd.f32 %v2638, %v2687
    %v2689 = vpop.f32.mrf.mxu0
    %v2690 = vpop.f32.mrf.mxu0
    %2691 = vdwg.mxu0
    %2692 = vmatprep.subr.bf16.mxu0 %v2533
    %2693 = vmatpush1.bf16.msra.mxu0 %v2532
    %2694 = vmatprep.subr.bf16.mxu0 %v2529
    %2695 = vmatpush1.bf16.msra.mxu0 %v2528
    %2696 = vmatprep.subr.bf16.mxu0 %v2525
    %2697 = vmatpush1.bf16.msra.mxu0 %v2524
    %2698 = vmatprep.subr.bf16.mxu0 %v2521
    %2699 = vmatpush1.bf16.msra.mxu0 %v2520
    %2700 = vmatprep.subr.bf16.mxu0 %v2517
    %2701 = vmatpush1.bf16.msra.mxu0 %v2516
    %2702 = vmatprep.subr.bf16.mxu0 %v2513
    %2703 = vmatpush1.bf16.msra.mxu0 %v2512
    %2704 = vmatprep.subr.bf16.mxu0 %v2509
    %2705 = vmatpush1.bf16.msra.mxu0 %v2508
    %2706 = vmatprep.subr.bf16.mxu0 %v2505
    %2707 = vmatpush1.bf16.msra.mxu0 %v2504
    %2708 = vmatprep.subr.bf16.mxu0 %v2565
    %2709 = vmatpush2.bf16.msra.mxu0 %v2564
    %2710 = vmatprep.subr.bf16.mxu0 %v2561
    %2711 = vmatpush2.bf16.msra.mxu0 %v2560
    %2712 = vmatprep.subr.bf16.mxu0 %v2557
    %2713 = vmatpush2.bf16.msra.mxu0 %v2556
    %2714 = vmatprep.subr.bf16.mxu0 %v2553
    %2715 = vmatpush2.bf16.msra.mxu0 %v2552
    %2716 = vmatprep.subr.bf16.mxu0 %v2549
    %2717 = vmatpush2.bf16.msra.mxu0 %v2548
    %2718 = vmatprep.subr.bf16.mxu0 %v2545
    %2719 = vmatpush2.bf16.msra.mxu0 %v2544
    %2720 = vmatprep.subr.bf16.mxu0 %v2541
    %2721 = vmatpush2.bf16.msra.mxu0 %v2540
    %2722 = vmatprep.subr.bf16.mxu0 %v2537
    %2723 = vmatpush2.bf16.msra.mxu0 %v2536
    %2724 = vmatprep.mubr.bf16.mxu0 %v2307
    %2725 = vmatmul.mubr.bf16.gmra.mxu0 %v2300
    %v2726 = vpop.f32.mrf.mxu0
    %v2727 = vadd.f32 %v2642, %v2726
    %v2728 = vpop.f32.mrf.mxu0
    %v2729 = vadd.f32 %v2646, %v2728
    %v2730 = vpop.f32.mrf.mxu0
    %v2731 = vpop.f32.mrf.mxu0
    %2732 = vdwg.mxu0
    %s2733 = scalar_lea.vmem [#allocation10], 4
    %v2734 = vld [vmem:[%s2733] sm:$0x1]
    %v2735 = vxor.u32 %v2686, 2147483648
    %v2736 = vxor.u32 %v2688, 2147483648
    %v2737 = vxor.u32 %v2727, 2147483648
    %v2738 = vmul.f32 %v2735, 1.442695
    %v2739 = vpow.pop %v2738
    %v2740 = vmul.f32 %v2736, 1.442695
    %v2741 = vpow.pop %v2740
    %v2742 = vmul.f32 %v2737, 1.442695
    %v2743 = vpow.pop %v2742
    %v2744 = vadd.f32 %v2739, 1.0
    %v2745 = vadd.f32 %v2741, 1.0
    %v2746 = vadd.f32 %v2743, 1.0
    %v2747 = vrcp.pop %v2744
    %v2748 = vmul.f32 1.0, %v2747
    %v2749 = vrcp.pop %v2745
    %v2750 = vmul.f32 1.0, %v2749
    %v2751 = vrcp.pop %v2746
    %v2752 = vmul.f32 1.0, %v2751
    %v2753 = vtanh.pop %v2729
    %v2754 = vmul.f32 %v2750, %v2734
    %v2755 = vmul.f32 %v2748, %v2753
    %v2756 = vadd.f32 %v2754, %v2755
    %v2757 = vtanh.pop %v2756
    %v2758 = vmul.f32 %v2752, %v2757
    %s2759 = scalar_lea.vmem [#allocation18], 4
    %2760 = vst [vmem:[%s2759] sm:$0x1] %v2758
    %s2761 = scalar_lea.vmem [#allocation19], 4
    %2762 = vst [vmem:[%s2761] sm:$0x1] %v2756
    %s2763 = scalar_lea.hbm %s5, 40960
    // Predicated region
    $region82: #{tpu_custom_call.1} parent=1 // pred_check
      _
    $region83: #{tpu_custom_call.1} parent=1 // pred_check_branch
      %2765 = sbr.rel target = $region85
    $region84: #{tpu_custom_call.1} parent=1 // pred_region
      %2766 = sst [smem:[#allocation23]] [#allocation34]
      %2767 = sst [smem:[#allocation24]] [#allocation33]
    $region85: #{tpu_custom_call.1} parent=1 // pred_fallthru
      _
    %2769 = shalt.err (0)
    %s2771 = sshll.u32 %s478, 4
    %s2772 = int_to_ptr.vmem [resolvable:$true] %s2771
    %2774 = dma.hbm_to_vmem [thread:$0]  %s2763, 8192, %s2772, %s479
    %v2775 = vadd.f32 %v2758, %v2188
    %v2776 = vpack.c.bf16 %v2775, %v2775
    %v2777 = vld [vmem:[#allocation3] sm:$0x1]
    %v2778 = vsel %vm494, %v2776, %v2777
    %2779 = vst [vmem:[#allocation3] sm:$0x1] %v2778
    %s2780 = scalar_lea.vmem [#allocation9], 5
    %v2781 = vld [vmem:[%s2780] sm:$0x1]
    %v2782 = vpack.c.bf16 %v2781, %v2781
    %v2783 = vld [vmem:[#allocation3 + $0x1] sm:$0x1]
    %v2784 = vsel %vm494, %v2782, %v2783
    %2785 = vst [vmem:[#allocation3 + $0x1] sm:$0x1] %v2784
    %s2786 = sshll.u32 %s505, 4
    %2787 = dma.done [#allocation4], %s2786
    %v2788 = vld [vmem:[#allocation3] sm:$0x3]
    %v2789 = vld [vmem:[#allocation2] sm:$0xff]
    %v2790 = vld [vmem:[#allocation2 + $0x8] sm:$0xff]
    %v2791 = vld [vmem:[#allocation2 + $0x10] sm:$0xff]
    %v2792 = vld [vmem:[#allocation2 + $0x18] sm:$0xff]
    %v2793 = vld [vmem:[#allocation2 + $0x20] sm:$0xff]
    %v2794 = vld [vmem:[#allocation2 + $0x28] sm:$0xff]
    %v2795 = vld [vmem:[#allocation2 + $0x30] sm:$0xff]
    %v2796 = vld [vmem:[#allocation2 + $0x38] sm:$0xff]
    %v2797 = vld [vmem:[#allocation2 + $0x40] sm:$0xff]
    %v2798 = vld [vmem:[#allocation2 + $0x48] sm:$0xff]
    %v2799 = vld [vmem:[#allocation2 + $0x50] sm:$0xff]
    %v2800 = vld [vmem:[#allocation2 + $0x58] sm:$0xff]
    %v2801 = vld [vmem:[#allocation2 + $0x60] sm:$0xff]
    %v2802 = vld [vmem:[#allocation2 + $0x68] sm:$0xff]
    %v2803 = vld [vmem:[#allocation2 + $0x70] sm:$0xff]
    %v2804 = vld [vmem:[#allocation2 + $0x78] sm:$0xff]
    %v2805 = vld [vmem:[#allocation2 + $0x80] sm:$0xff]
    %v2806 = vld [vmem:[#allocation2 + $0x88] sm:$0xff]
    %v2807 = vld [vmem:[#allocation2 + $0x90] sm:$0xff]
    %v2808 = vld [vmem:[#allocation2 + $0x98] sm:$0xff]
    %v2809 = vld [vmem:[#allocation2 + $0xa0] sm:$0xff]
    %v2810 = vld [vmem:[#allocation2 + $0xa8] sm:$0xff]
    %v2811 = vld [vmem:[#allocation2 + $0xb0] sm:$0xff]
    %v2812 = vld [vmem:[#allocation2 + $0xb8] sm:$0xff]
    %v2813 = vld [vmem:[#allocation2 + $0xc0] sm:$0xff]
    %v2814 = vld [vmem:[#allocation2 + $0xc8] sm:$0xff]
    %v2815 = vld [vmem:[#allocation2 + $0xd0] sm:$0xff]
    %v2816 = vld [vmem:[#allocation2 + $0xd8] sm:$0xff]
    %v2817 = vld [vmem:[#allocation2 + $0xe0] sm:$0xff]
    %v2818 = vld [vmem:[#allocation2 + $0xe8] sm:$0xff]
    %v2819 = vld [vmem:[#allocation2 + $0xf0] sm:$0xff]
    %v2820 = vld [vmem:[#allocation2 + $0xf8] sm:$0xff]
    %v2821 = vld [vmem:[#allocation2 + $0x100] sm:$0xff]
    %v2822 = vld [vmem:[#allocation2 + $0x108] sm:$0xff]
    %v2823 = vld [vmem:[#allocation2 + $0x110] sm:$0xff]
    %v2824 = vld [vmem:[#allocation2 + $0x118] sm:$0xff]
    %v2825 = vld [vmem:[#allocation2 + $0x120] sm:$0xff]
    %v2826 = vld [vmem:[#allocation2 + $0x128] sm:$0xff]
    %v2827 = vld [vmem:[#allocation2 + $0x130] sm:$0xff]
    %v2828 = vld [vmem:[#allocation2 + $0x138] sm:$0xff]
    %v2829 = vld [vmem:[#allocation2 + $0x140] sm:$0xff]
    %v2830 = vld [vmem:[#allocation2 + $0x148] sm:$0xff]
    %v2831 = vld [vmem:[#allocation2 + $0x150] sm:$0xff]
    %v2832 = vld [vmem:[#allocation2 + $0x158] sm:$0xff]
    %v2833 = vld [vmem:[#allocation2 + $0x160] sm:$0xff]
    %v2834 = vld [vmem:[#allocation2 + $0x168] sm:$0xff]
    %v2835 = vld [vmem:[#allocation2 + $0x170] sm:$0xff]
    %v2836 = vld [vmem:[#allocation2 + $0x178] sm:$0xff]
    %v2837 = vld [vmem:[#allocation2 + $0x180] sm:$0xff]
    %v2838 = vld [vmem:[#allocation2 + $0x188] sm:$0xff]
    %v2839 = vld [vmem:[#allocation2 + $0x190] sm:$0xff]
    %v2840 = vld [vmem:[#allocation2 + $0x198] sm:$0xff]
    %v2841 = vld [vmem:[#allocation2 + $0x1a0] sm:$0xff]
    %v2842 = vld [vmem:[#allocation2 + $0x1a8] sm:$0xff]
    %v2843 = vld [vmem:[#allocation2 + $0x1b0] sm:$0xff]
    %v2844 = vld [vmem:[#allocation2 + $0x1b8] sm:$0xff]
    %v2845 = vld [vmem:[#allocation2 + $0x1c0] sm:$0xff]
    %v2846 = vld [vmem:[#allocation2 + $0x1c8] sm:$0xff]
    %v2847 = vld [vmem:[#allocation2 + $0x1d0] sm:$0xff]
    %v2848 = vld [vmem:[#allocation2 + $0x1d8] sm:$0xff]
    %v2849 = vld [vmem:[#allocation2 + $0x1e0] sm:$0xff]
    %v2850 = vld [vmem:[#allocation2 + $0x1e8] sm:$0xff]
    %v2851 = vld [vmem:[#allocation2 + $0x1f0] sm:$0xff]
    %v2852 = vld [vmem:[#allocation2 + $0x1f8] sm:$0xff]
    %s2853 = scalar_lea.vmem [#allocation15], 20
    %v2854 = vld [vmem:[%s2853] sm:$0xf]
    %v2857 = vunpack.c.l.s4 1966171168
    %v2858 = vunpack.c.0.s8 %v2857
    %v2859 = vlaneseq
    %v2860 = vshrl.u32 %v2859, 7
    %v2861 = vsub.s32 %v2858, %v2860
    %v2862 = vrot.slane %v2788, %v2861
    %v2863 = vcombine.high %v2862, %v2862
    %v2865 = vunpack.c.l.s4 1966171168
    %v2866 = vunpack.c.0.s8 %v2865
    %v2867 = vlaneseq
    %v2868 = vshrl.u32 %v2867, 7
    %v2869 = vsub.s32 %v2866, %v2868
    %v2870 = vrot.slane %v2862, %v2869
    %v2872 = vunpack.c.l.s4 1966171168
    %v2873 = vunpack.c.0.s8 %v2872
    %v2874 = vlaneseq
    %v2875 = vshrl.u32 %v2874, 7
    %v2876 = vsub.s32 %v2873, %v2875
    %v2877 = vrot.slane %v2863, %v2876
    %v2944 = vunpack.c.l.b16 %v2789
    %v2945 = vunpack.c.h.b16 %v2789
    %v2946 = vunpack.c.l.b16 %v2790
    %v2947 = vunpack.c.h.b16 %v2790
    %v2948 = vunpack.c.l.b16 %v2791
    %v2949 = vunpack.c.h.b16 %v2791
    %v2950 = vunpack.c.l.b16 %v2792
    %v2951 = vunpack.c.h.b16 %v2792
    %v2952 = vunpack.c.l.b16 %v2793
    %v2953 = vunpack.c.h.b16 %v2793
    %v2954 = vunpack.c.l.b16 %v2794
    %v2955 = vunpack.c.h.b16 %v2794
    %v2956 = vunpack.c.l.b16 %v2795
    %v2957 = vunpack.c.h.b16 %v2795
    %v2958 = vunpack.c.l.b16 %v2796
    %v2959 = vunpack.c.h.b16 %v2796
    %v2960 = vunpack.c.l.b16 %v2797
    %v2961 = vunpack.c.h.b16 %v2797
    %v2962 = vunpack.c.l.b16 %v2798
    %v2963 = vunpack.c.h.b16 %v2798
    %v2964 = vunpack.c.l.b16 %v2799
    %v2965 = vunpack.c.h.b16 %v2799
    %v2966 = vunpack.c.l.b16 %v2800
    %v2967 = vunpack.c.h.b16 %v2800
    %v2968 = vunpack.c.l.b16 %v2801
    %v2969 = vunpack.c.h.b16 %v2801
    %v2970 = vunpack.c.l.b16 %v2802
    %v2971 = vunpack.c.h.b16 %v2802
    %v2972 = vunpack.c.l.b16 %v2803
    %v2973 = vunpack.c.h.b16 %v2803
    %v2974 = vunpack.c.l.b16 %v2804
    %v2975 = vunpack.c.h.b16 %v2804
    %v2976 = vunpack.c.l.b16 %v2805
    %v2977 = vunpack.c.h.b16 %v2805
    %v2978 = vunpack.c.l.b16 %v2806
    %v2979 = vunpack.c.h.b16 %v2806
    %v2980 = vunpack.c.l.b16 %v2807
    %v2981 = vunpack.c.h.b16 %v2807
    %v2982 = vunpack.c.l.b16 %v2808
    %v2983 = vunpack.c.h.b16 %v2808
    %v2984 = vunpack.c.l.b16 %v2809
    %v2985 = vunpack.c.h.b16 %v2809
    %v2986 = vunpack.c.l.b16 %v2810
    %v2987 = vunpack.c.h.b16 %v2810
    %v2988 = vunpack.c.l.b16 %v2811
    %v2989 = vunpack.c.h.b16 %v2811
    %v2990 = vunpack.c.l.b16 %v2812
    %v2991 = vunpack.c.h.b16 %v2812
    %v2992 = vunpack.c.l.b16 %v2813
    %v2993 = vunpack.c.h.b16 %v2813
    %v2994 = vunpack.c.l.b16 %v2814
    %v2995 = vunpack.c.h.b16 %v2814
    %v2996 = vunpack.c.l.b16 %v2815
    %v2997 = vunpack.c.h.b16 %v2815
    %v2998 = vunpack.c.l.b16 %v2816
    %v2999 = vunpack.c.h.b16 %v2816
    %v3000 = vunpack.c.l.b16 %v2817
    %v3001 = vunpack.c.h.b16 %v2817
    %v3002 = vunpack.c.l.b16 %v2818
    %v3003 = vunpack.c.h.b16 %v2818
    %v3004 = vunpack.c.l.b16 %v2819
    %v3005 = vunpack.c.h.b16 %v2819
    %v3006 = vunpack.c.l.b16 %v2820
    %v3007 = vunpack.c.h.b16 %v2820
    %v3008 = vunpack.c.l.b16 %v2821
    %v3009 = vunpack.c.h.b16 %v2821
    %v3010 = vunpack.c.l.b16 %v2822
    %v3011 = vunpack.c.h.b16 %v2822
    %v3012 = vunpack.c.l.b16 %v2823
    %v3013 = vunpack.c.h.b16 %v2823
    %v3014 = vunpack.c.l.b16 %v2824
    %v3015 = vunpack.c.h.b16 %v2824
    %v3016 = vunpack.c.l.b16 %v2825
    %v3017 = vunpack.c.h.b16 %v2825
    %v3018 = vunpack.c.l.b16 %v2826
    %v3019 = vunpack.c.h.b16 %v2826
    %v3020 = vunpack.c.l.b16 %v2827
    %v3021 = vunpack.c.h.b16 %v2827
    %v3022 = vunpack.c.l.b16 %v2828
    %v3023 = vunpack.c.h.b16 %v2828
    %v3024 = vunpack.c.l.b16 %v2829
    %v3025 = vunpack.c.h.b16 %v2829
    %v3026 = vunpack.c.l.b16 %v2830
    %v3027 = vunpack.c.h.b16 %v2830
    %v3028 = vunpack.c.l.b16 %v2831
    %v3029 = vunpack.c.h.b16 %v2831
    %v3030 = vunpack.c.l.b16 %v2832
    %v3031 = vunpack.c.h.b16 %v2832
    %v3032 = vunpack.c.l.b16 %v2833
    %v3033 = vunpack.c.h.b16 %v2833
    %v3034 = vunpack.c.l.b16 %v2834
    %v3035 = vunpack.c.h.b16 %v2834
    %v3036 = vunpack.c.l.b16 %v2835
    %v3037 = vunpack.c.h.b16 %v2835
    %v3038 = vunpack.c.l.b16 %v2836
    %v3039 = vunpack.c.h.b16 %v2836
    %v3040 = vunpack.c.l.b16 %v2837
    %v3041 = vunpack.c.h.b16 %v2837
    %v3042 = vunpack.c.l.b16 %v2838
    %v3043 = vunpack.c.h.b16 %v2838
    %v3044 = vunpack.c.l.b16 %v2839
    %v3045 = vunpack.c.h.b16 %v2839
    %v3046 = vunpack.c.l.b16 %v2840
    %v3047 = vunpack.c.h.b16 %v2840
    %v3048 = vunpack.c.l.b16 %v2841
    %v3049 = vunpack.c.h.b16 %v2841
    %v3050 = vunpack.c.l.b16 %v2842
    %v3051 = vunpack.c.h.b16 %v2842
    %v3052 = vunpack.c.l.b16 %v2843
    %v3053 = vunpack.c.h.b16 %v2843
    %v3054 = vunpack.c.l.b16 %v2844
    %v3055 = vunpack.c.h.b16 %v2844
    %v3056 = vunpack.c.l.b16 %v2845
    %v3057 = vunpack.c.h.b16 %v2845
    %v3058 = vunpack.c.l.b16 %v2846
    %v3059 = vunpack.c.h.b16 %v2846
    %v3060 = vunpack.c.l.b16 %v2847
    %v3061 = vunpack.c.h.b16 %v2847
    %v3062 = vunpack.c.l.b16 %v2848
    %v3063 = vunpack.c.h.b16 %v2848
    %v3064 = vunpack.c.l.b16 %v2849
    %v3065 = vunpack.c.h.b16 %v2849
    %v3066 = vunpack.c.l.b16 %v2850
    %v3067 = vunpack.c.h.b16 %v2850
    %v3068 = vunpack.c.l.b16 %v2851
    %v3069 = vunpack.c.h.b16 %v2851
    %v3070 = vunpack.c.l.b16 %v2852
    %v3071 = vunpack.c.h.b16 %v2852
    %v3072 = vpack.c.b16 %v2948, %v2944
    %v3073 = vpack.c.b16 %v2949, %v2945
    %v3074 = vpack.c.b16 %v2950, %v2946
    %v3075 = vpack.c.b16 %v2951, %v2947
    %v3076 = vpack.c.b16 %v2956, %v2952
    %v3077 = vpack.c.b16 %v2957, %v2953
    %v3078 = vpack.c.b16 %v2958, %v2954
    %v3079 = vpack.c.b16 %v2959, %v2955
    %v3080 = vpack.c.b16 %v2964, %v2960
    %v3081 = vpack.c.b16 %v2965, %v2961
    %v3082 = vpack.c.b16 %v2966, %v2962
    %v3083 = vpack.c.b16 %v2967, %v2963
    %v3084 = vpack.c.b16 %v2972, %v2968
    %v3085 = vpack.c.b16 %v2973, %v2969
    %v3086 = vpack.c.b16 %v2974, %v2970
    %v3087 = vpack.c.b16 %v2975, %v2971
    %v3088 = vpack.c.b16 %v2980, %v2976
    %v3089 = vpack.c.b16 %v2981, %v2977
    %v3090 = vpack.c.b16 %v2982, %v2978
    %v3091 = vpack.c.b16 %v2983, %v2979
    %v3092 = vpack.c.b16 %v2988, %v2984
    %v3093 = vpack.c.b16 %v2989, %v2985
    %v3094 = vpack.c.b16 %v2990, %v2986
    %v3095 = vpack.c.b16 %v2991, %v2987
    %v3096 = vpack.c.b16 %v2996, %v2992
    %v3097 = vpack.c.b16 %v2997, %v2993
    %v3098 = vpack.c.b16 %v2998, %v2994
    %v3099 = vpack.c.b16 %v2999, %v2995
    %v3100 = vpack.c.b16 %v3004, %v3000
    %v3101 = vpack.c.b16 %v3005, %v3001
    %v3102 = vpack.c.b16 %v3006, %v3002
    %v3103 = vpack.c.b16 %v3007, %v3003
    %v3104 = vpack.c.b16 %v3012, %v3008
    %v3105 = vpack.c.b16 %v3013, %v3009
    %v3106 = vpack.c.b16 %v3014, %v3010
    %v3107 = vpack.c.b16 %v3015, %v3011
    %v3108 = vpack.c.b16 %v3020, %v3016
    %v3109 = vpack.c.b16 %v3021, %v3017
    %v3110 = vpack.c.b16 %v3022, %v3018
    %v3111 = vpack.c.b16 %v3023, %v3019
    %v3112 = vpack.c.b16 %v3028, %v3024
    %v3113 = vpack.c.b16 %v3029, %v3025
    %v3114 = vpack.c.b16 %v3030, %v3026
    %v3115 = vpack.c.b16 %v3031, %v3027
    %v3116 = vpack.c.b16 %v3036, %v3032
    %v3117 = vpack.c.b16 %v3037, %v3033
    %v3118 = vpack.c.b16 %v3038, %v3034
    %v3119 = vpack.c.b16 %v3039, %v3035
    %v3120 = vpack.c.b16 %v3044, %v3040
    %v3121 = vpack.c.b16 %v3045, %v3041
    %v3122 = vpack.c.b16 %v3046, %v3042
    %v3123 = vpack.c.b16 %v3047, %v3043
    %v3124 = vpack.c.b16 %v3052, %v3048
    %v3125 = vpack.c.b16 %v3053, %v3049
    %v3126 = vpack.c.b16 %v3054, %v3050
    %v3127 = vpack.c.b16 %v3055, %v3051
    %v3128 = vpack.c.b16 %v3060, %v3056
    %v3129 = vpack.c.b16 %v3061, %v3057
    %v3130 = vpack.c.b16 %v3062, %v3058
    %v3131 = vpack.c.b16 %v3063, %v3059
    %v3132 = vpack.c.b16 %v3068, %v3064
    %v3133 = vpack.c.b16 %v3069, %v3065
    %v3134 = vpack.c.b16 %v3070, %v3066
    %v3135 = vpack.c.b16 %v3071, %v3067
    %v3201 = vlaneseq
    %v3202 = vshrl.u32 %v3201, 7
    %v3203 = vsub.s32 0, %v3202
    %v3204 = vrot.slane %v2854, %v3203
    %v3205 = vlaneseq
    %v3206 = vshrl.u32 %v3205, 7
    %v3207 = vsub.s32 1, %v3206
    %v3208 = vrot.slane %v2854, %v3207
    %v3209 = vlaneseq
    %v3210 = vshrl.u32 %v3209, 7
    %v3211 = vsub.s32 2, %v3210
    %v3212 = vrot.slane %v2854, %v3211
    %v3213 = vlaneseq
    %v3214 = vshrl.u32 %v3213, 7
    %v3215 = vsub.s32 3, %v3214
    %v3216 = vrot.slane %v2854, %v3215
    %3221 = vmatprep.subr.bf16.mxu0 %v3101
    %3222 = vmatpush1.bf16.msra.mxu0 %v3100
    %3223 = vmatprep.subr.bf16.mxu0 %v3097
    %3224 = vmatpush1.bf16.msra.mxu0 %v3096
    %3225 = vmatprep.subr.bf16.mxu0 %v3093
    %3226 = vmatpush1.bf16.msra.mxu0 %v3092
    %3227 = vmatprep.subr.bf16.mxu0 %v3089
    %3228 = vmatpush1.bf16.msra.mxu0 %v3088
    %3229 = vmatprep.subr.bf16.mxu0 %v3085
    %3230 = vmatpush1.bf16.msra.mxu0 %v3084
    %3231 = vmatprep.subr.bf16.mxu0 %v3081
    %3232 = vmatpush1.bf16.msra.mxu0 %v3080
    %3233 = vmatprep.subr.bf16.mxu0 %v3077
    %3234 = vmatpush1.bf16.msra.mxu0 %v3076
    %3235 = vmatprep.subr.bf16.mxu0 %v3073
    %3236 = vmatpush1.bf16.msra.mxu0 %v3072
    %3237 = vmatprep.subr.bf16.mxu0 %v3133
    %3238 = vmatpush2.bf16.msra.mxu0 %v3132
    %3239 = vmatprep.subr.bf16.mxu0 %v3129
    %3240 = vmatpush2.bf16.msra.mxu0 %v3128
    %3241 = vmatprep.subr.bf16.mxu0 %v3125
    %3242 = vmatpush2.bf16.msra.mxu0 %v3124
    %3243 = vmatprep.subr.bf16.mxu0 %v3121
    %3244 = vmatpush2.bf16.msra.mxu0 %v3120
    %3245 = vmatprep.subr.bf16.mxu0 %v3117
    %3246 = vmatpush2.bf16.msra.mxu0 %v3116
    %3247 = vmatprep.subr.bf16.mxu0 %v3113
    %3248 = vmatpush2.bf16.msra.mxu0 %v3112
    %3249 = vmatprep.subr.bf16.mxu0 %v3109
    %3250 = vmatpush2.bf16.msra.mxu0 %v3108
    %3251 = vmatprep.subr.bf16.mxu0 %v3105
    %3252 = vmatpush2.bf16.msra.mxu0 %v3104
    %3253 = vmatprep.mubr.bf16.mxu0 %v2877
    %3254 = vmatmul.mubr.bf16.gmra.mxu0 %v2870
    %v3255 = vpop.f32.mrf.mxu0
    %v3256 = vadd.f32 %v3204, %v3255
    %v3257 = vpop.f32.mrf.mxu0
    %v3258 = vadd.f32 %v3208, %v3257
    %v3259 = vpop.f32.mrf.mxu0
    %v3260 = vpop.f32.mrf.mxu0
    %3261 = vdwg.mxu0
    %3262 = vmatprep.subr.bf16.mxu0 %v3103
    %3263 = vmatpush1.bf16.msra.mxu0 %v3102
    %3264 = vmatprep.subr.bf16.mxu0 %v3099
    %3265 = vmatpush1.bf16.msra.mxu0 %v3098
    %3266 = vmatprep.subr.bf16.mxu0 %v3095
    %3267 = vmatpush1.bf16.msra.mxu0 %v3094
    %3268 = vmatprep.subr.bf16.mxu0 %v3091
    %3269 = vmatpush1.bf16.msra.mxu0 %v3090
    %3270 = vmatprep.subr.bf16.mxu0 %v3087
    %3271 = vmatpush1.bf16.msra.mxu0 %v3086
    %3272 = vmatprep.subr.bf16.mxu0 %v3083
    %3273 = vmatpush1.bf16.msra.mxu0 %v3082
    %3274 = vmatprep.subr.bf16.mxu0 %v3079
    %3275 = vmatpush1.bf16.msra.mxu0 %v3078
    %3276 = vmatprep.subr.bf16.mxu0 %v3075
    %3277 = vmatpush1.bf16.msra.mxu0 %v3074
    %3278 = vmatprep.subr.bf16.mxu0 %v3135
    %3279 = vmatpush2.bf16.msra.mxu0 %v3134
    %3280 = vmatprep.subr.bf16.mxu0 %v3131
    %3281 = vmatpush2.bf16.msra.mxu0 %v3130
    %3282 = vmatprep.subr.bf16.mxu0 %v3127
    %3283 = vmatpush2.bf16.msra.mxu0 %v3126
    %3284 = vmatprep.subr.bf16.mxu0 %v3123
    %3285 = vmatpush2.bf16.msra.mxu0 %v3122
    %3286 = vmatprep.subr.bf16.mxu0 %v3119
    %3287 = vmatpush2.bf16.msra.mxu0 %v3118
    %3288 = vmatprep.subr.bf16.mxu0 %v3115
    %3289 = vmatpush2.bf16.msra.mxu0 %v3114
    %3290 = vmatprep.subr.bf16.mxu0 %v3111
    %3291 = vmatpush2.bf16.msra.mxu0 %v3110
    %3292 = vmatprep.subr.bf16.mxu0 %v3107
    %3293 = vmatpush2.bf16.msra.mxu0 %v3106
    %3294 = vmatprep.mubr.bf16.mxu0 %v2877
    %3295 = vmatmul.mubr.bf16.gmra.mxu0 %v2870
    %v3296 = vpop.f32.mrf.mxu0
    %v3297 = vadd.f32 %v3212, %v3296
    %v3298 = vpop.f32.mrf.mxu0
    %v3299 = vadd.f32 %v3216, %v3298
    %v3300 = vpop.f32.mrf.mxu0
    %v3301 = vpop.f32.mrf.mxu0
    %3302 = vdwg.mxu0
    %s3303 = scalar_lea.vmem [#allocation10], 5
    %v3304 = vld [vmem:[%s3303] sm:$0x1]
    %v3305 = vxor.u32 %v3256, 2147483648
    %v3306 = vxor.u32 %v3258, 2147483648
    %v3307 = vxor.u32 %v3297, 2147483648
    %v3308 = vmul.f32 %v3305, 1.442695
    %v3309 = vpow.pop %v3308
    %v3310 = vmul.f32 %v3306, 1.442695
    %v3311 = vpow.pop %v3310
    %v3312 = vmul.f32 %v3307, 1.442695
    %v3313 = vpow.pop %v3312
    %v3314 = vadd.f32 %v3309, 1.0
    %v3315 = vadd.f32 %v3311, 1.0
    %v3316 = vadd.f32 %v3313, 1.0
    %v3317 = vrcp.pop %v3314
    %v3318 = vmul.f32 1.0, %v3317
    %v3319 = vrcp.pop %v3315
    %v3320 = vmul.f32 1.0, %v3319
    %v3321 = vrcp.pop %v3316
    %v3322 = vmul.f32 1.0, %v3321
    %v3323 = vtanh.pop %v3299
    %v3324 = vmul.f32 %v3320, %v3304
    %v3325 = vmul.f32 %v3318, %v3323
    %v3326 = vadd.f32 %v3324, %v3325
    %v3327 = vtanh.pop %v3326
    %v3328 = vmul.f32 %v3322, %v3327
    %s3329 = scalar_lea.vmem [#allocation18], 5
    %3330 = vst [vmem:[%s3329] sm:$0x1] %v3328
    %s3331 = scalar_lea.vmem [#allocation19], 5
    %3332 = vst [vmem:[%s3331] sm:$0x1] %v3326
    %v3333 = vadd.f32 %v3328, %v2758
    %v3334 = vpack.c.bf16 %v3333, %v3333
    %v3335 = vld [vmem:[#allocation3] sm:$0x1]
    %v3336 = vsel %vm494, %v3334, %v3335
    %3337 = vst [vmem:[#allocation3] sm:$0x1] %v3336
    %s3338 = scalar_lea.vmem [#allocation9], 6
    %v3339 = vld [vmem:[%s3338] sm:$0x1]
    %v3340 = vpack.c.bf16 %v3339, %v3339
    %v3341 = vld [vmem:[#allocation3 + $0x1] sm:$0x1]
    %v3342 = vsel %vm494, %v3340, %v3341
    %3343 = vst [vmem:[#allocation3 + $0x1] sm:$0x1] %v3342
    %s3344 = sshll.u32 %s505, 4
    %3345 = dma.done %s479, %s3344
    %v3346 = vld [vmem:[#allocation3] sm:$0x3]
    %v3347 = vld [vmem:[%s478] sm:$0xff]
    %v3348 = vld [vmem:[%s478 + $0x8] sm:$0xff]
    %v3349 = vld [vmem:[%s478 + $0x10] sm:$0xff]
    %v3350 = vld [vmem:[%s478 + $0x18] sm:$0xff]
    %v3351 = vld [vmem:[%s478 + $0x20] sm:$0xff]
    %v3352 = vld [vmem:[%s478 + $0x28] sm:$0xff]
    %v3353 = vld [vmem:[%s478 + $0x30] sm:$0xff]
    %v3354 = vld [vmem:[%s478 + $0x38] sm:$0xff]
    %v3355 = vld [vmem:[%s478 + $0x40] sm:$0xff]
    %v3356 = vld [vmem:[%s478 + $0x48] sm:$0xff]
    %v3357 = vld [vmem:[%s478 + $0x50] sm:$0xff]
    %v3358 = vld [vmem:[%s478 + $0x58] sm:$0xff]
    %v3359 = vld [vmem:[%s478 + $0x60] sm:$0xff]
    %v3360 = vld [vmem:[%s478 + $0x68] sm:$0xff]
    %v3361 = vld [vmem:[%s478 + $0x70] sm:$0xff]
    %v3362 = vld [vmem:[%s478 + $0x78] sm:$0xff]
    %v3363 = vld [vmem:[%s478 + $0x80] sm:$0xff]
    %v3364 = vld [vmem:[%s478 + $0x88] sm:$0xff]
    %v3365 = vld [vmem:[%s478 + $0x90] sm:$0xff]
    %v3366 = vld [vmem:[%s478 + $0x98] sm:$0xff]
    %v3367 = vld [vmem:[%s478 + $0xa0] sm:$0xff]
    %v3368 = vld [vmem:[%s478 + $0xa8] sm:$0xff]
    %v3369 = vld [vmem:[%s478 + $0xb0] sm:$0xff]
    %v3370 = vld [vmem:[%s478 + $0xb8] sm:$0xff]
    %v3371 = vld [vmem:[%s478 + $0xc0] sm:$0xff]
    %v3372 = vld [vmem:[%s478 + $0xc8] sm:$0xff]
    %v3373 = vld [vmem:[%s478 + $0xd0] sm:$0xff]
    %v3374 = vld [vmem:[%s478 + $0xd8] sm:$0xff]
    %v3375 = vld [vmem:[%s478 + $0xe0] sm:$0xff]
    %v3376 = vld [vmem:[%s478 + $0xe8] sm:$0xff]
    %v3377 = vld [vmem:[%s478 + $0xf0] sm:$0xff]
    %v3378 = vld [vmem:[%s478 + $0xf8] sm:$0xff]
    %v3379 = vld [vmem:[%s478 + $0x100] sm:$0xff]
    %v3380 = vld [vmem:[%s478 + $0x108] sm:$0xff]
    %v3381 = vld [vmem:[%s478 + $0x110] sm:$0xff]
    %v3382 = vld [vmem:[%s478 + $0x118] sm:$0xff]
    %v3383 = vld [vmem:[%s478 + $0x120] sm:$0xff]
    %v3384 = vld [vmem:[%s478 + $0x128] sm:$0xff]
    %v3385 = vld [vmem:[%s478 + $0x130] sm:$0xff]
    %v3386 = vld [vmem:[%s478 + $0x138] sm:$0xff]
    %v3387 = vld [vmem:[%s478 + $0x140] sm:$0xff]
    %v3388 = vld [vmem:[%s478 + $0x148] sm:$0xff]
    %v3389 = vld [vmem:[%s478 + $0x150] sm:$0xff]
    %v3390 = vld [vmem:[%s478 + $0x158] sm:$0xff]
    %v3391 = vld [vmem:[%s478 + $0x160] sm:$0xff]
    %v3392 = vld [vmem:[%s478 + $0x168] sm:$0xff]
    %v3393 = vld [vmem:[%s478 + $0x170] sm:$0xff]
    %v3394 = vld [vmem:[%s478 + $0x178] sm:$0xff]
    %v3395 = vld [vmem:[%s478 + $0x180] sm:$0xff]
    %v3396 = vld [vmem:[%s478 + $0x188] sm:$0xff]
    %v3397 = vld [vmem:[%s478 + $0x190] sm:$0xff]
    %v3398 = vld [vmem:[%s478 + $0x198] sm:$0xff]
    %v3399 = vld [vmem:[%s478 + $0x1a0] sm:$0xff]
    %v3400 = vld [vmem:[%s478 + $0x1a8] sm:$0xff]
    %v3401 = vld [vmem:[%s478 + $0x1b0] sm:$0xff]
    %v3402 = vld [vmem:[%s478 + $0x1b8] sm:$0xff]
    %v3403 = vld [vmem:[%s478 + $0x1c0] sm:$0xff]
    %v3404 = vld [vmem:[%s478 + $0x1c8] sm:$0xff]
    %v3405 = vld [vmem:[%s478 + $0x1d0] sm:$0xff]
    %v3406 = vld [vmem:[%s478 + $0x1d8] sm:$0xff]
    %v3407 = vld [vmem:[%s478 + $0x1e0] sm:$0xff]
    %v3408 = vld [vmem:[%s478 + $0x1e8] sm:$0xff]
    %v3409 = vld [vmem:[%s478 + $0x1f0] sm:$0xff]
    %v3410 = vld [vmem:[%s478 + $0x1f8] sm:$0xff]
    %s3411 = scalar_lea.vmem [#allocation15], 24
    %v3412 = vld [vmem:[%s3411] sm:$0xf]
    %v3415 = vunpack.c.l.s4 1966171168
    %v3416 = vunpack.c.0.s8 %v3415
    %v3417 = vlaneseq
    %v3418 = vshrl.u32 %v3417, 7
    %v3419 = vsub.s32 %v3416, %v3418
    %v3420 = vrot.slane %v3346, %v3419
    %v3421 = vcombine.high %v3420, %v3420
    %v3423 = vunpack.c.l.s4 1966171168
    %v3424 = vunpack.c.0.s8 %v3423
    %v3425 = vlaneseq
    %v3426 = vshrl.u32 %v3425, 7
    %v3427 = vsub.s32 %v3424, %v3426
    %v3428 = vrot.slane %v3420, %v3427
    %v3430 = vunpack.c.l.s4 1966171168
    %v3431 = vunpack.c.0.s8 %v3430
    %v3432 = vlaneseq
    %v3433 = vshrl.u32 %v3432, 7
    %v3434 = vsub.s32 %v3431, %v3433
    %v3435 = vrot.slane %v3421, %v3434
    %v3502 = vunpack.c.l.b16 %v3347
    %v3503 = vunpack.c.h.b16 %v3347
    %v3504 = vunpack.c.l.b16 %v3348
    %v3505 = vunpack.c.h.b16 %v3348
    %v3506 = vunpack.c.l.b16 %v3349
    %v3507 = vunpack.c.h.b16 %v3349
    %v3508 = vunpack.c.l.b16 %v3350
    %v3509 = vunpack.c.h.b16 %v3350
    %v3510 = vunpack.c.l.b16 %v3351
    %v3511 = vunpack.c.h.b16 %v3351
    %v3512 = vunpack.c.l.b16 %v3352
    %v3513 = vunpack.c.h.b16 %v3352
    %v3514 = vunpack.c.l.b16 %v3353
    %v3515 = vunpack.c.h.b16 %v3353
    %v3516 = vunpack.c.l.b16 %v3354
    %v3517 = vunpack.c.h.b16 %v3354
    %v3518 = vunpack.c.l.b16 %v3355
    %v3519 = vunpack.c.h.b16 %v3355
    %v3520 = vunpack.c.l.b16 %v3356
    %v3521 = vunpack.c.h.b16 %v3356
    %v3522 = vunpack.c.l.b16 %v3357
    %v3523 = vunpack.c.h.b16 %v3357
    %v3524 = vunpack.c.l.b16 %v3358
    %v3525 = vunpack.c.h.b16 %v3358
    %v3526 = vunpack.c.l.b16 %v3359
    %v3527 = vunpack.c.h.b16 %v3359
    %v3528 = vunpack.c.l.b16 %v3360
    %v3529 = vunpack.c.h.b16 %v3360
    %v3530 = vunpack.c.l.b16 %v3361
    %v3531 = vunpack.c.h.b16 %v3361
    %v3532 = vunpack.c.l.b16 %v3362
    %v3533 = vunpack.c.h.b16 %v3362
    %v3534 = vunpack.c.l.b16 %v3363
    %v3535 = vunpack.c.h.b16 %v3363
    %v3536 = vunpack.c.l.b16 %v3364
    %v3537 = vunpack.c.h.b16 %v3364
    %v3538 = vunpack.c.l.b16 %v3365
    %v3539 = vunpack.c.h.b16 %v3365
    %v3540 = vunpack.c.l.b16 %v3366
    %v3541 = vunpack.c.h.b16 %v3366
    %v3542 = vunpack.c.l.b16 %v3367
    %v3543 = vunpack.c.h.b16 %v3367
    %v3544 = vunpack.c.l.b16 %v3368
    %v3545 = vunpack.c.h.b16 %v3368
    %v3546 = vunpack.c.l.b16 %v3369
    %v3547 = vunpack.c.h.b16 %v3369
    %v3548 = vunpack.c.l.b16 %v3370
    %v3549 = vunpack.c.h.b16 %v3370
    %v3550 = vunpack.c.l.b16 %v3371
    %v3551 = vunpack.c.h.b16 %v3371
    %v3552 = vunpack.c.l.b16 %v3372
    %v3553 = vunpack.c.h.b16 %v3372
    %v3554 = vunpack.c.l.b16 %v3373
    %v3555 = vunpack.c.h.b16 %v3373
    %v3556 = vunpack.c.l.b16 %v3374
    %v3557 = vunpack.c.h.b16 %v3374
    %v3558 = vunpack.c.l.b16 %v3375
    %v3559 = vunpack.c.h.b16 %v3375
    %v3560 = vunpack.c.l.b16 %v3376
    %v3561 = vunpack.c.h.b16 %v3376
    %v3562 = vunpack.c.l.b16 %v3377
    %v3563 = vunpack.c.h.b16 %v3377
    %v3564 = vunpack.c.l.b16 %v3378
    %v3565 = vunpack.c.h.b16 %v3378
    %v3566 = vunpack.c.l.b16 %v3379
    %v3567 = vunpack.c.h.b16 %v3379
    %v3568 = vunpack.c.l.b16 %v3380
    %v3569 = vunpack.c.h.b16 %v3380
    %v3570 = vunpack.c.l.b16 %v3381
    %v3571 = vunpack.c.h.b16 %v3381
    %v3572 = vunpack.c.l.b16 %v3382
    %v3573 = vunpack.c.h.b16 %v3382
    %v3574 = vunpack.c.l.b16 %v3383
    %v3575 = vunpack.c.h.b16 %v3383
    %v3576 = vunpack.c.l.b16 %v3384
    %v3577 = vunpack.c.h.b16 %v3384
    %v3578 = vunpack.c.l.b16 %v3385
    %v3579 = vunpack.c.h.b16 %v3385
    %v3580 = vunpack.c.l.b16 %v3386
    %v3581 = vunpack.c.h.b16 %v3386
    %v3582 = vunpack.c.l.b16 %v3387
    %v3583 = vunpack.c.h.b16 %v3387
    %v3584 = vunpack.c.l.b16 %v3388
    %v3585 = vunpack.c.h.b16 %v3388
    %v3586 = vunpack.c.l.b16 %v3389
    %v3587 = vunpack.c.h.b16 %v3389
    %v3588 = vunpack.c.l.b16 %v3390
    %v3589 = vunpack.c.h.b16 %v3390
    %v3590 = vunpack.c.l.b16 %v3391
    %v3591 = vunpack.c.h.b16 %v3391
    %v3592 = vunpack.c.l.b16 %v3392
    %v3593 = vunpack.c.h.b16 %v3392
    %v3594 = vunpack.c.l.b16 %v3393
    %v3595 = vunpack.c.h.b16 %v3393
    %v3596 = vunpack.c.l.b16 %v3394
    %v3597 = vunpack.c.h.b16 %v3394
    %v3598 = vunpack.c.l.b16 %v3395
    %v3599 = vunpack.c.h.b16 %v3395
    %v3600 = vunpack.c.l.b16 %v3396
    %v3601 = vunpack.c.h.b16 %v3396
    %v3602 = vunpack.c.l.b16 %v3397
    %v3603 = vunpack.c.h.b16 %v3397
    %v3604 = vunpack.c.l.b16 %v3398
    %v3605 = vunpack.c.h.b16 %v3398
    %v3606 = vunpack.c.l.b16 %v3399
    %v3607 = vunpack.c.h.b16 %v3399
    %v3608 = vunpack.c.l.b16 %v3400
    %v3609 = vunpack.c.h.b16 %v3400
    %v3610 = vunpack.c.l.b16 %v3401
    %v3611 = vunpack.c.h.b16 %v3401
    %v3612 = vunpack.c.l.b16 %v3402
    %v3613 = vunpack.c.h.b16 %v3402
    %v3614 = vunpack.c.l.b16 %v3403
    %v3615 = vunpack.c.h.b16 %v3403
    %v3616 = vunpack.c.l.b16 %v3404
    %v3617 = vunpack.c.h.b16 %v3404
    %v3618 = vunpack.c.l.b16 %v3405
    %v3619 = vunpack.c.h.b16 %v3405
    %v3620 = vunpack.c.l.b16 %v3406
    %v3621 = vunpack.c.h.b16 %v3406
    %v3622 = vunpack.c.l.b16 %v3407
    %v3623 = vunpack.c.h.b16 %v3407
    %v3624 = vunpack.c.l.b16 %v3408
    %v3625 = vunpack.c.h.b16 %v3408
    %v3626 = vunpack.c.l.b16 %v3409
    %v3627 = vunpack.c.h.b16 %v3409
    %v3628 = vunpack.c.l.b16 %v3410
    %v3629 = vunpack.c.h.b16 %v3410
    %v3630 = vpack.c.b16 %v3506, %v3502
    %v3631 = vpack.c.b16 %v3507, %v3503
    %v3632 = vpack.c.b16 %v3508, %v3504
    %v3633 = vpack.c.b16 %v3509, %v3505
    %v3634 = vpack.c.b16 %v3514, %v3510
    %v3635 = vpack.c.b16 %v3515, %v3511
    %v3636 = vpack.c.b16 %v3516, %v3512
    %v3637 = vpack.c.b16 %v3517, %v3513
    %v3638 = vpack.c.b16 %v3522, %v3518
    %v3639 = vpack.c.b16 %v3523, %v3519
    %v3640 = vpack.c.b16 %v3524, %v3520
    %v3641 = vpack.c.b16 %v3525, %v3521
    %v3642 = vpack.c.b16 %v3530, %v3526
    %v3643 = vpack.c.b16 %v3531, %v3527
    %v3644 = vpack.c.b16 %v3532, %v3528
    %v3645 = vpack.c.b16 %v3533, %v3529
    %v3646 = vpack.c.b16 %v3538, %v3534
    %v3647 = vpack.c.b16 %v3539, %v3535
    %v3648 = vpack.c.b16 %v3540, %v3536
    %v3649 = vpack.c.b16 %v3541, %v3537
    %v3650 = vpack.c.b16 %v3546, %v3542
    %v3651 = vpack.c.b16 %v3547, %v3543
    %v3652 = vpack.c.b16 %v3548, %v3544
    %v3653 = vpack.c.b16 %v3549, %v3545
    %v3654 = vpack.c.b16 %v3554, %v3550
    %v3655 = vpack.c.b16 %v3555, %v3551
    %v3656 = vpack.c.b16 %v3556, %v3552
    %v3657 = vpack.c.b16 %v3557, %v3553
    %v3658 = vpack.c.b16 %v3562, %v3558
    %v3659 = vpack.c.b16 %v3563, %v3559
    %v3660 = vpack.c.b16 %v3564, %v3560
    %v3661 = vpack.c.b16 %v3565, %v3561
    %v3662 = vpack.c.b16 %v3570, %v3566
    %v3663 = vpack.c.b16 %v3571, %v3567
    %v3664 = vpack.c.b16 %v3572, %v3568
    %v3665 = vpack.c.b16 %v3573, %v3569
    %v3666 = vpack.c.b16 %v3578, %v3574
    %v3667 = vpack.c.b16 %v3579, %v3575
    %v3668 = vpack.c.b16 %v3580, %v3576
    %v3669 = vpack.c.b16 %v3581, %v3577
    %v3670 = vpack.c.b16 %v3586, %v3582
    %v3671 = vpack.c.b16 %v3587, %v3583
    %v3672 = vpack.c.b16 %v3588, %v3584
    %v3673 = vpack.c.b16 %v3589, %v3585
    %v3674 = vpack.c.b16 %v3594, %v3590
    %v3675 = vpack.c.b16 %v3595, %v3591
    %v3676 = vpack.c.b16 %v3596, %v3592
    %v3677 = vpack.c.b16 %v3597, %v3593
    %v3678 = vpack.c.b16 %v3602, %v3598
    %v3679 = vpack.c.b16 %v3603, %v3599
    %v3680 = vpack.c.b16 %v3604, %v3600
    %v3681 = vpack.c.b16 %v3605, %v3601
    %v3682 = vpack.c.b16 %v3610, %v3606
    %v3683 = vpack.c.b16 %v3611, %v3607
    %v3684 = vpack.c.b16 %v3612, %v3608
    %v3685 = vpack.c.b16 %v3613, %v3609
    %v3686 = vpack.c.b16 %v3618, %v3614
    %v3687 = vpack.c.b16 %v3619, %v3615
    %v3688 = vpack.c.b16 %v3620, %v3616
    %v3689 = vpack.c.b16 %v3621, %v3617
    %v3690 = vpack.c.b16 %v3626, %v3622
    %v3691 = vpack.c.b16 %v3627, %v3623
    %v3692 = vpack.c.b16 %v3628, %v3624
    %v3693 = vpack.c.b16 %v3629, %v3625
    %v3759 = vlaneseq
    %v3760 = vshrl.u32 %v3759, 7
    %v3761 = vsub.s32 0, %v3760
    %v3762 = vrot.slane %v3412, %v3761
    %v3763 = vlaneseq
    %v3764 = vshrl.u32 %v3763, 7
    %v3765 = vsub.s32 1, %v3764
    %v3766 = vrot.slane %v3412, %v3765
    %v3767 = vlaneseq
    %v3768 = vshrl.u32 %v3767, 7
    %v3769 = vsub.s32 2, %v3768
    %v3770 = vrot.slane %v3412, %v3769
    %v3771 = vlaneseq
    %v3772 = vshrl.u32 %v3771, 7
    %v3773 = vsub.s32 3, %v3772
    %v3774 = vrot.slane %v3412, %v3773
    %3779 = vmatprep.subr.bf16.mxu0 %v3659
    %3780 = vmatpush1.bf16.msra.mxu0 %v3658
    %3781 = vmatprep.subr.bf16.mxu0 %v3655
    %3782 = vmatpush1.bf16.msra.mxu0 %v3654
    %3783 = vmatprep.subr.bf16.mxu0 %v3651
    %3784 = vmatpush1.bf16.msra.mxu0 %v3650
    %3785 = vmatprep.subr.bf16.mxu0 %v3647
    %3786 = vmatpush1.bf16.msra.mxu0 %v3646
    %3787 = vmatprep.subr.bf16.mxu0 %v3643
    %3788 = vmatpush1.bf16.msra.mxu0 %v3642
    %3789 = vmatprep.subr.bf16.mxu0 %v3639
    %3790 = vmatpush1.bf16.msra.mxu0 %v3638
    %3791 = vmatprep.subr.bf16.mxu0 %v3635
    %3792 = vmatpush1.bf16.msra.mxu0 %v3634
    %3793 = vmatprep.subr.bf16.mxu0 %v3631
    %3794 = vmatpush1.bf16.msra.mxu0 %v3630
    %3795 = vmatprep.subr.bf16.mxu0 %v3691
    %3796 = vmatpush2.bf16.msra.mxu0 %v3690
    %3797 = vmatprep.subr.bf16.mxu0 %v3687
    %3798 = vmatpush2.bf16.msra.mxu0 %v3686
    %3799 = vmatprep.subr.bf16.mxu0 %v3683
    %3800 = vmatpush2.bf16.msra.mxu0 %v3682
    %3801 = vmatprep.subr.bf16.mxu0 %v3679
    %3802 = vmatpush2.bf16.msra.mxu0 %v3678
    %3803 = vmatprep.subr.bf16.mxu0 %v3675
    %3804 = vmatpush2.bf16.msra.mxu0 %v3674
    %3805 = vmatprep.subr.bf16.mxu0 %v3671
    %3806 = vmatpush2.bf16.msra.mxu0 %v3670
    %3807 = vmatprep.subr.bf16.mxu0 %v3667
    %3808 = vmatpush2.bf16.msra.mxu0 %v3666
    %3809 = vmatprep.subr.bf16.mxu0 %v3663
    %3810 = vmatpush2.bf16.msra.mxu0 %v3662
    %3811 = vmatprep.mubr.bf16.mxu0 %v3435
    %3812 = vmatmul.mubr.bf16.gmra.mxu0 %v3428
    %v3813 = vpop.f32.mrf.mxu0
    %v3814 = vadd.f32 %v3762, %v3813
    %v3815 = vpop.f32.mrf.mxu0
    %v3816 = vadd.f32 %v3766, %v3815
    %v3817 = vpop.f32.mrf.mxu0
    %v3818 = vpop.f32.mrf.mxu0
    %3819 = vdwg.mxu0
    %3820 = vmatprep.subr.bf16.mxu0 %v3661
    %3821 = vmatpush1.bf16.msra.mxu0 %v3660
    %3822 = vmatprep.subr.bf16.mxu0 %v3657
    %3823 = vmatpush1.bf16.msra.mxu0 %v3656
    %3824 = vmatprep.subr.bf16.mxu0 %v3653
    %3825 = vmatpush1.bf16.msra.mxu0 %v3652
    %3826 = vmatprep.subr.bf16.mxu0 %v3649
    %3827 = vmatpush1.bf16.msra.mxu0 %v3648
    %3828 = vmatprep.subr.bf16.mxu0 %v3645
    %3829 = vmatpush1.bf16.msra.mxu0 %v3644
    %3830 = vmatprep.subr.bf16.mxu0 %v3641
    %3831 = vmatpush1.bf16.msra.mxu0 %v3640
    %3832 = vmatprep.subr.bf16.mxu0 %v3637
    %3833 = vmatpush1.bf16.msra.mxu0 %v3636
    %3834 = vmatprep.subr.bf16.mxu0 %v3633
    %3835 = vmatpush1.bf16.msra.mxu0 %v3632
    %3836 = vmatprep.subr.bf16.mxu0 %v3693
    %3837 = vmatpush2.bf16.msra.mxu0 %v3692
    %3838 = vmatprep.subr.bf16.mxu0 %v3689
    %3839 = vmatpush2.bf16.msra.mxu0 %v3688
    %3840 = vmatprep.subr.bf16.mxu0 %v3685
    %3841 = vmatpush2.bf16.msra.mxu0 %v3684
    %3842 = vmatprep.subr.bf16.mxu0 %v3681
    %3843 = vmatpush2.bf16.msra.mxu0 %v3680
    %3844 = vmatprep.subr.bf16.mxu0 %v3677
    %3845 = vmatpush2.bf16.msra.mxu0 %v3676
    %3846 = vmatprep.subr.bf16.mxu0 %v3673
    %3847 = vmatpush2.bf16.msra.mxu0 %v3672
    %3848 = vmatprep.subr.bf16.mxu0 %v3669
    %3849 = vmatpush2.bf16.msra.mxu0 %v3668
    %3850 = vmatprep.subr.bf16.mxu0 %v3665
    %3851 = vmatpush2.bf16.msra.mxu0 %v3664
    %3852 = vmatprep.mubr.bf16.mxu0 %v3435
    %3853 = vmatmul.mubr.bf16.gmra.mxu0 %v3428
    %v3854 = vpop.f32.mrf.mxu0
    %v3855 = vadd.f32 %v3770, %v3854
    %v3856 = vpop.f32.mrf.mxu0
    %v3857 = vadd.f32 %v3774, %v3856
    %v3858 = vpop.f32.mrf.mxu0
    %v3859 = vpop.f32.mrf.mxu0
    %3860 = vdwg.mxu0
    %s3861 = scalar_lea.vmem [#allocation10], 6
    %v3862 = vld [vmem:[%s3861] sm:$0x1]
    %v3863 = vxor.u32 %v3814, 2147483648
    %v3864 = vxor.u32 %v3816, 2147483648
    %v3865 = vxor.u32 %v3855, 2147483648
    %v3866 = vmul.f32 %v3863, 1.442695
    %v3867 = vpow.pop %v3866
    %v3868 = vmul.f32 %v3864, 1.442695
    %v3869 = vpow.pop %v3868
    %v3870 = vmul.f32 %v3865, 1.442695
    %v3871 = vpow.pop %v3870
    %v3872 = vadd.f32 %v3867, 1.0
    %v3873 = vadd.f32 %v3869, 1.0
    %v3874 = vadd.f32 %v3871, 1.0
    %v3875 = vrcp.pop %v3872
    %v3876 = vmul.f32 1.0, %v3875
    %v3877 = vrcp.pop %v3873
    %v3878 = vmul.f32 1.0, %v3877
    %v3879 = vrcp.pop %v3874
    %v3880 = vmul.f32 1.0, %v3879
    %v3881 = vtanh.pop %v3857
    %v3882 = vmul.f32 %v3878, %v3862
    %v3883 = vmul.f32 %v3876, %v3881
    %v3884 = vadd.f32 %v3882, %v3883
    %v3885 = vtanh.pop %v3884
    %v3886 = vmul.f32 %v3880, %v3885
    %s3887 = scalar_lea.vmem [#allocation18], 6
    %3888 = vst [vmem:[%s3887] sm:$0x1] %v3886
    %s3889 = scalar_lea.vmem [#allocation19], 6
    %3890 = vst [vmem:[%s3889] sm:$0x1] %v3884
    %v3891 = vld [vmem:[#allocation16] sm:$0x3]
    %v3892 = vlaneseq
    %v3893 = vshrl.u32 %v3892, 7
    %v3894 = vsub.s32 0, %v3893
    %v3895 = vrot.slane %v3886, %v3894
    %v3896 = vmul.f32 %v3895, %v3891
    %vm3897 = vcmask 1041408
    %v3898 = vsel %vm3897, %v3896, 0.0
    %3899 = vadd.xlane.f32.xlu0 %v3898
    %v3900 = vpop.xlane.xlu0 %3899
    %v3901 = vld [vmem:[%s8] sm:$0x3]
    %v3902 = vadd.f32 %v3900, %v3901
    %vm3903 = vcmask 1024
    %v3904 = vsel %vm3903, %v3902, -inf
    %v3905 = vrot.slane %v3904, 4
    %v3906 = vmax.f32 %v3904, %v3905
    %v3907 = vrot.slane %v3906, 2
    %v3908 = vmax.f32 %v3906, %v3907
    %v3909 = vrot.slane %v3908, 1
    %v3910 = vmax.f32 %v3908, %v3909
    %v3911 = vsub.f32 %v3902, %v3910
    %v3912 = vmul.f32 %v3911, 1.442695
    %v3913 = vpow.pop %v3912
    %v3914 = vsel %vm3903, %v3913, 0.0
    %v3915 = vrot.slane %v3914, 4
    %v3916 = vadd.f32 %v3914, %v3915
    %v3917 = vrot.slane %v3916, 2
    %v3918 = vadd.f32 %v3916, %v3917
    %v3919 = vrot.slane %v3918, 1
    %v3920 = vadd.f32 %v3918, %v3919
    %v3921 = vrcp.pop %v3920
    %v3922 = vmul.f32 %v3913, %v3921
    %3923 = vst.msk [vmem:[%s9] sm:$0x3] %vm3903, %v3922
    // Predicated region
    $region86: #{tpu_custom_call.1} parent=1 // pred_check
      _
    $region87: #{tpu_custom_call.1} parent=1 // pred_check_branch
      %3925 = sbr.rel (0) target = $region89
    $region88: #{tpu_custom_call.1} parent=1 // pred_region
      _
    $region89: #{tpu_custom_call.1} parent=1 // pred_fallthru
      _
    // Predicated region
    $region90: #{tpu_custom_call.1} parent=1 // pred_check
      _
    $region91: #{tpu_custom_call.1} parent=1 // pred_check_branch
      %3927 = sbr.rel (0) target = $region93
    $region92: #{tpu_custom_call.1} parent=1 // pred_region
      %s3929 = ssub.s32 112, 112
      %3930 = vsyncadd [#allocation7], %s3929
      %s3931 = sshll.u32 [#allocation18], 4
      %s3932 = int_to_ptr.vmem [resolvable:$true] %s3931
      %3937 = dma.vmem_to_hbm [thread:$0]  %s3932, 112, %s10, [#allocation7], 16, 16, 1
    $region93: #{tpu_custom_call.1} parent=1 // pred_fallthru
      _
    // Predicated region
    $region94: #{tpu_custom_call.1} parent=1 // pred_check
      _
    $region95: #{tpu_custom_call.1} parent=1 // pred_check_branch
      %3939 = sbr.rel (0) target = $region97
    $region96: #{tpu_custom_call.1} parent=1 // pred_region
      %s3941 = ssub.s32 112, 112
      %3942 = vsyncadd [#allocation20], %s3941
      %s3943 = sshll.u32 [#allocation19], 4
      %s3944 = int_to_ptr.vmem [resolvable:$true] %s3943
      %3949 = dma.vmem_to_hbm [thread:$0]  %s3944, 112, %s11, [#allocation20], 16, 16, 1
    $region97: #{tpu_custom_call.1} parent=1 // pred_fallthru
      _
    // Predicated region
    $region98: #{tpu_custom_call.1} parent=1 // pred_check
      _
    $region99: #{tpu_custom_call.1} parent=1 // pred_check_branch
      %3951 = sbr.rel (0) target = $region101
    $region100: #{tpu_custom_call.1} parent=1 // pred_region
      _
    $region101: #{tpu_custom_call.1} parent=1 // pred_fallthru
      _
    // Predicated region
    $region102: #{tpu_custom_call.1} parent=1 // pred_check
      _
    $region103: #{tpu_custom_call.1} parent=1 // pred_check_branch
      %3953 = sbr.rel (0) target = $region105
    $region104: #{tpu_custom_call.1} parent=1 // pred_region
      %3954 = dma.done [#allocation7], 112
    $region105: #{tpu_custom_call.1} parent=1 // pred_fallthru
      _
    // Predicated region
    $region106: #{tpu_custom_call.1} parent=1 // pred_check
      _
    $region107: #{tpu_custom_call.1} parent=1 // pred_check_branch
      %3956 = sbr.rel (0) target = $region109
    $region108: #{tpu_custom_call.1} parent=1 // pred_region
      %3957 = dma.done [#allocation20], 112
    $region109: #{tpu_custom_call.1} parent=1 // pred_fallthru
      _
    %3958 = vsyncpa [#allocation6], 1
    %3959 = vsyncpa [#allocation11], 1
    %3960 = vsyncpa [#allocation14], 1
    %3961 = vsyncpa [#allocation17], 1
    %3962 = vsyncpa [#allocation7], 1
    %3963 = vsyncpa [#allocation20], 1
    %3964 = vsyncpa [#allocation8], 1
  %3965 = vsyncmov [#allocation4]
  %s3966 = vpop.sfrf %3965
  %p3967 = scmp.eq.s32.totalorder %s3966, 0
  %p3968 = pneg %p3967
  %3970 = shalt.err (%p3968)
  %s3971 = scalar_lea.sflag [#allocation4], 1
  %3972 = vsyncmov %s3971
  %s3973 = vpop.sfrf %3972
  %p3974 = scmp.eq.s32.totalorder %s3973, 0
  %p3975 = pneg %p3974
  %3977 = shalt.err (%p3975)

</llo_original>
